<compile_context>
chip_gen: v7x
topology: tpu7x:2x2x1
jax: 0.10.0
libtpu: 0.0.40
codegen_flags: <defaults>
</compile_context>

<pallas_src>
import functools

import jax
import jax.numpy as jnp
from jax import lax
from jax.experimental import pallas as pl
from jax.experimental.pallas import tpu as pltpu


def _default_vmem_limit():
    """Generation-aware scoped-VMEM budget (bytes)."""
    try:
        cap = pltpu.get_tpu_info().vmem_capacity_bytes
    except Exception:
        return 32 * 1024 * 1024          # safe everywhere
    # leave ~25% headroom for compiler-internal scratch; cap at 96 MiB.
    return min(int(cap * 3 // 4), 96 * 1024 * 1024)


VMEM_LIMIT = _default_vmem_limit()


def _row_tiles(m, candidates=(4096, 2048, 1024, 512, 256, 128)):
    """Pad rows and pick the largest aligned tile.

    Rows are padded to a multiple of 128 (multiple of 8 for tiny inputs) so a
    valid tile always exists; among candidate tiles we prefer the largest one
    that still leaves >= 2 grid steps so v7x's two TensorCores both get work
    on the 'parallel' row axis."""
    if m < 128:
        mp = ((m + 7) // 8) * 8
        return mp, mp
    mp = ((m + 127) // 128) * 128
    divs = [t for t in candidates if mp % t == 0]
    for t in divs:                       # largest first
        if mp // t >= 2:
            return mp, t
    return mp, divs[-1]                  # mp == 128 -> single 128-row step


# ----------------------------------------------------------------------------
# Pallas kernels
# ----------------------------------------------------------------------------
def _fused_rowmlp_kernel(x_ref, *refs, relus):
    """Chain of Y = relu?(X @ W_i + b_i); intermediates stay on-chip.

    refs = (w0, b0, w1, b1, ..., o_ref). Weights are bf16, biases f32."""
    o_ref = refs[-1]
    wbs = refs[:-1]
    h = x_ref[...]
    for i, relu in enumerate(relus):
        w = wbs[2 * i][...]
        b = wbs[2 * i + 1][...]
        # NOTE: casting the LHS to bf16 trades ~3 significant digits of the
        # raw geometry for MXU rate; acceptable for this encoder.
        y = jnp.dot(h.astype(w.dtype), w,
                    preferred_element_type=jnp.float32) + b
        if relu:
            y = jnp.maximum(y, 0.0)
        h = y
    o_ref[...] = h.astype(o_ref.dtype)


def _pdist_kernel(xr_ref, sqr_ref, xc_ref, sqc_ref, d_ref):
    """Row block of -||p_i - p_j||^2 against the full point set.

    xr: (1, tN, 3) row block, sqr: (1, tN, 1) row squared norms,
    xc: (1, 3, N) all points channels-first (lane-dense), sqc: (1, 1, N)
    squared norms of all points.  d: (1, tN, N)."""
    inner = jnp.dot(xr_ref[0], xc_ref[0],
                    preferred_element_type=jnp.float32)       # (tN, N)
    d_ref[0] = 2.0 * inner - sqr_ref[0] - sqc_ref[0]


def _graph_max_kernel(x_ref, w_ref, b_ref, o_ref, acc_ref, *, chunk):
    """Folded linear2@conv2 matmul + global max over points.

    x_ref: (1, tm, 128) bf16 point-feature tile; w: (128, 1024) bf16 folded
    weight; b: (1, 1024) f32 folded bias.  The running max lives in VMEM
    scratch (acc_ref); o_ref is written only on the last point tile.
    CORRECTNESS GUARD: relies on the j (point-tile) axis being LAST, marked
    'arbitrary', with a constant output block index over j - the output block
    and acc_ref stay resident across the whole reduction.  Do not reorder."""
    j = pl.program_id(1)
    nj = pl.num_programs(1)

    @pl.when(j == 0)
    def _():
        acc_ref[...] = jnp.full_like(acc_ref, -jnp.inf)

    n_chunks = x_ref.shape[1] // chunk

    def body(c, carry):
        start = pl.multiple_of(c * chunk, chunk)
        x = x_ref[0, pl.ds(start, chunk), :]                  # (chunk, 128)
        h = jnp.dot(x, w_ref[...],
                    preferred_element_type=jnp.float32)       # (chunk, 1024)
        acc_ref[...] = jnp.maximum(acc_ref[...],
                                   jnp.max(h, axis=0, keepdims=True))
        return carry

    # Sub-chunking bounds the live f32 intermediate to (chunk, 1024) = 512 KiB.
    lax.fori_loop(0, n_chunks, body, 0, unroll=True)

    @pl.when(j == nj - 1)
    def _():
        # max_r(xW + b) == max_r(xW) + b  (bias is row-constant), so the bias
        # is added once here instead of per chunk.
        o_ref[0] = (acc_ref[...] + b_ref[...]).astype(o_ref.dtype)


# ----------------------------------------------------------------------------
# Pallas wrappers
# ----------------------------------------------------------------------------
def fused_mlp(x, layers, relus, out_dtype=jnp.bfloat16):
    """Apply a fused chain of (W, b) layers to row matrix x: (M, K)."""
    m, k = x.shape
    n_out = layers[-1][0].shape[1]
    mp, tm = _row_tiles(m)
    xp = x if mp == m else jnp.pad(x, ((0, mp - m), (0, 0)))

    flat = []
    in_specs = [pl.BlockSpec((tm, k), lambda i: (i, 0))]
    for w, b in layers:
        flat += [w, b]
        in_specs += [pl.BlockSpec(w.shape, lambda i: (0, 0)),
                     pl.BlockSpec(b.shape, lambda i: (0, 0))]

    out = pl.pallas_call(
        functools.partial(_fused_rowmlp_kernel, relus=tuple(relus)),
        out_shape=jax.ShapeDtypeStruct((mp, n_out), out_dtype),
        grid_spec=pltpu.PrefetchScalarGridSpec(
            num_scalar_prefetch=0,
            grid=(mp // tm,),
            in_specs=in_specs,
            out_specs=pl.BlockSpec((tm, n_out), lambda i: (i, 0)),
        ),
        compiler_params=pltpu.CompilerParams(
            dimension_semantics=("parallel",),
            vmem_limit_bytes=VMEM_LIMIT),
    )(xp, *flat)
    # Padded rows compute relu(b)-style garbage; they are sliced off here and
    # never feed a row reduction, so the result is exact.
    return out if mp == m else out[:m]


def pairwise_neg_sqdist(pts):
    """pts: (B, N, 3) f32 -> (B, N, N) negative squared distances (torch knn)."""
    b, n, _ = pts.shape
    tn = next((t for t in (512, 256, 128) if n % t == 0), n)
    pts_cf = jnp.transpose(pts, (0, 2, 1))                    # (B, 3, N)
    sq = jnp.sum(pts * pts, axis=-1)                          # (B, N)  f32
    sq_rows = sq[:, :, None]                                  # (B, N, 1)
    sq_cols = sq[:, None, :]                                  # (B, 1, N)
    # TODO(synk): for large N, stream a per-row-tile top-k inside the kernel
    # (or emit d in bf16) so the full (B,N,N) matrix never touches HBM.
    return pl.pallas_call(
        _pdist_kernel,
        out_shape=jax.ShapeDtypeStruct((b, n, n), jnp.float32),
        grid_spec=pltpu.PrefetchScalarGridSpec(
            num_scalar_prefetch=0,
            grid=(b, n // tn),
            in_specs=[
                pl.BlockSpec((1, tn, 3), lambda bi, i: (bi, i, 0)),
                pl.BlockSpec((1, tn, 1), lambda bi, i: (bi, i, 0)),
                pl.BlockSpec((1, 3, n), lambda bi, i: (bi, 0, 0)),
                pl.BlockSpec((1, 1, n), lambda bi, i: (bi, 0, 0)),
            ],
            out_specs=pl.BlockSpec((1, tn, n), lambda bi, i: (bi, i, 0)),
        ),
        compiler_params=pltpu.CompilerParams(
            dimension_semantics=("parallel", "parallel"),
            vmem_limit_bytes=VMEM_LIMIT),
    )(pts, sq_rows, pts_cf, sq_cols)


def graph_max(x_bnc, w, b):
    """Folded linear2@conv2 + global max over points.

    x_bnc: (B, N, 128) bf16, w: (128, 1024) bf16, b: (1, 1024) f32
    -> pooled (B, 1024) f32."""
    bsz, n, c = x_bnc.shape
    n_hidden = w.shape[1]
    tm = next((t for t in (2048, 1024, 512, 256, 128) if n % t == 0), n)
    chunk = 128 if tm % 128 == 0 else tm

    out = pl.pallas_call(
        functools.partial(_graph_max_kernel, chunk=chunk),
        out_shape=jax.ShapeDtypeStruct((bsz, 1, n_hidden), jnp.float32),
        grid_spec=pltpu.PrefetchScalarGridSpec(
            num_scalar_prefetch=0,
            grid=(bsz, n // tm),
            in_specs=[pl.BlockSpec((1, tm, c), lambda bi, j: (bi, j, 0)),
                      pl.BlockSpec(w.shape, lambda bi, j: (0, 0)),
                      pl.BlockSpec(b.shape, lambda bi, j: (0, 0))],
            out_specs=pl.BlockSpec((1, 1, n_hidden), lambda bi, j: (bi, 0, 0)),
            scratch_shapes=[pltpu.VMEM((1, n_hidden), jnp.float32)],
        ),
        compiler_params=pltpu.CompilerParams(
            # j must stay last + 'arbitrary' (running-max accumulator).
            dimension_semantics=("parallel", "arbitrary"),
            vmem_limit_bytes=VMEM_LIMIT),
    )(x_bnc, w, b)
    return out[:, 0, :]


# ----------------------------------------------------------------------------
# Plain-JAX glue (gathers, top-k, parameter setup)
# ----------------------------------------------------------------------------
def local_maxpool(h_flat, idx_flat, batch, n, k):
    # h_flat: (B*N, C) channels-last features (== torch x.transpose(2,1) flat)
    # TODO(synk): replace with a Pallas scalar-prefetch gather kernel (feature
    # table resident in VMEM) to cut the ~k-fold HBM re-read at large N.
    c = h_flat.shape[-1]
    g = jnp.take(h_flat, idx_flat, axis=0).reshape(batch, n, k, c)
    return jnp.max(g, axis=2).reshape(batch * n, c)


def init_params(key, num_features):
    def lin(kk, fan_in, fan_out, bias=True):
        k1, k2 = jax.random.split(kk)
        bound = 1.0 / jnp.sqrt(jnp.float32(fan_in))
        w = jax.random.uniform(k1, (fan_in, fan_out), jnp.float32, -bound, bound)
        if bias:
            b = jax.random.uniform(k2, (1, fan_out), jnp.float32, -bound, bound)
        else:
            b = jnp.zeros((1, fan_out), jnp.float32)
        return w, b

    names_shapes = [
        ("mlp1_0", 12, 64, True),
        ("mlp1_1", 64, 64, True),
        ("mlp1_2", 64, 64, True),
        ("linear1", 64, 64, True),
        ("conv1", 64, 128, True),
        ("linear2", 128, 128, True),
        ("conv2", 128, 1024, True),
        ("mlp2_0", 1024, 512, True),
        ("mlp2_1", 512, 512, True),
        ("embedding", 512, num_features, False),
    ]
    keys = jax.random.split(key, len(names_shapes))
    return {name: lin(kk, fi, fo, b)
            for kk, (name, fi, fo, b) in zip(keys, names_shapes)}


def foldnet_encoder_forward(params, pts, *, k):
    """pts: (B, N, 3) float32 -> features: (B, num_features) float32."""
    batch, n, _ = pts.shape
    bf16 = jnp.bfloat16

    def wb(name):  # bf16 weight, f32 bias (casts folded under jit)
        w, b = params[name]
        return w.astype(bf16), b

    def fold(name_a, name_b):
        # y = (x@Wa + ba)@Wb + bb  ==  x@(Wa@Wb) + (ba@Wb + bb)   (exact; no
        # activation between the two layers).  Product computed in f32, cast
        # to bf16 once.
        wa, ba = params[name_a]
        wb_, bb = params[name_b]
        return (wa @ wb_).astype(bf16), ba @ wb_ + bb

    # knn: indices of the k largest negative squared distances.  The point
    # itself is neighbor 0 (d[i,i] = 0 is the max) — this matches the PyTorch
    # FoldNet behavior; do not "fix" it.
    d = pairwise_neg_sqdist(pts)                              # (B, N, N)  [Pallas]
    _, knn_idx = lax.top_k(d, k)                              # (B, N, k)
    idx_flat = (knn_idx
                + jnp.arange(batch, dtype=knn_idx.dtype)[:, None, None] * n
                ).reshape(-1)                                 # (B*N*k,)

    # local_cov: outer product of neighbor 0 and neighbor 1, concat with pts.
    pts_flat = pts.reshape(batch * n, 3)
    g = jnp.take(pts_flat, idx_flat, axis=0).reshape(batch, n, k, 3)
    x0, x1 = g[:, :, 0], g[:, :, 1]                           # (B, N, 3)
    cov = (x0[:, :, :, None] * x1[:, :, None, :]).reshape(batch, n, 9)
    h = jnp.concatenate([pts, cov], axis=2).reshape(batch * n, 12)

    # mlp1: Conv1d(12,64)+ReLU, Conv1d(64,64)+ReLU, Conv1d(64,64)+ReLU (fused)
    h = fused_mlp(h, [wb("mlp1_0"), wb("mlp1_1"), wb("mlp1_2")],
                  relus=(True, True, True))                   # (B*N, 64) bf16

    # graph_layer, first half: maxpool -> folded linear1@conv1 (+ReLU)
    h = local_maxpool(h, idx_flat, batch, n, k)
    w_l1c1, b_l1c1 = fold("linear1", "conv1")                 # (64,128)
    h = fused_mlp(h, [(w_l1c1, b_l1c1)], relus=(True,))       # (B*N, 128) bf16
    h = local_maxpool(h, idx_flat, batch, n, k)

    # graph_layer second half + global max: folded linear2@conv2, running max
    # over points inside one Pallas kernel.
    w_l2c2, b_l2c2 = fold("linear2", "conv2")                 # (128,1024)
    pooled = graph_max(h.reshape(batch, n, 128), w_l2c2, b_l2c2)  # (B,1024) f32

    # mlp2_0 (+ReLU) then folded mlp2_1@embedding on the tiny pooled vector.
    # (num_features == 512 would skip the embedding matmul in PyTorch; this
    #  implementation always applies it, matching the demo's num_features=32.)
    wm0, bm0 = wb("mlp2_0")
    wm1, bm1 = params["mlp2_1"]
    wemb = params["embedding"][0]
    w_m1e = (wm1 @ wemb).astype(bf16)                         # (512, F)
    b_m1e = bm1 @ wemb                                        # (1, F)
    feats = fused_mlp(pooled, [(wm0, bm0), (w_m1e, b_m1e)],
                      relus=(True, False), out_dtype=jnp.float32)  # (B, F)
    return feats


if __name__ == "__main__":
    B, N, K_NN, NUM_FEATURES = 2, 128, 8, 32
    key = jax.random.PRNGKey(0)
    kp, kx = jax.random.split(key)
    params = init_params(kp, NUM_FEATURES)
    pts = jax.random.normal(kx, (B, N, 3), jnp.float32)

    fwd = jax.jit(functools.partial(foldnet_encoder_forward, k=K_NN))
    feats = fwd(params, pts)
    jax.block_until_ready(feats)
    assert feats.shape == (B, NUM_FEATURES)
    assert jnp.all(jnp.isfinite(feats))
    print("KERNEL_OK")
</pallas_src>

<mosaic_0001>
module attributes {stable_mosaic.version = 11 : i64} {
  func.func @_pdist_kernel(%arg0: i32, %arg1: i32, %arg2: memref<1x128x3xf32, #tpu.memory_space<vmem>>, %arg3: memref<1x128x1xf32, #tpu.memory_space<vmem>>, %arg4: memref<1x3x128xf32, #tpu.memory_space<vmem>>, %arg5: memref<1x1x128xf32, #tpu.memory_space<vmem>>, %arg6: memref<1x128x128xf32, #tpu.memory_space<vmem>>) attributes {dimension_semantics = [#tpu.dimension_semantics<parallel>, #tpu.dimension_semantics<parallel>], iteration_bounds = array<i64: 2, 1>, scalar_prefetch = 0 : i64, scratch_operands = 0 : i64, tpu.core_type = #tpu.core_type<tc>, window_params = [{transform_indices = @transform_0, window_bounds = array<i64: 1, 128, 3>}, {transform_indices = @transform_1, window_bounds = array<i64: 1, 128, 1>}, {transform_indices = @transform_2, window_bounds = array<i64: 1, 3, 128>}, {transform_indices = @transform_3, window_bounds = array<i64: 1, 1, 128>}, {transform_indices = @transform_4, window_bounds = array<i64: 1, 128, 128>}]} {
    %c0 = arith.constant 0 : index
    %c0_0 = arith.constant 0 : index
    %c0_1 = arith.constant 0 : index
    %0 = vector.load %arg2[%c0, %c0_0, %c0_1] : memref<1x128x3xf32, #tpu.memory_space<vmem>>, vector<1x128x3xf32>
    %1 = vector.shape_cast %0 : vector<1x128x3xf32> to vector<128x3xf32>
    %c0_2 = arith.constant 0 : index
    %c0_3 = arith.constant 0 : index
    %c0_4 = arith.constant 0 : index
    %2 = vector.load %arg4[%c0_2, %c0_3, %c0_4] : memref<1x3x128xf32, #tpu.memory_space<vmem>>, vector<1x3x128xf32>
    %3 = vector.shape_cast %2 : vector<1x3x128xf32> to vector<3x128xf32>
    %cst = arith.constant dense<0.000000e+00> : vector<128x128xf32>
    %4 = tpu.matmul %1, %3, %cst {dimension_numbers = #tpu.dot_dimension_numbers<[1], [0], [0], [1], [0, 0, 1, 1], [], []>} : vector<128x3xf32>, vector<3x128xf32>, vector<128x128xf32> -> vector<128x128xf32>
    %cst_5 = arith.constant 2.000000e+00 : f32
    %5 = vector.broadcast %cst_5 : f32 to vector<128x128xf32>
    %6 = arith.mulf %5, %4 : vector<128x128xf32>
    %c0_6 = arith.constant 0 : index
    %c0_7 = arith.constant 0 : index
    %c0_8 = arith.constant 0 : index
    %7 = vector.load %arg3[%c0_6, %c0_7, %c0_8] : memref<1x128x1xf32, #tpu.memory_space<vmem>>, vector<1x128x1xf32>
    %8 = vector.shape_cast %7 : vector<1x128x1xf32> to vector<128x1xf32>
    %9 = vector.broadcast %8 : vector<128x1xf32> to vector<128x128xf32>
    %10 = arith.subf %6, %9 : vector<128x128xf32>
    %c0_9 = arith.constant 0 : index
    %c0_10 = arith.constant 0 : index
    %c0_11 = arith.constant 0 : index
    %11 = vector.load %arg5[%c0_9, %c0_10, %c0_11] : memref<1x1x128xf32, #tpu.memory_space<vmem>>, vector<1x1x128xf32>
    %12 = vector.shape_cast %11 : vector<1x1x128xf32> to vector<1x128xf32>
    %13 = vector.broadcast %12 : vector<1x128xf32> to vector<128x128xf32>
    %14 = arith.subf %10, %13 : vector<128x128xf32>
    %c0_12 = arith.constant 0 : index
    %c0_13 = arith.constant 0 : index
    %c0_14 = arith.constant 0 : index
    %15 = vector.load %arg6[%c0_12, %c0_13, %c0_14] : memref<1x128x128xf32, #tpu.memory_space<vmem>>, vector<1x128x128xf32>
    %16 = vector.shape_cast %15 : vector<1x128x128xf32> to vector<128x128xf32>
    %17 = vector.shape_cast %14 : vector<128x128xf32> to vector<1x128x128xf32>
    tpu.vector_store %arg6[%c0_12, %c0_13, %c0_14], %17 {strides = array<i32>} : memref<1x128x128xf32, #tpu.memory_space<vmem>>, vector<1x128x128xf32>,
    return
  }
  func.func @transform_0(%arg0: i32, %arg1: i32) -> (i32, i32, i32) {
    %c0_i32 = arith.constant 0 : i32
    %c0_i32_0 = arith.constant 0 : i32
    return %arg0, %arg1, %c0_i32 : i32, i32, i32
  }
  func.func @transform_1(%arg0: i32, %arg1: i32) -> (i32, i32, i32) {
    %c0_i32 = arith.constant 0 : i32
    %c0_i32_0 = arith.constant 0 : i32
    return %arg0, %arg1, %c0_i32 : i32, i32, i32
  }
  func.func @transform_2(%arg0: i32, %arg1: i32) -> (i32, i32, i32) {
    %c0_i32 = arith.constant 0 : i32
    %c0_i32_0 = arith.constant 0 : i32
    %c0_i32_1 = arith.constant 0 : i32
    return %arg0, %c0_i32, %c0_i32_0 : i32, i32, i32
  }
  func.func @transform_3(%arg0: i32, %arg1: i32) -> (i32, i32, i32) {
    %c0_i32 = arith.constant 0 : i32
    %c0_i32_0 = arith.constant 0 : i32
    %c0_i32_1 = arith.constant 0 : i32
    return %arg0, %c0_i32, %c0_i32_0 : i32, i32, i32
  }
  func.func @transform_4(%arg0: i32, %arg1: i32) -> (i32, i32, i32) {
    %c0_i32 = arith.constant 0 : i32
    %c0_i32_0 = arith.constant 0 : i32
    return %arg0, %arg1, %c0_i32 : i32, i32, i32
  }
}

module attributes {stable_mosaic.version = 11 : i64} {
  func.func @_fused_rowmlp_kernel(%arg0: i32, %arg1: memref<128x12xf32, #tpu.memory_space<vmem>>, %arg2: memref<12x64xbf16, #tpu.memory_space<vmem>>, %arg3: memref<1x64xf32, #tpu.memory_space<vmem>>, %arg4: memref<64x64xbf16, #tpu.memory_space<vmem>>, %arg5: memref<1x64xf32, #tpu.memory_space<vmem>>, %arg6: memref<64x64xbf16, #tpu.memory_space<vmem>>, %arg7: memref<1x64xf32, #tpu.memory_space<vmem>>, %arg8: memref<128x64xbf16, #tpu.memory_space<vmem>>) attributes {dimension_semantics = [#tpu.dimension_semantics<parallel>], iteration_bounds = array<i64: 2>, scalar_prefetch = 0 : i64, scratch_operands = 0 : i64, tpu.core_type = #tpu.core_type<tc>, window_params = [{transform_indices = @transform_0, window_bounds = array<i64: 128, 12>}, {pipeline_mode = #tpu.pipeline_mode<synchronous>, transform_indices = @transform_1, window_bounds = array<i64: 12, 64>}, {pipeline_mode = #tpu.pipeline_mode<synchronous>, transform_indices = @transform_2, window_bounds = array<i64: 1, 64>}, {pipeline_mode = #tpu.pipeline_mode<synchronous>, transform_indices = @transform_3, window_bounds = array<i64: 64, 64>}, {pipeline_mode = #tpu.pipeline_mode<synchronous>, transform_indices = @transform_4, window_bounds = array<i64: 1, 64>}, {pipeline_mode = #tpu.pipeline_mode<synchronous>, transform_indices = @transform_5, window_bounds = array<i64: 64, 64>}, {pipeline_mode = #tpu.pipeline_mode<synchronous>, transform_indices = @transform_6, window_bounds = array<i64: 1, 64>}, {transform_indices = @transform_7, window_bounds = array<i64: 128, 64>}]} {
    %c0 = arith.constant 0 : index
    %c0_0 = arith.constant 0 : index
    %0 = vector.load %arg1[%c0, %c0_0] : memref<128x12xf32, #tpu.memory_space<vmem>>, vector<128x12xf32>
    %c0_1 = arith.constant 0 : index
    %c0_2 = arith.constant 0 : index
    %1 = vector.load %arg2[%c0_1, %c0_2] : memref<12x64xbf16, #tpu.memory_space<vmem>>, vector<12x64xbf16>
    %c0_3 = arith.constant 0 : index
    %c0_4 = arith.constant 0 : index
    %2 = vector.load %arg3[%c0_3, %c0_4] : memref<1x64xf32, #tpu.memory_space<vmem>>, vector<1x64xf32>
    %3 = arith.truncf %0 : vector<128x12xf32> to vector<128x12xbf16>
    %cst = arith.constant dense<0.000000e+00> : vector<128x64xf32>
    %4 = tpu.matmul %3, %1, %cst {dimension_numbers = #tpu.dot_dimension_numbers<[1], [0], [0], [1], [0, 0, 1, 1], [], []>} : vector<128x12xbf16>, vector<12x64xbf16>, vector<128x64xf32> -> vector<128x64xf32>
    %5 = vector.broadcast %2 : vector<1x64xf32> to vector<128x64xf32>
    %6 = arith.addf %4, %5 : vector<128x64xf32>
    %cst_5 = arith.constant 0.000000e+00 : f32
    %7 = vector.broadcast %cst_5 : f32 to vector<128x64xf32>
    %8 = arith.maximumf %6, %7 : vector<128x64xf32>
    %c0_6 = arith.constant 0 : index
    %c0_7 = arith.constant 0 : index
    %9 = vector.load %arg4[%c0_6, %c0_7] : memref<64x64xbf16, #tpu.memory_space<vmem>>, vector<64x64xbf16>
    %c0_8 = arith.constant 0 : index
    %c0_9 = arith.constant 0 : index
    %10 = vector.load %arg5[%c0_8, %c0_9] : memref<1x64xf32, #tpu.memory_space<vmem>>, vector<1x64xf32>
    %11 = arith.truncf %8 : vector<128x64xf32> to vector<128x64xbf16>
    %cst_10 = arith.constant dense<0.000000e+00> : vector<128x64xf32>
    %12 = tpu.matmul %11, %9, %cst_10 {dimension_numbers = #tpu.dot_dimension_numbers<[1], [0], [0], [1], [0, 0, 1, 1], [], []>} : vector<128x64xbf16>, vector<64x64xbf16>, vector<128x64xf32> -> vector<128x64xf32>
    %13 = vector.broadcast %10 : vector<1x64xf32> to vector<128x64xf32>
    %14 = arith.addf %12, %13 : vector<128x64xf32>
    %cst_11 = arith.constant 0.000000e+00 : f32
    %15 = vector.broadcast %cst_11 : f32 to vector<128x64xf32>
    %16 = arith.maximumf %14, %15 : vector<128x64xf32>
    %c0_12 = arith.constant 0 : index
    %c0_13 = arith.constant 0 : index
    %17 = vector.load %arg6[%c0_12, %c0_13] : memref<64x64xbf16, #tpu.memory_space<vmem>>, vector<64x64xbf16>
    %c0_14 = arith.constant 0 : index
    %c0_15 = arith.constant 0 : index
    %18 = vector.load %arg7[%c0_14, %c0_15] : memref<1x64xf32, #tpu.memory_space<vmem>>, vector<1x64xf32>
    %19 = arith.truncf %16 : vector<128x64xf32> to vector<128x64xbf16>
    %cst_16 = arith.constant dense<0.000000e+00> : vector<128x64xf32>
    %20 = tpu.matmul %19, %17, %cst_16 {dimension_numbers = #tpu.dot_dimension_numbers<[1], [0], [0], [1], [0, 0, 1, 1], [], []>} : vector<128x64xbf16>, vector<64x64xbf16>, vector<128x64xf32> -> vector<128x64xf32>
    %21 = vector.broadcast %18 : vector<1x64xf32> to vector<128x64xf32>
    %22 = arith.addf %20, %21 : vector<128x64xf32>
    %cst_17 = arith.constant 0.000000e+00 : f32
    %23 = vector.broadcast %cst_17 : f32 to vector<128x64xf32>
    %24 = arith.maximumf %22, %23 : vector<128x64xf32>
    %25 = arith.truncf %24 : vector<128x64xf32> to vector<128x64xbf16>
    %c0_18 = arith.constant 0 : index
    %c0_19 = arith.constant 0 : index
    %26 = vector.load %arg8[%c0_18, %c0_19] : memref<128x64xbf16, #tpu.memory_space<vmem>>, vector<128x64xbf16>
    tpu.vector_store %arg8[%c0_18, %c0_19], %25 {strides = array<i32>} : memref<128x64xbf16, #tpu.memory_space<vmem>>, vector<128x64xbf16>,
    return
  }
  func.func @transform_0(%arg0: i32) -> (i32, i32) {
    %c0_i32 = arith.constant 0 : i32
    %c0_i32_0 = arith.constant 0 : i32
    return %arg0, %c0_i32 : i32, i32
  }
  func.func @transform_1(%arg0: i32) -> (i32, i32) {
    %c0_i32 = arith.constant 0 : i32
    %c0_i32_0 = arith.constant 0 : i32
    %c0_i32_1 = arith.constant 0 : i32
    return %c0_i32, %c0_i32_0 : i32, i32
  }
  func.func @transform_2(%arg0: i32) -> (i32, i32) {
    %c0_i32 = arith.constant 0 : i32
    %c0_i32_0 = arith.constant 0 : i32
    %c0_i32_1 = arith.constant 0 : i32
    return %c0_i32, %c0_i32_0 : i32, i32
  }
  func.func @transform_3(%arg0: i32) -> (i32, i32) {
    %c0_i32 = arith.constant 0 : i32
    %c0_i32_0 = arith.constant 0 : i32
    %c0_i32_1 = arith.constant 0 : i32
    return %c0_i32, %c0_i32_0 : i32, i32
  }
  func.func @transform_4(%arg0: i32) -> (i32, i32) {
    %c0_i32 = arith.constant 0 : i32
    %c0_i32_0 = arith.constant 0 : i32
    %c0_i32_1 = arith.constant 0 : i32
    return %c0_i32, %c0_i32_0 : i32, i32
  }
  func.func @transform_5(%arg0: i32) -> (i32, i32) {
    %c0_i32 = arith.constant 0 : i32
    %c0_i32_0 = arith.constant 0 : i32
    %c0_i32_1 = arith.constant 0 : i32
    return %c0_i32, %c0_i32_0 : i32, i32
  }
  func.func @transform_6(%arg0: i32) -> (i32, i32) {
    %c0_i32 = arith.constant 0 : i32
    %c0_i32_0 = arith.constant 0 : i32
    %c0_i32_1 = arith.constant 0 : i32
    return %c0_i32, %c0_i32_0 : i32, i32
  }
  func.func @transform_7(%arg0: i32) -> (i32, i32) {
    %c0_i32 = arith.constant 0 : i32
    %c0_i32_0 = arith.constant 0 : i32
    return %arg0, %c0_i32 : i32, i32
  }
}

module attributes {stable_mosaic.version = 11 : i64} {
  func.func @_fused_rowmlp_kernel(%arg0: i32, %arg1: memref<128x64xbf16, #tpu.memory_space<vmem>>, %arg2: memref<64x128xbf16, #tpu.memory_space<vmem>>, %arg3: memref<1x128xf32, #tpu.memory_space<vmem>>, %arg4: memref<128x128xbf16, #tpu.memory_space<vmem>>) attributes {dimension_semantics = [#tpu.dimension_semantics<parallel>], iteration_bounds = array<i64: 2>, scalar_prefetch = 0 : i64, scratch_operands = 0 : i64, tpu.core_type = #tpu.core_type<tc>, window_params = [{transform_indices = @transform_0, window_bounds = array<i64: 128, 64>}, {pipeline_mode = #tpu.pipeline_mode<synchronous>, transform_indices = @transform_1, window_bounds = array<i64: 64, 128>}, {pipeline_mode = #tpu.pipeline_mode<synchronous>, transform_indices = @transform_2, window_bounds = array<i64: 1, 128>}, {transform_indices = @transform_3, window_bounds = array<i64: 128, 128>}]} {
    %c0 = arith.constant 0 : index
    %c0_0 = arith.constant 0 : index
    %0 = vector.load %arg1[%c0, %c0_0] : memref<128x64xbf16, #tpu.memory_space<vmem>>, vector<128x64xbf16>
    %c0_1 = arith.constant 0 : index
    %c0_2 = arith.constant 0 : index
    %1 = vector.load %arg2[%c0_1, %c0_2] : memref<64x128xbf16, #tpu.memory_space<vmem>>, vector<64x128xbf16>
    %c0_3 = arith.constant 0 : index
    %c0_4 = arith.constant 0 : index
    %2 = vector.load %arg3[%c0_3, %c0_4] : memref<1x128xf32, #tpu.memory_space<vmem>>, vector<1x128xf32>
    %cst = arith.constant dense<0.000000e+00> : vector<128x128xf32>
    %3 = tpu.matmul %0, %1, %cst {dimension_numbers = #tpu.dot_dimension_numbers<[1], [0], [0], [1], [0, 0, 1, 1], [], []>} : vector<128x64xbf16>, vector<64x128xbf16>, vector<128x128xf32> -> vector<128x128xf32>
    %4 = vector.broadcast %2 : vector<1x128xf32> to vector<128x128xf32>
    %5 = arith.addf %3, %4 : vector<128x128xf32>
    %cst_5 = arith.constant 0.000000e+00 : f32
    %6 = vector.broadcast %cst_5 : f32 to vector<128x128xf32>
    %7 = arith.maximumf %5, %6 : vector<128x128xf32>
    %8 = arith.truncf %7 : vector<128x128xf32> to vector<128x128xbf16>
    %c0_6 = arith.constant 0 : index
    %c0_7 = arith.constant 0 : index
    %9 = vector.load %arg4[%c0_6, %c0_7] : memref<128x128xbf16, #tpu.memory_space<vmem>>, vector<128x128xbf16>
    tpu.vector_store %arg4[%c0_6, %c0_7], %8 {strides = array<i32>} : memref<128x128xbf16, #tpu.memory_space<vmem>>, vector<128x128xbf16>,
    return
  }
  func.func @transform_0(%arg0: i32) -> (i32, i32) {
    %c0_i32 = arith.constant 0 : i32
    %c0_i32_0 = arith.constant 0 : i32
    return %arg0, %c0_i32 : i32, i32
  }
  func.func @transform_1(%arg0: i32) -> (i32, i32) {
    %c0_i32 = arith.constant 0 : i32
    %c0_i32_0 = arith.constant 0 : i32
    %c0_i32_1 = arith.constant 0 : i32
    return %c0_i32, %c0_i32_0 : i32, i32
  }
  func.func @transform_2(%arg0: i32) -> (i32, i32) {
    %c0_i32 = arith.constant 0 : i32
    %c0_i32_0 = arith.constant 0 : i32
    %c0_i32_1 = arith.constant 0 : i32
    return %c0_i32, %c0_i32_0 : i32, i32
  }
  func.func @transform_3(%arg0: i32) -> (i32, i32) {
    %c0_i32 = arith.constant 0 : i32
    %c0_i32_0 = arith.constant 0 : i32
    return %arg0, %c0_i32 : i32, i32
  }
}

module attributes {stable_mosaic.version = 11 : i64} {
  func.func @_graph_max_kernel(%arg0: i32, %arg1: i32, %arg2: memref<1x128x128xbf16, #tpu.memory_space<vmem>>, %arg3: memref<128x1024xbf16, #tpu.memory_space<vmem>>, %arg4: memref<1x1024xf32, #tpu.memory_space<vmem>>, %arg5: memref<1x1x1024xf32, #tpu.memory_space<vmem>>, %arg6: memref<1x1024xf32, #tpu.memory_space<vmem>>) attributes {dimension_semantics = [#tpu.dimension_semantics<parallel>, #tpu.dimension_semantics<arbitrary>], iteration_bounds = array<i64: 2, 1>, scalar_prefetch = 0 : i64, scratch_operands = 1 : i64, tpu.core_type = #tpu.core_type<tc>, window_params = [{transform_indices = @transform_0, window_bounds = array<i64: 1, 128, 128>}, {pipeline_mode = #tpu.pipeline_mode<synchronous>, transform_indices = @transform_1, window_bounds = array<i64: 128, 1024>}, {pipeline_mode = #tpu.pipeline_mode<synchronous>, transform_indices = @transform_2, window_bounds = array<i64: 1, 1024>}, {transform_indices = @transform_3, window_bounds = array<i64: 1, 1, 1024>}]} {
    %c0_i32 = arith.constant 0 : i32
    %0 = arith.cmpi eq, %arg1, %c0_i32 : i32
    %1 = arith.extui %0 : i1 to i32
    %c0_i32_0 = arith.constant 0 : i32
    %2 = arith.cmpi ne, %1, %c0_i32_0 : i32
    scf.if %2 {
      %cst_12 = arith.constant 0xFF800000 : f32
      %18 = vector.broadcast %cst_12 : f32 to vector<1x1024xf32>
      %c0_13 = arith.constant 0 : index
      %c0_14 = arith.constant 0 : index
      %19 = vector.load %arg6[%c0_13, %c0_14] : memref<1x1024xf32, #tpu.memory_space<vmem>>, vector<1x1024xf32>
      tpu.vector_store %arg6[%c0_13, %c0_14], %18 {strides = array<i32>} : memref<1x1024xf32, #tpu.memory_space<vmem>>, vector<1x1024xf32>,
    } else {
    }
    %c0_i32_1 = arith.constant 0 : i32
    %c128_i32 = arith.constant 128 : i32
    %3 = arith.muli %c0_i32_1, %c128_i32 : i32
    %4 = tpu.assume_multiple %3, 128 : i32
    %c0 = arith.constant 0 : index
    %5 = arith.index_cast %4 : i32 to index
    %c0_2 = arith.constant 0 : index
    %6 = vector.load %arg2[%c0, %5, %c0_2] : memref<1x128x128xbf16, #tpu.memory_space<vmem>>, vector<1x128x128xbf16>
    %7 = vector.shape_cast %6 : vector<1x128x128xbf16> to vector<128x128xbf16>
    %c0_3 = arith.constant 0 : index
    %c0_4 = arith.constant 0 : index
    %8 = vector.load %arg3[%c0_3, %c0_4] : memref<128x1024xbf16, #tpu.memory_space<vmem>>, vector<128x1024xbf16>
    %cst = arith.constant dense<0.000000e+00> : vector<128x1024xf32>
    %9 = tpu.matmul %7, %8, %cst {dimension_numbers = #tpu.dot_dimension_numbers<[1], [0], [0], [1], [0, 0, 1, 1], [], []>} : vector<128x128xbf16>, vector<128x1024xbf16>, vector<128x1024xf32> -> vector<128x1024xf32>
    %c0_5 = arith.constant 0 : index
    %c0_6 = arith.constant 0 : index
    %10 = vector.load %arg6[%c0_5, %c0_6] : memref<1x1024xf32, #tpu.memory_space<vmem>>, vector<1x1024xf32>
    %cst_7 = arith.constant dense<0xFF800000> : vector<1024xf32>
    %11 = vector.multi_reduction <maximumf>, %9, %cst_7 [0] : vector<128x1024xf32> to vector<1024xf32>
    %12 = vector.shape_cast %11 : vector<1024xf32> to vector<1x1024xf32>
    %13 = arith.maximumf %10, %12 : vector<1x1024xf32>
    %c0_8 = arith.constant 0 : index
    %c0_9 = arith.constant 0 : index
    %14 = vector.load %arg6[%c0_8, %c0_9] : memref<1x1024xf32, #tpu.memory_space<vmem>>, vector<1x1024xf32>
    tpu.vector_store %arg6[%c0_8, %c0_9], %13 {strides = array<i32>} : memref<1x1024xf32, #tpu.memory_space<vmem>>, vector<1x1024xf32>,
    %c1_i32 = arith.constant 1 : i32
    %c0_i32_10 = arith.constant 0 : i32
    %15 = arith.cmpi eq, %arg1, %c0_i32_10 : i32
    %16 = arith.extui %15 : i1 to i32
    %c0_i32_11 = arith.constant 0 : i32
    %17 = arith.cmpi ne, %16, %c0_i32_11 : i32
    scf.if %17 {
      %c0_12 = arith.constant 0 : index
      %c0_13 = arith.constant 0 : index
      %18 = vector.load %arg6[%c0_12, %c0_13] : memref<1x1024xf32, #tpu.memory_space<vmem>>, vector<1x1024xf32>
      %c0_14 = arith.constant 0 : index
      %c0_15 = arith.constant 0 : index
      %19 = vector.load %arg4[%c0_14, %c0_15] : memref<1x1024xf32, #tpu.memory_space<vmem>>, vector<1x1024xf32>
      %20 = arith.addf %18, %19 : vector<1x1024xf32>
      %c0_16 = arith.constant 0 : index
      %c0_17 = arith.constant 0 : index
      %c0_18 = arith.constant 0 : index
      %21 = vector.load %arg5[%c0_16, %c0_17, %c0_18] : memref<1x1x1024xf32, #tpu.memory_space<vmem>>, vector<1x1x1024xf32>
      %22 = vector.shape_cast %21 : vector<1x1x1024xf32> to vector<1x1024xf32>
      %23 = vector.shape_cast %20 : vector<1x1024xf32> to vector<1x1x1024xf32>
      tpu.vector_store %arg5[%c0_16, %c0_17, %c0_18], %23 {strides = array<i32>} : memref<1x1x1024xf32, #tpu.memory_space<vmem>>, vector<1x1x1024xf32>,
    } else {
    }
    return
  }
  func.func @transform_0(%arg0: i32, %arg1: i32) -> (i32, i32, i32) {
    %c0_i32 = arith.constant 0 : i32
    %c0_i32_0 = arith.constant 0 : i32
    return %arg0, %arg1, %c0_i32 : i32, i32, i32
  }
  func.func @transform_1(%arg0: i32, %arg1: i32) -> (i32, i32) {
    %c0_i32 = arith.constant 0 : i32
    %c0_i32_0 = arith.constant 0 : i32
    %c0_i32_1 = arith.constant 0 : i32
    return %c0_i32, %c0_i32_0 : i32, i32
  }
  func.func @transform_2(%arg0: i32, %arg1: i32) -> (i32, i32) {
    %c0_i32 = arith.constant 0 : i32
    %c0_i32_0 = arith.constant 0 : i32
    %c0_i32_1 = arith.constant 0 : i32
    return %c0_i32, %c0_i32_0 : i32, i32
  }
  func.func @transform_3(%arg0: i32, %arg1: i32) -> (i32, i32, i32) {
    %c0_i32 = arith.constant 0 : i32
    %c0_i32_0 = arith.constant 0 : i32
    %c0_i32_1 = arith.constant 0 : i32
    return %arg0, %c0_i32, %c0_i32_0 : i32, i32, i32
  }
}

module attributes {stable_mosaic.version = 11 : i64} {
  func.func @_fused_rowmlp_kernel(%arg0: i32, %arg1: memref<8x1024xf32, #tpu.memory_space<vmem>>, %arg2: memref<1024x512xbf16, #tpu.memory_space<vmem>>, %arg3: memref<1x512xf32, #tpu.memory_space<vmem>>, %arg4: memref<512x32xbf16, #tpu.memory_space<vmem>>, %arg5: memref<1x32xf32, #tpu.memory_space<vmem>>, %arg6: memref<8x32xf32, #tpu.memory_space<vmem>>) attributes {dimension_semantics = [#tpu.dimension_semantics<parallel>], iteration_bounds = array<i64: 1>, scalar_prefetch = 0 : i64, scratch_operands = 0 : i64, tpu.core_type = #tpu.core_type<tc>, window_params = [{transform_indices = @transform_0, window_bounds = array<i64: 8, 1024>}, {pipeline_mode = #tpu.pipeline_mode<synchronous>, transform_indices = @transform_1, window_bounds = array<i64: 1024, 512>}, {pipeline_mode = #tpu.pipeline_mode<synchronous>, transform_indices = @transform_2, window_bounds = array<i64: 1, 512>}, {pipeline_mode = #tpu.pipeline_mode<synchronous>, transform_indices = @transform_3, window_bounds = array<i64: 512, 32>}, {pipeline_mode = #tpu.pipeline_mode<synchronous>, transform_indices = @transform_4, window_bounds = array<i64: 1, 32>}, {transform_indices = @transform_5, window_bounds = array<i64: 8, 32>}]} {
    %c0 = arith.constant 0 : index
    %c0_0 = arith.constant 0 : index
    %0 = vector.load %arg1[%c0, %c0_0] : memref<8x1024xf32, #tpu.memory_space<vmem>>, vector<8x1024xf32>
    %c0_1 = arith.constant 0 : index
    %c0_2 = arith.constant 0 : index
    %1 = vector.load %arg2[%c0_1, %c0_2] : memref<1024x512xbf16, #tpu.memory_space<vmem>>, vector<1024x512xbf16>
    %c0_3 = arith.constant 0 : index
    %c0_4 = arith.constant 0 : index
    %2 = vector.load %arg3[%c0_3, %c0_4] : memref<1x512xf32, #tpu.memory_space<vmem>>, vector<1x512xf32>
    %3 = arith.truncf %0 : vector<8x1024xf32> to vector<8x1024xbf16>
    %cst = arith.constant dense<0.000000e+00> : vector<8x512xf32>
    %4 = tpu.matmul %3, %1, %cst {dimension_numbers = #tpu.dot_dimension_numbers<[1], [0], [0], [1], [0, 0, 1, 1], [], []>} : vector<8x1024xbf16>, vector<1024x512xbf16>, vector<8x512xf32> -> vector<8x512xf32>
    %5 = vector.broadcast %2 : vector<1x512xf32> to vector<8x512xf32>
    %6 = arith.addf %4, %5 : vector<8x512xf32>
    %cst_5 = arith.constant 0.000000e+00 : f32
    %7 = vector.broadcast %cst_5 : f32 to vector<8x512xf32>
    %8 = arith.maximumf %6, %7 : vector<8x512xf32>
    %c0_6 = arith.constant 0 : index
    %c0_7 = arith.constant 0 : index
    %9 = vector.load %arg4[%c0_6, %c0_7] : memref<512x32xbf16, #tpu.memory_space<vmem>>, vector<512x32xbf16>
    %c0_8 = arith.constant 0 : index
    %c0_9 = arith.constant 0 : index
    %10 = vector.load %arg5[%c0_8, %c0_9] : memref<1x32xf32, #tpu.memory_space<vmem>>, vector<1x32xf32>
    %11 = arith.truncf %8 : vector<8x512xf32> to vector<8x512xbf16>
    %cst_10 = arith.constant dense<0.000000e+00> : vector<8x32xf32>
    %12 = tpu.matmul %11, %9, %cst_10 {dimension_numbers = #tpu.dot_dimension_numbers<[1], [0], [0], [1], [0, 0, 1, 1], [], []>} : vector<8x512xbf16>, vector<512x32xbf16>, vector<8x32xf32> -> vector<8x32xf32>
    %13 = vector.broadcast %10 : vector<1x32xf32> to vector<8x32xf32>
    %14 = arith.addf %12, %13 : vector<8x32xf32>
    %c0_11 = arith.constant 0 : index
    %c0_12 = arith.constant 0 : index
    %15 = vector.load %arg6[%c0_11, %c0_12] : memref<8x32xf32, #tpu.memory_space<vmem>>, vector<8x32xf32>
    tpu.vector_store %arg6[%c0_11, %c0_12], %14 {strides = array<i32>} : memref<8x32xf32, #tpu.memory_space<vmem>>, vector<8x32xf32>,
    return
  }
  func.func @transform_0(%arg0: i32) -> (i32, i32) {
    %c0_i32 = arith.constant 0 : i32
    %c0_i32_0 = arith.constant 0 : i32
    return %arg0, %c0_i32 : i32, i32
  }
  func.func @transform_1(%arg0: i32) -> (i32, i32) {
    %c0_i32 = arith.constant 0 : i32
    %c0_i32_0 = arith.constant 0 : i32
    %c0_i32_1 = arith.constant 0 : i32
    return %c0_i32, %c0_i32_0 : i32, i32
  }
  func.func @transform_2(%arg0: i32) -> (i32, i32) {
    %c0_i32 = arith.constant 0 : i32
    %c0_i32_0 = arith.constant 0 : i32
    %c0_i32_1 = arith.constant 0 : i32
    return %c0_i32, %c0_i32_0 : i32, i32
  }
  func.func @transform_3(%arg0: i32) -> (i32, i32) {
    %c0_i32 = arith.constant 0 : i32
    %c0_i32_0 = arith.constant 0 : i32
    %c0_i32_1 = arith.constant 0 : i32
    return %c0_i32, %c0_i32_0 : i32, i32
  }
  func.func @transform_4(%arg0: i32) -> (i32, i32) {
    %c0_i32 = arith.constant 0 : i32
    %c0_i32_0 = arith.constant 0 : i32
    %c0_i32_1 = arith.constant 0 : i32
    return %c0_i32, %c0_i32_0 : i32, i32
  }
  func.func @transform_5(%arg0: i32) -> (i32, i32) {
    %c0_i32 = arith.constant 0 : i32
    %c0_i32_0 = arith.constant 0 : i32
    return %arg0, %c0_i32 : i32, i32
  }
}

</mosaic_0001>

<llo_original>
// kernel: foldnet_encoder_forward.5
$region0: #{foldnet_encoder_forward.5}
  #allocation0 [shape = 'u32[]', space=smem, size = 0x4, offset = 0x4, fixed_abs, tag = 'smem constant byte address 0x4 - core index']
  #allocation1 [shape = 'u32[144,128]{1,0:T(1,128)}', space=vmem, size = 0x12000, scoped, tag = 'internal scratch']
  %s0 = inlined_call_operand.vmem [shape: f32[2,128,3], index: 0, kind: input, shape index: {}]
  %s1 = inlined_call_operand.vmem [shape: f32[2,128,1], index: 1, kind: input, shape index: {}]
  %s2 = inlined_call_operand.vmem [shape: f32[2,3,128], index: 2, kind: input, shape index: {}]
  %s3 = inlined_call_operand.vmem [shape: f32[2,1,128], index: 3, kind: input, shape index: {}]
  %s4 = inlined_call_operand.vmem [shape: f32[2,128,128], index: 4, kind: output, shape index: {}]
  %s5 = sld [smem:[#allocation0]]
  $region49: #{foldnet_encoder_forward.5} parent=0
    _
  %s7 = ssub.s32 1, %s5
  %s8 = scalar_select 0, %s7, %s5
  loop: start=0, step=1, limit=4
  $region2: #{foldnet_encoder_forward.5} parent=0 // loop_pre_header
    _
  $region3: #{foldnet_encoder_forward.5} parent=0 // loop_header
    %s10 = sphi 0, %s14
    %p11 = scmp.ge.s32.totalorder %s10, 4
    %s17 = sphi 0, %s29
    %s18 = sphi 0, %s25
    %s19 = sphi 0, %s17
    %s20 = sphi 0, %s18
    %s21 = sphi 0, %s19
    %s22 = sphi 0, %s20
    %s34 = sphi 0, %s36
    %s37 = sphi 0, %s34
    %s38 = sphi 0, %s37
    %s54 = sphi 0, %s38
    %s62 = sphi 0, %s64
    %s65 = sphi 0, %s62
    %s66 = sphi 0, %s65
    %s82 = sphi 0, %s66
    %s88 = sphi 0, %s90
    %s91 = sphi 0, %s88
    %s92 = sphi 0, %s91
    %s108 = sphi 0, %s92
    %s114 = sphi 0, %s116
    %s117 = sphi 0, %s114
    %s118 = sphi 0, %s117
    %s134 = sphi 0, %s118
    %s142 = sphi 0, %s144
    %s145 = sphi 0, %s142
    %s146 = sphi 0, %s145
    %s162 = sphi 0, %s146
  $region4: #{foldnet_encoder_forward.5} parent=0 // loop_header_branch
    %13 = sbr.rel (%p11) target = $region8
  $region5: #{foldnet_encoder_forward.5} parent=0 // loop_body
    %s15 = ssub.s32 %s10, 1
    %s16 = ssub.s32 %s10, 2
    %s23 = sadd.s32 1, %s18
    %p24 = scmp.ge.s32.totalorder %s23, 1
    %s25 = scalar_select %p24, 0, %s23
    %s26 = sadd.s32 1, %s17
    %s27 = scalar_select %p24, %s26, %s17
    %p28 = scmp.ge.s32.totalorder %s27, 2
    %s29 = scalar_select %p28, 0, %s27
    %s30 = ssub.s32 %s17, %s29
    %s31 = ssub.s32 %s18, %s25
    %s32 = sor.u32 %s30, %s31
    %p33 = scmp.eq.s32.totalorder %s32, 0
    %s35 = sadd.s32 %s34, 1
    %s36 = scalar_select %p33, %s34, %s35
    %p39 = pneg %p33
    %p40 = scmp.eq.s32.totalorder %s10, 1
    %p41 = por %p39, %p40
    %p42 = scmp.ne.s32.totalorder %s34, %s37
    %p43 = scmp.eq.s32.totalorder %s10, 0
    %p44 = por %p42, %p43
    %p45 = scmp.ne.s32.totalorder %s34, %s37
    %p46 = scmp.eq.s32.totalorder %s15, 1
    %p47 = por %p45, %p46
    %p48 = scmp.ne.s32.totalorder %s37, %s38
    %p49 = scmp.eq.s32.totalorder %s15, 0
    %p50 = por %p48, %p49
    %p51 = scmp.ne.s32.totalorder %s37, %s38
    %p52 = scmp.eq.s32.totalorder %s16, 1
    %p53 = por %p51, %p52
    %p55 = scmp.ne.s32.totalorder %s38, %s54
    %p56 = scmp.eq.s32.totalorder %s16, 0
    %p57 = por %p55, %p56
    %s58 = ssub.s32 %s17, %s29
    %s59 = ssub.s32 %s18, %s25
    %s60 = sor.u32 %s58, %s59
    %p61 = scmp.eq.s32.totalorder %s60, 0
    %s63 = sadd.s32 %s62, 1
    %s64 = scalar_select %p61, %s62, %s63
    %p67 = pneg %p61
    %p68 = scmp.eq.s32.totalorder %s10, 1
    %p69 = por %p67, %p68
    %p70 = scmp.ne.s32.totalorder %s62, %s65
    %p71 = scmp.eq.s32.totalorder %s10, 0
    %p72 = por %p70, %p71
    %p73 = scmp.ne.s32.totalorder %s62, %s65
    %p74 = scmp.eq.s32.totalorder %s15, 1
    %p75 = por %p73, %p74
    %p76 = scmp.ne.s32.totalorder %s65, %s66
    %p77 = scmp.eq.s32.totalorder %s15, 0
    %p78 = por %p76, %p77
    %p79 = scmp.ne.s32.totalorder %s65, %s66
    %p80 = scmp.eq.s32.totalorder %s16, 1
    %p81 = por %p79, %p80
    %p83 = scmp.ne.s32.totalorder %s66, %s82
    %p84 = scmp.eq.s32.totalorder %s16, 0
    %p85 = por %p83, %p84
    %s86 = ssub.s32 %s17, %s29
    %p87 = scmp.eq.s32.totalorder %s86, 0
    %s89 = sadd.s32 %s88, 1
    %s90 = scalar_select %p87, %s88, %s89
    %p93 = pneg %p87
    %p94 = scmp.eq.s32.totalorder %s10, 1
    %p95 = por %p93, %p94
    %p96 = scmp.ne.s32.totalorder %s88, %s91
    %p97 = scmp.eq.s32.totalorder %s10, 0
    %p98 = por %p96, %p97
    %p99 = scmp.ne.s32.totalorder %s88, %s91
    %p100 = scmp.eq.s32.totalorder %s15, 1
    %p101 = por %p99, %p100
    %p102 = scmp.ne.s32.totalorder %s91, %s92
    %p103 = scmp.eq.s32.totalorder %s15, 0
    %p104 = por %p102, %p103
    %p105 = scmp.ne.s32.totalorder %s91, %s92
    %p106 = scmp.eq.s32.totalorder %s16, 1
    %p107 = por %p105, %p106
    %p109 = scmp.ne.s32.totalorder %s92, %s108
    %p110 = scmp.eq.s32.totalorder %s16, 0
    %p111 = por %p109, %p110
    %s112 = ssub.s32 %s17, %s29
    %p113 = scmp.eq.s32.totalorder %s112, 0
    %s115 = sadd.s32 %s114, 1
    %s116 = scalar_select %p113, %s114, %s115
    %p119 = pneg %p113
    %p120 = scmp.eq.s32.totalorder %s10, 1
    %p121 = por %p119, %p120
    %p122 = scmp.ne.s32.totalorder %s114, %s117
    %p123 = scmp.eq.s32.totalorder %s10, 0
    %p124 = por %p122, %p123
    %p125 = scmp.ne.s32.totalorder %s114, %s117
    %p126 = scmp.eq.s32.totalorder %s15, 1
    %p127 = por %p125, %p126
    %p128 = scmp.ne.s32.totalorder %s117, %s118
    %p129 = scmp.eq.s32.totalorder %s15, 0
    %p130 = por %p128, %p129
    %p131 = scmp.ne.s32.totalorder %s117, %s118
    %p132 = scmp.eq.s32.totalorder %s16, 1
    %p133 = por %p131, %p132
    %p135 = scmp.ne.s32.totalorder %s118, %s134
    %p136 = scmp.eq.s32.totalorder %s16, 0
    %p137 = por %p135, %p136
    %s138 = ssub.s32 %s17, %s29
    %s139 = ssub.s32 %s18, %s25
    %s140 = sor.u32 %s138, %s139
    %p141 = scmp.eq.s32.totalorder %s140, 0
    %s143 = sadd.s32 %s142, 1
    %s144 = scalar_select %p141, %s142, %s143
    %p147 = pneg %p141
    %p148 = scmp.eq.s32.totalorder %s10, 1
    %p149 = por %p147, %p148
    %p150 = scmp.ne.s32.totalorder %s142, %s145
    %p151 = scmp.eq.s32.totalorder %s10, 0
    %p152 = por %p150, %p151
    %p153 = scmp.ne.s32.totalorder %s142, %s145
    %p154 = scmp.eq.s32.totalorder %s15, 1
    %p155 = por %p153, %p154
    %p156 = scmp.ne.s32.totalorder %s145, %s146
    %p157 = scmp.eq.s32.totalorder %s15, 0
    %p158 = por %p156, %p157
    %p159 = scmp.ne.s32.totalorder %s145, %s146
    %p160 = scmp.eq.s32.totalorder %s16, 1
    %p161 = por %p159, %p160
    %p163 = scmp.ne.s32.totalorder %s146, %s162
    %p164 = scmp.eq.s32.totalorder %s16, 0
    %p165 = por %p163, %p164
    %p166 = scmp.le.s32.totalorder 1, %s10
    %p167 = scmp.lt.s32.totalorder %s10, 3
    %p168 = pnand %p166, %p167
    %p169 = pneg %p168
    // Predicated region
    $region9: #{foldnet_encoder_forward.5} parent=5 // pred_check
      _
    $region10: #{foldnet_encoder_forward.5} parent=5 // pred_check_branch
      %171 = sbr.rel (%p168) target = $region12
    $region11: #{foldnet_encoder_forward.5} parent=5 // pred_region
      %s172 = ssub.s32 %s10, 1
    $region12: #{foldnet_encoder_forward.5} parent=5 // pred_fallthru
      _
    %p173 = scmp.lt.s32.totalorder %s10, 2
    // Predicated region
    $region13: #{foldnet_encoder_forward.5} parent=5 // pred_check
      %p174 = pneg %p173
    $region14: #{foldnet_encoder_forward.5} parent=5 // pred_check_branch
      %176 = sbr.rel (%p174) target = $region16
    $region15: #{foldnet_encoder_forward.5} parent=5 // pred_region
      // Predicated region
      $region17: #{foldnet_encoder_forward.5} parent=15 // pred_check
        %p177 = pneg %p44
      $region18: #{foldnet_encoder_forward.5} parent=15 // pred_check_branch
        %179 = sbr.rel (%p177) target = $region20
      $region19: #{foldnet_encoder_forward.5} parent=15 // pred_region
        %s180 = smul.u32 16, %s18
        %p181 = scmp.lt.s32.totalorder %s17, 1
        %s182 = scalar_select %p181, %s17, 1
        %p183 = scmp.lt.s32.totalorder %s180, 15
        %s184 = scalar_select %p183, %s180, 15
        %s185 = smul.addr %s182, 16
        %s186 = sadd.s32 %s184, %s185
        %s187 = smul.addr %s186, 8
        %s188 = scalar_lea.vmem %s0, %s187
        %s189 = smul.u32 16, %s18
      $region20: #{foldnet_encoder_forward.5} parent=15 // pred_fallthru
        _
      // Predicated region
      $region21: #{foldnet_encoder_forward.5} parent=15 // pred_check
        %p190 = pneg %p72
      $region22: #{foldnet_encoder_forward.5} parent=15 // pred_check_branch
        %192 = sbr.rel (%p190) target = $region24
      $region23: #{foldnet_encoder_forward.5} parent=15 // pred_region
        %s193 = smul.u32 16, %s18
        %p194 = scmp.lt.s32.totalorder %s17, 1
        %s195 = scalar_select %p194, %s17, 1
        %p196 = scmp.lt.s32.totalorder %s193, 15
        %s197 = scalar_select %p196, %s193, 15
        %s198 = smul.addr %s195, 16
        %s199 = sadd.s32 %s197, %s198
        %s200 = smul.addr %s199, 8
        %s201 = scalar_lea.vmem %s1, %s200
        %s202 = smul.u32 16, %s18
      $region24: #{foldnet_encoder_forward.5} parent=15 // pred_fallthru
        _
      // Predicated region
      $region25: #{foldnet_encoder_forward.5} parent=15 // pred_check
        %p203 = pneg %p98
      $region26: #{foldnet_encoder_forward.5} parent=15 // pred_check_branch
        %205 = sbr.rel (%p203) target = $region28
      $region27: #{foldnet_encoder_forward.5} parent=15 // pred_region
        %p206 = scmp.lt.s32.totalorder %s17, 1
        %s207 = scalar_select %p206, %s17, 1
        %s208 = smul.addr %s207, 4
        %s209 = scalar_lea.vmem %s2, %s208
      $region28: #{foldnet_encoder_forward.5} parent=15 // pred_fallthru
        _
      // Predicated region
      $region29: #{foldnet_encoder_forward.5} parent=15 // pred_check
        %p210 = pneg %p124
      $region30: #{foldnet_encoder_forward.5} parent=15 // pred_check_branch
        %212 = sbr.rel (%p210) target = $region32
      $region31: #{foldnet_encoder_forward.5} parent=15 // pred_region
        %p213 = scmp.lt.s32.totalorder %s17, 1
        %s214 = scalar_select %p213, %s17, 1
        %s215 = scalar_lea.vmem %s3, %s214
      $region32: #{foldnet_encoder_forward.5} parent=15 // pred_fallthru
        _
    $region16: #{foldnet_encoder_forward.5} parent=5 // pred_fallthru
      _
    %p216 = scmp.le.s32.totalorder 1, %s10
    %p217 = scmp.lt.s32.totalorder %s10, 3
    %p218 = pnand %p216, %p217
    %p219 = pneg %p218
    // Predicated region
    $region33: #{foldnet_encoder_forward.5} parent=5 // pred_check
      _
    $region34: #{foldnet_encoder_forward.5} parent=5 // pred_check_branch
      %221 = sbr.rel (%p218) target = $region36
    $region35: #{foldnet_encoder_forward.5} parent=5 // pred_region
      %s222 = ssub.s32 %s10, 1
      %s223 = smul.u32 16, %s20
      %p224 = scmp.lt.s32.totalorder %s19, 1
      %s225 = scalar_select %p224, %s19, 1
      %p226 = scmp.lt.s32.totalorder %s223, 15
      %s227 = scalar_select %p226, %s223, 15
      %s228 = smul.addr %s225, 16
      %s229 = sadd.s32 %s227, %s228
      %s230 = smul.addr %s229, 8
      %s231 = scalar_lea.vmem %s0, %s230
      %p232 = pneg %p50
      %p233 = pneg %p47
      %s234 = smul.u32 16, %s20
      %p235 = scmp.lt.s32.totalorder %s19, 1
      %s236 = scalar_select %p235, %s19, 1
      %p237 = scmp.lt.s32.totalorder %s234, 15
      %s238 = scalar_select %p237, %s234, 15
      %s239 = smul.addr %s236, 16
      %s240 = sadd.s32 %s238, %s239
      %s241 = smul.addr %s240, 8
      %s242 = scalar_lea.vmem %s1, %s241
      %p243 = pneg %p78
      %p244 = pneg %p75
      %p245 = scmp.lt.s32.totalorder %s19, 1
      %s246 = scalar_select %p245, %s19, 1
      %s247 = smul.addr %s246, 4
      %s248 = scalar_lea.vmem %s2, %s247
      %p249 = pneg %p104
      %p250 = pneg %p101
      %p251 = scmp.lt.s32.totalorder %s19, 1
      %s252 = scalar_select %p251, %s19, 1
      %s253 = scalar_lea.vmem %s3, %s252
      %p254 = pneg %p130
      %p255 = pneg %p127
      %p256 = pneg %p158
      %p257 = pneg %p155
      %s258 = smul.u32 16, %s20
      %p259 = scmp.lt.s32.totalorder %s19, 1
      %s260 = scalar_select %p259, %s19, 1
      %p261 = scmp.lt.s32.totalorder %s258, 15
      %s262 = scalar_select %p261, %s258, 15
      %s263 = smul.addr %s260, 16
      %s264 = sadd.s32 %s262, %s263
      %s265 = smul.addr %s264, 8
      %s266 = scalar_lea.vmem %s4, %s265
      %s267 = smul.u32 16, %s20
      %p268 = scmp.lt.s32.totalorder %s19, 1
      %s269 = scalar_select %p268, %s19, 1
      %p270 = scmp.lt.s32.totalorder %s267, 15
      %s271 = scalar_select %p270, %s267, 15
      %s272 = smul.addr %s269, 16
      %s273 = sadd.s32 %s271, %s272
      %s274 = smul.addr %s273, 8
      %s275 = scalar_lea.vmem %s0, %s274
      %s276 = smul.u32 16, %s20
      %s277 = smul.u32 16, %s20
      %p278 = scmp.lt.s32.totalorder %s19, 1
      %s279 = scalar_select %p278, %s19, 1
      %p280 = scmp.lt.s32.totalorder %s277, 15
      %s281 = scalar_select %p280, %s277, 15
      %s282 = smul.addr %s279, 16
      %s283 = sadd.s32 %s281, %s282
      %s284 = smul.addr %s283, 8
      %s285 = scalar_lea.vmem %s1, %s284
      %s286 = smul.u32 16, %s20
      %p287 = scmp.lt.s32.totalorder %s19, 1
      %s288 = scalar_select %p287, %s19, 1
      %s289 = smul.addr %s288, 4
      %s290 = scalar_lea.vmem %s2, %s289
      %p291 = scmp.lt.s32.totalorder %s19, 1
      %s292 = scalar_select %p291, %s19, 1
      %s293 = scalar_lea.vmem %s3, %s292
      %s294 = smul.u32 16, %s20
      %p295 = scmp.lt.s32.totalorder %s19, 1
      %s296 = scalar_select %p295, %s19, 1
      %p297 = scmp.lt.s32.totalorder %s294, 15
      %s298 = scalar_select %p297, %s294, 15
      %s299 = smul.addr %s296, 16
      %s300 = sadd.s32 %s298, %s299
      %s301 = smul.addr %s300, 8
      %s302 = scalar_lea.vmem %s4, %s301
      %s303 = smul.u32 16, %s20
      %v304 = vld [vmem:[%s275] sm:$0xff]
      %v305 = vld [vmem:[%s275 + $0x8] sm:$0xff]
      %v306 = vld [vmem:[%s275 + $0x10] sm:$0xff]
      %v307 = vld [vmem:[%s275 + $0x18] sm:$0xff]
      %v308 = vld [vmem:[%s275 + $0x20] sm:$0xff]
      %v309 = vld [vmem:[%s275 + $0x28] sm:$0xff]
      %v310 = vld [vmem:[%s275 + $0x30] sm:$0xff]
      %v311 = vld [vmem:[%s275 + $0x38] sm:$0xff]
      %v312 = vld [vmem:[%s275 + $0x40] sm:$0xff]
      %v313 = vld [vmem:[%s275 + $0x48] sm:$0xff]
      %v314 = vld [vmem:[%s275 + $0x50] sm:$0xff]
      %v315 = vld [vmem:[%s275 + $0x58] sm:$0xff]
      %v316 = vld [vmem:[%s275 + $0x60] sm:$0xff]
      %v317 = vld [vmem:[%s275 + $0x68] sm:$0xff]
      %v318 = vld [vmem:[%s275 + $0x70] sm:$0xff]
      %v319 = vld [vmem:[%s275 + $0x78] sm:$0xff]
      %v320 = vld [vmem:[%s290] sm:$0x7]
      %vm321 = vcmask 23552
      %v323 = vsel %vm321, %v304, 0
      %v326 = vsel %vm321, %v305, 0
      %v329 = vsel %vm321, %v306, 0
      %v332 = vsel %vm321, %v307, 0
      %v335 = vsel %vm321, %v308, 0
      %v338 = vsel %vm321, %v309, 0
      %v341 = vsel %vm321, %v310, 0
      %v344 = vsel %vm321, %v311, 0
      %v347 = vsel %vm321, %v312, 0
      %v350 = vsel %vm321, %v313, 0
      %v353 = vsel %vm321, %v314, 0
      %v356 = vsel %vm321, %v315, 0
      %v359 = vsel %vm321, %v316, 0
      %v362 = vsel %vm321, %v317, 0
      %v365 = vsel %vm321, %v318, 0
      %v368 = vsel %vm321, %v319, 0
      %vm370 = vcmask 1042432
      %v372 = vsel %vm370, %v320, 0
      %374 = vmatprep.subr.mxu0 0.0
      %375 = vmatpush1.msra.mxu0 %v372
      %376 = vmatprep.subr.mxu0 0.0
      %377 = vmatpush1.msra.mxu0 0.0
      %378 = vmatprep.subr.mxu0 0.0
      %379 = vmatpush1.msra.mxu0 0.0
      %380 = vmatprep.subr.mxu0 0.0
      %381 = vmatpush1.msra.mxu0 0.0
      %382 = vmatprep.subr.mxu0 0.0
      %383 = vmatpush1.msra.mxu0 0.0
      %384 = vmatprep.subr.mxu0 0.0
      %385 = vmatpush1.msra.mxu0 0.0
      %386 = vmatprep.subr.mxu0 0.0
      %387 = vmatpush1.msra.mxu0 0.0
      %388 = vmatprep.subr.mxu0 0.0
      %389 = vmatpush1.msra.mxu0 0.0
      %390 = vmatprep.subr.mxu0 0.0
      %391 = vmatpush1.msra.mxu0 0.0
      %392 = vmatprep.subr.mxu0 0.0
      %393 = vmatpush1.msra.mxu0 0.0
      %394 = vmatprep.subr.mxu0 0.0
      %395 = vmatpush1.msra.mxu0 0.0
      %396 = vmatprep.subr.mxu0 0.0
      %397 = vmatpush1.msra.mxu0 0.0
      %398 = vmatprep.subr.mxu0 0.0
      %399 = vmatpush1.msra.mxu0 0.0
      %400 = vmatprep.subr.mxu0 0.0
      %401 = vmatpush1.msra.mxu0 0.0
      %402 = vmatprep.subr.mxu0 0.0
      %403 = vmatpush1.msra.mxu0 0.0
      %404 = vmatprep.subr.mxu0 0.0
      %405 = vmatpush1.msra.mxu0 0.0
      %406 = vmatprep.subr.mxu0 0.0
      %407 = vmatpush1.msra.mxu0 0.0
      %408 = vmatprep.subr.mxu0 0.0
      %409 = vmatpush1.msra.mxu0 0.0
      %410 = vmatprep.subr.mxu0 0.0
      %411 = vmatpush1.msra.mxu0 0.0
      %412 = vmatprep.subr.mxu0 0.0
      %413 = vmatpush1.msra.mxu0 0.0
      %414 = vmatprep.subr.mxu0 0.0
      %415 = vmatpush1.msra.mxu0 0.0
      %416 = vmatprep.subr.mxu0 0.0
      %417 = vmatpush1.msra.mxu0 0.0
      %418 = vmatprep.subr.mxu0 0.0
      %419 = vmatpush1.msra.mxu0 0.0
      %420 = vmatprep.subr.mxu0 0.0
      %421 = vmatpush1.msra.mxu0 0.0
      %422 = vmatprep.subr.mxu0 0.0
      %423 = vmatpush1.msra.mxu0 0.0
      %424 = vmatprep.subr.mxu0 0.0
      %425 = vmatpush1.msra.mxu0 0.0
      %426 = vmatprep.subr.mxu0 0.0
      %427 = vmatpush1.msra.mxu0 0.0
      %428 = vmatprep.subr.mxu0 0.0
      %429 = vmatpush1.msra.mxu0 0.0
      %430 = vmatprep.subr.mxu0 0.0
      %431 = vmatpush1.msra.mxu0 0.0
      %432 = vmatprep.subr.mxu0 0.0
      %433 = vmatpush1.msra.mxu0 0.0
      %434 = vmatprep.subr.mxu0 0.0
      %435 = vmatpush1.msra.mxu0 0.0
      %436 = vmatprep.subr.mxu0 0.0
      %437 = vmatpush1.msra.mxu0 0.0
      %438 = vmatprep.mubr.f32.mxu0 0.0
      %439 = vmatmul.mubr.f32.gmra.mrb[0].mxu0 %v323
      %v440 = vpop.f32.mrb[0].mxu0
      %v441 = vadd.f32 0.0, %v440
      %v442 = vpop.f32.mrb[0].mxu0
      %443 = vmatprep.mubr.f32.mxu0 0.0
      %444 = vmatmul.mubr.f32.gmra.mrb[0].mxu0 %v326
      %v445 = vpop.f32.mrb[0].mxu0
      %v446 = vadd.f32 0.0, %v445
      %v447 = vpop.f32.mrb[0].mxu0
      %448 = vmatprep.mubr.f32.mxu0 0.0
      %449 = vmatmul.mubr.f32.gmra.mrb[0].mxu0 %v329
      %v450 = vpop.f32.mrb[0].mxu0
      %v451 = vadd.f32 0.0, %v450
      %v452 = vpop.f32.mrb[0].mxu0
      %453 = vmatprep.mubr.f32.mxu0 0.0
      %454 = vmatmul.mubr.f32.gmra.mrb[0].mxu0 %v332
      %v455 = vpop.f32.mrb[0].mxu0
      %v456 = vadd.f32 0.0, %v455
      %v457 = vpop.f32.mrb[0].mxu0
      %458 = vmatprep.mubr.f32.mxu0 0.0
      %459 = vmatmul.mubr.f32.gmra.mrb[0].mxu0 %v335
      %v460 = vpop.f32.mrb[0].mxu0
      %v461 = vadd.f32 0.0, %v460
      %v462 = vpop.f32.mrb[0].mxu0
      %463 = vmatprep.mubr.f32.mxu0 0.0
      %464 = vmatmul.mubr.f32.gmra.mrb[0].mxu0 %v338
      %v465 = vpop.f32.mrb[0].mxu0
      %v466 = vadd.f32 0.0, %v465
      %v467 = vpop.f32.mrb[0].mxu0
      %468 = vmatprep.mubr.f32.mxu0 0.0
      %469 = vmatmul.mubr.f32.gmra.mrb[0].mxu0 %v341
      %v470 = vpop.f32.mrb[0].mxu0
      %v471 = vadd.f32 0.0, %v470
      %v472 = vpop.f32.mrb[0].mxu0
      %473 = vmatprep.mubr.f32.mxu0 0.0
      %474 = vmatmul.mubr.f32.gmra.mrb[0].mxu0 %v344
      %v475 = vpop.f32.mrb[0].mxu0
      %v476 = vadd.f32 0.0, %v475
      %v477 = vpop.f32.mrb[0].mxu0
      %478 = vmatprep.mubr.f32.mxu0 0.0
      %479 = vmatmul.mubr.f32.gmra.mrb[0].mxu0 %v347
      %v480 = vpop.f32.mrb[0].mxu0
      %v481 = vadd.f32 0.0, %v480
      %v482 = vpop.f32.mrb[0].mxu0
      %483 = vmatprep.mubr.f32.mxu0 0.0
      %484 = vmatmul.mubr.f32.gmra.mrb[0].mxu0 %v350
      %v485 = vpop.f32.mrb[0].mxu0
      %v486 = vadd.f32 0.0, %v485
      %v487 = vpop.f32.mrb[0].mxu0
      %488 = vmatprep.mubr.f32.mxu0 0.0
      %489 = vmatmul.mubr.f32.gmra.mrb[0].mxu0 %v353
      %v490 = vpop.f32.mrb[0].mxu0
      %v491 = vadd.f32 0.0, %v490
      %v492 = vpop.f32.mrb[0].mxu0
      %493 = vmatprep.mubr.f32.mxu0 0.0
      %494 = vmatmul.mubr.f32.gmra.mrb[0].mxu0 %v356
      %v495 = vpop.f32.mrb[0].mxu0
      %v496 = vadd.f32 0.0, %v495
      %v497 = vpop.f32.mrb[0].mxu0
      %498 = vmatprep.mubr.f32.mxu0 0.0
      %499 = vmatmul.mubr.f32.gmra.mrb[0].mxu0 %v359
      %v500 = vpop.f32.mrb[0].mxu0
      %v501 = vadd.f32 0.0, %v500
      %v502 = vpop.f32.mrb[0].mxu0
      %503 = vmatprep.mubr.f32.mxu0 0.0
      %504 = vmatmul.mubr.f32.gmra.mrb[0].mxu0 %v362
      %v505 = vpop.f32.mrb[0].mxu0
      %v506 = vadd.f32 0.0, %v505
      %v507 = vpop.f32.mrb[0].mxu0
      %508 = vmatprep.mubr.f32.mxu0 0.0
      %509 = vmatmul.mubr.f32.gmra.mrb[0].mxu0 %v365
      %v510 = vpop.f32.mrb[0].mxu0
      %v511 = vadd.f32 0.0, %v510
      %v512 = vpop.f32.mrb[0].mxu0
      %513 = vmatprep.mubr.f32.mxu0 0.0
      %514 = vmatmul.mubr.f32.gmra.mrb[0].mxu0 %v368
      %v515 = vpop.f32.mrb[0].mxu0
      %v516 = vadd.f32 0.0, %v515
      %v517 = vpop.f32.mrb[0].mxu0
      %518 = vdwg.mxu0
      %v519 = vmul.f32 %v441, 2.0
      %v520 = vmul.f32 %v446, 2.0
      %v521 = vmul.f32 %v451, 2.0
      %v522 = vmul.f32 %v456, 2.0
      %v523 = vmul.f32 %v461, 2.0
      %v524 = vmul.f32 %v466, 2.0
      %v525 = vmul.f32 %v471, 2.0
      %v526 = vmul.f32 %v476, 2.0
      %v527 = vmul.f32 %v481, 2.0
      %v528 = vmul.f32 %v486, 2.0
      %v529 = vmul.f32 %v491, 2.0
      %v530 = vmul.f32 %v496, 2.0
      %v531 = vmul.f32 %v501, 2.0
      %v532 = vmul.f32 %v506, 2.0
      %v533 = vmul.f32 %v511, 2.0
      %v534 = vmul.f32 %v516, 2.0
      %v535 = vld [vmem:[%s285] sm:$0xff]
      %v536 = vld [vmem:[%s285 + $0x8] sm:$0xff]
      %v537 = vld [vmem:[%s285 + $0x10] sm:$0xff]
      %v538 = vld [vmem:[%s285 + $0x18] sm:$0xff]
      %v539 = vld [vmem:[%s285 + $0x20] sm:$0xff]
      %v540 = vld [vmem:[%s285 + $0x28] sm:$0xff]
      %v541 = vld [vmem:[%s285 + $0x30] sm:$0xff]
      %v542 = vld [vmem:[%s285 + $0x38] sm:$0xff]
      %v543 = vld [vmem:[%s285 + $0x40] sm:$0xff]
      %v544 = vld [vmem:[%s285 + $0x48] sm:$0xff]
      %v545 = vld [vmem:[%s285 + $0x50] sm:$0xff]
      %v546 = vld [vmem:[%s285 + $0x58] sm:$0xff]
      %v547 = vld [vmem:[%s285 + $0x60] sm:$0xff]
      %v548 = vld [vmem:[%s285 + $0x68] sm:$0xff]
      %v549 = vld [vmem:[%s285 + $0x70] sm:$0xff]
      %v550 = vld [vmem:[%s285 + $0x78] sm:$0xff]
      %552 = vset.pattern.permute.xlu0 0
      %553 = vperm.xlu0 %552, %v535
      %v554 = vpop.permute.xlu0 %553
      %557 = vset.pattern.permute.xlu0 0
      %558 = vperm.xlu0 %557, %v536
      %v559 = vpop.permute.xlu0 %558
      %562 = vset.pattern.permute.xlu0 0
      %563 = vperm.xlu0 %562, %v537
      %v564 = vpop.permute.xlu0 %563
      %567 = vset.pattern.permute.xlu0 0
      %568 = vperm.xlu0 %567, %v538
      %v569 = vpop.permute.xlu0 %568
      %572 = vset.pattern.permute.xlu0 0
      %573 = vperm.xlu0 %572, %v539
      %v574 = vpop.permute.xlu0 %573
      %577 = vset.pattern.permute.xlu0 0
      %578 = vperm.xlu0 %577, %v540
      %v579 = vpop.permute.xlu0 %578
      %582 = vset.pattern.permute.xlu0 0
      %583 = vperm.xlu0 %582, %v541
      %v584 = vpop.permute.xlu0 %583
      %587 = vset.pattern.permute.xlu0 0
      %588 = vperm.xlu0 %587, %v542
      %v589 = vpop.permute.xlu0 %588
      %592 = vset.pattern.permute.xlu0 0
      %593 = vperm.xlu0 %592, %v543
      %v594 = vpop.permute.xlu0 %593
      %597 = vset.pattern.permute.xlu0 0
      %598 = vperm.xlu0 %597, %v544
      %v599 = vpop.permute.xlu0 %598
      %602 = vset.pattern.permute.xlu0 0
      %603 = vperm.xlu0 %602, %v545
      %v604 = vpop.permute.xlu0 %603
      %607 = vset.pattern.permute.xlu0 0
      %608 = vperm.xlu0 %607, %v546
      %v609 = vpop.permute.xlu0 %608
      %612 = vset.pattern.permute.xlu0 0
      %613 = vperm.xlu0 %612, %v547
      %v614 = vpop.permute.xlu0 %613
      %617 = vset.pattern.permute.xlu0 0
      %618 = vperm.xlu0 %617, %v548
      %v619 = vpop.permute.xlu0 %618
      %622 = vset.pattern.permute.xlu0 0
      %623 = vperm.xlu0 %622, %v549
      %v624 = vpop.permute.xlu0 %623
      %627 = vset.pattern.permute.xlu0 0
      %628 = vperm.xlu0 %627, %v550
      %v629 = vpop.permute.xlu0 %628
      %v631 = vsub.f32 %v519, %v554
      %v632 = vsub.f32 %v520, %v559
      %v633 = vsub.f32 %v521, %v564
      %v634 = vsub.f32 %v522, %v569
      %v635 = vsub.f32 %v523, %v574
      %v636 = vsub.f32 %v524, %v579
      %v637 = vsub.f32 %v525, %v584
      %v638 = vsub.f32 %v526, %v589
      %v639 = vsub.f32 %v527, %v594
      %v640 = vsub.f32 %v528, %v599
      %v641 = vsub.f32 %v529, %v604
      %v642 = vsub.f32 %v530, %v609
      %v643 = vsub.f32 %v531, %v614
      %v644 = vsub.f32 %v532, %v619
      %v645 = vsub.f32 %v533, %v624
      %v646 = vsub.f32 %v534, %v629
      %v647 = vld [vmem:[%s293] sm:$0x1]
      %v649 = vlaneseq
      %v650 = vshrl.u32 %v649, 7
      %v651 = vsub.s32 0, %v650
      %v652 = vrot.slane %v647, %v651
      %v654 = vsub.f32 %v631, %v652
      %v655 = vsub.f32 %v632, %v652
      %v656 = vsub.f32 %v633, %v652
      %v657 = vsub.f32 %v634, %v652
      %v658 = vsub.f32 %v635, %v652
      %v659 = vsub.f32 %v636, %v652
      %v660 = vsub.f32 %v637, %v652
      %v661 = vsub.f32 %v638, %v652
      %v662 = vsub.f32 %v639, %v652
      %v663 = vsub.f32 %v640, %v652
      %v664 = vsub.f32 %v641, %v652
      %v665 = vsub.f32 %v642, %v652
      %v666 = vsub.f32 %v643, %v652
      %v667 = vsub.f32 %v644, %v652
      %v668 = vsub.f32 %v645, %v652
      %v669 = vsub.f32 %v646, %v652
      %670 = vst [vmem:[%s302] sm:$0xff] %v654
      %671 = vst [vmem:[%s302 + $0x8] sm:$0xff] %v655
      %672 = vst [vmem:[%s302 + $0x10] sm:$0xff] %v656
      %673 = vst [vmem:[%s302 + $0x18] sm:$0xff] %v657
      %674 = vst [vmem:[%s302 + $0x20] sm:$0xff] %v658
      %675 = vst [vmem:[%s302 + $0x28] sm:$0xff] %v659
      %676 = vst [vmem:[%s302 + $0x30] sm:$0xff] %v660
      %677 = vst [vmem:[%s302 + $0x38] sm:$0xff] %v661
      %678 = vst [vmem:[%s302 + $0x40] sm:$0xff] %v662
      %679 = vst [vmem:[%s302 + $0x48] sm:$0xff] %v663
      %680 = vst [vmem:[%s302 + $0x50] sm:$0xff] %v664
      %681 = vst [vmem:[%s302 + $0x58] sm:$0xff] %v665
      %682 = vst [vmem:[%s302 + $0x60] sm:$0xff] %v666
      %683 = vst [vmem:[%s302 + $0x68] sm:$0xff] %v667
      %684 = vst [vmem:[%s302 + $0x70] sm:$0xff] %v668
      %685 = vst [vmem:[%s302 + $0x78] sm:$0xff] %v669
      %s686 = smul.u32 16, %s20
      %p687 = scmp.lt.s32.totalorder %s19, 1
      %s688 = scalar_select %p687, %s19, 1
      %p689 = scmp.lt.s32.totalorder %s686, 15
      %s690 = scalar_select %p689, %s686, 15
      %s691 = smul.addr %s688, 16
      %s692 = sadd.s32 %s690, %s691
      %s693 = smul.addr %s692, 8
      %s694 = scalar_lea.vmem %s4, %s693
      // Predicated region
      $region37: #{foldnet_encoder_forward.5} parent=35 // pred_check
        %p695 = pneg %p155
      $region38: #{foldnet_encoder_forward.5} parent=35 // pred_check_branch
        %697 = sbr.rel (%p695) target = $region40
      $region39: #{foldnet_encoder_forward.5} parent=35 // pred_region
        %s698 = smul.u32 16, %s20
      $region40: #{foldnet_encoder_forward.5} parent=35 // pred_fallthru
        _
    $region36: #{foldnet_encoder_forward.5} parent=5 // pred_fallthru
      _
    %p699 = scmp.le.s32.totalorder 2, %s10
    // Predicated region
    $region41: #{foldnet_encoder_forward.5} parent=5 // pred_check
      %p700 = pneg %p699
    $region42: #{foldnet_encoder_forward.5} parent=5 // pred_check_branch
      %702 = sbr.rel (%p700) target = $region44
    $region43: #{foldnet_encoder_forward.5} parent=5 // pred_region
      %s703 = ssub.s32 %s10, 2
      // Predicated region
      $region45: #{foldnet_encoder_forward.5} parent=43 // pred_check
        %p704 = pneg %p161
      $region46: #{foldnet_encoder_forward.5} parent=43 // pred_check_branch
        %706 = sbr.rel (%p704) target = $region48
      $region47: #{foldnet_encoder_forward.5} parent=43 // pred_region
        %s707 = smul.u32 16, %s22
        %p708 = scmp.lt.s32.totalorder %s21, 1
        %s709 = scalar_select %p708, %s21, 1
        %p710 = scmp.lt.s32.totalorder %s707, 15
        %s711 = scalar_select %p710, %s707, 15
        %s712 = smul.addr %s709, 16
        %s713 = sadd.s32 %s711, %s712
        %s714 = smul.addr %s713, 8
        %s715 = scalar_lea.vmem %s4, %s714
      $region48: #{foldnet_encoder_forward.5} parent=43 // pred_fallthru
        _
    $region44: #{foldnet_encoder_forward.5} parent=5 // pred_fallthru
      _
  $region6: #{foldnet_encoder_forward.5} parent=0 // loop_footer
    %s14 = sadd.s32 1, %s10
  $region7: #{foldnet_encoder_forward.5} parent=0 // loop_footer_branch
    %9 = sbr.rel target = $region3
  $region8: #{foldnet_encoder_forward.5} parent=0 // loop_exit
    _

// kernel: foldnet_encoder_forward.6
$region0: #{foldnet_encoder_forward.6}
  #allocation0 [shape = 'u32[]', space=smem, size = 0x4, offset = 0x4, fixed_abs, tag = 'smem constant byte address 0x4 - core index']
  #allocation1 [shape = 'u32[144,128]{1,0:T(1,128)}', space=vmem, size = 0x12000, scoped, tag = 'internal scratch']
  %s0 = inlined_call_operand.vmem [shape: f32[256,12], index: 0, kind: input, shape index: {}]
  %s1 = inlined_call_operand.vmem [shape: bf16[12,64], index: 1, kind: input, shape index: {}]
  %s2 = inlined_call_operand.vmem [shape: f32[1,64], index: 2, kind: input, shape index: {}]
  %s3 = inlined_call_operand.vmem [shape: bf16[64,64], index: 3, kind: input, shape index: {}]
  %s4 = inlined_call_operand.vmem [shape: f32[1,64], index: 4, kind: input, shape index: {}]
  %s5 = inlined_call_operand.vmem [shape: bf16[64,64], index: 5, kind: input, shape index: {}]
  %s6 = inlined_call_operand.vmem [shape: f32[1,64], index: 6, kind: input, shape index: {}]
  %s7 = inlined_call_operand.vmem [shape: bf16[256,64], index: 7, kind: output, shape index: {}]
  %s8 = sld [smem:[#allocation0]]
  $region61: #{foldnet_encoder_forward.6} parent=0
    _
  %s10 = ssub.s32 1, %s8
  %s11 = scalar_select 0, %s10, %s8
  loop: start=0, step=1, limit=4
  $region2: #{foldnet_encoder_forward.6} parent=0 // loop_pre_header
    _
  $region3: #{foldnet_encoder_forward.6} parent=0 // loop_header
    %s13 = sphi 0, %s17
    %p14 = scmp.ge.s32.totalorder %s13, 4
    %s23 = sphi 0, %s25
    %s26 = sphi 0, %s23
    %s27 = sphi 0, %s26
    %s43 = sphi 0, %s27
    %s47 = sphi 0, %s47
    %s49 = sphi 0, %s47
    %s50 = sphi 0, %s49
    %s64 = sphi 0, %s50
    %s68 = sphi 0, %s68
    %s70 = sphi 0, %s68
    %s71 = sphi 0, %s70
    %s85 = sphi 0, %s71
    %s89 = sphi 0, %s89
    %s91 = sphi 0, %s89
    %s92 = sphi 0, %s91
    %s106 = sphi 0, %s92
    %s110 = sphi 0, %s110
    %s112 = sphi 0, %s110
    %s113 = sphi 0, %s112
    %s127 = sphi 0, %s113
    %s131 = sphi 0, %s131
    %s133 = sphi 0, %s131
    %s134 = sphi 0, %s133
    %s148 = sphi 0, %s134
    %s152 = sphi 0, %s152
    %s154 = sphi 0, %s152
    %s155 = sphi 0, %s154
    %s169 = sphi 0, %s155
    %s175 = sphi 0, %s177
    %s178 = sphi 0, %s175
    %s179 = sphi 0, %s178
    %s195 = sphi 0, %s179
  $region4: #{foldnet_encoder_forward.6} parent=0 // loop_header_branch
    %16 = sbr.rel (%p14) target = $region8
  $region5: #{foldnet_encoder_forward.6} parent=0 // loop_body
    %s18 = ssub.s32 %s13, 1
    %s19 = ssub.s32 %s13, 2
    %s20 = sadd.s32 %s13, 1
    %s21 = ssub.s32 %s13, %s20
    %p22 = scmp.eq.s32.totalorder %s21, 0
    %s24 = sadd.s32 %s23, 1
    %s25 = scalar_select %p22, %s23, %s24
    %p28 = pneg %p22
    %p29 = scmp.eq.s32.totalorder %s13, 1
    %p30 = por %p28, %p29
    %p31 = scmp.ne.s32.totalorder %s23, %s26
    %p32 = scmp.eq.s32.totalorder %s13, 0
    %p33 = por %p31, %p32
    %p34 = scmp.ne.s32.totalorder %s23, %s26
    %p35 = scmp.eq.s32.totalorder %s18, 1
    %p36 = por %p34, %p35
    %p37 = scmp.ne.s32.totalorder %s26, %s27
    %p38 = scmp.eq.s32.totalorder %s18, 0
    %p39 = por %p37, %p38
    %p40 = scmp.ne.s32.totalorder %s26, %s27
    %p41 = scmp.eq.s32.totalorder %s19, 1
    %p42 = por %p40, %p41
    %p44 = scmp.ne.s32.totalorder %s27, %s43
    %p45 = scmp.eq.s32.totalorder %s19, 0
    %p46 = por %p44, %p45
    %s48 = sadd.s32 %s47, 1
    %p51 = scmp.eq.s32.totalorder %s13, 1
    %p52 = scmp.ne.s32.totalorder %s47, %s49
    %p53 = scmp.eq.s32.totalorder %s13, 0
    %p54 = por %p52, %p53
    %p55 = scmp.ne.s32.totalorder %s47, %s49
    %p56 = scmp.eq.s32.totalorder %s18, 1
    %p57 = por %p55, %p56
    %p58 = scmp.ne.s32.totalorder %s49, %s50
    %p59 = scmp.eq.s32.totalorder %s18, 0
    %p60 = por %p58, %p59
    %p61 = scmp.ne.s32.totalorder %s49, %s50
    %p62 = scmp.eq.s32.totalorder %s19, 1
    %p63 = por %p61, %p62
    %p65 = scmp.ne.s32.totalorder %s50, %s64
    %p66 = scmp.eq.s32.totalorder %s19, 0
    %p67 = por %p65, %p66
    %s69 = sadd.s32 %s68, 1
    %p72 = scmp.eq.s32.totalorder %s13, 1
    %p73 = scmp.ne.s32.totalorder %s68, %s70
    %p74 = scmp.eq.s32.totalorder %s13, 0
    %p75 = por %p73, %p74
    %p76 = scmp.ne.s32.totalorder %s68, %s70
    %p77 = scmp.eq.s32.totalorder %s18, 1
    %p78 = por %p76, %p77
    %p79 = scmp.ne.s32.totalorder %s70, %s71
    %p80 = scmp.eq.s32.totalorder %s18, 0
    %p81 = por %p79, %p80
    %p82 = scmp.ne.s32.totalorder %s70, %s71
    %p83 = scmp.eq.s32.totalorder %s19, 1
    %p84 = por %p82, %p83
    %p86 = scmp.ne.s32.totalorder %s71, %s85
    %p87 = scmp.eq.s32.totalorder %s19, 0
    %p88 = por %p86, %p87
    %s90 = sadd.s32 %s89, 1
    %p93 = scmp.eq.s32.totalorder %s13, 1
    %p94 = scmp.ne.s32.totalorder %s89, %s91
    %p95 = scmp.eq.s32.totalorder %s13, 0
    %p96 = por %p94, %p95
    %p97 = scmp.ne.s32.totalorder %s89, %s91
    %p98 = scmp.eq.s32.totalorder %s18, 1
    %p99 = por %p97, %p98
    %p100 = scmp.ne.s32.totalorder %s91, %s92
    %p101 = scmp.eq.s32.totalorder %s18, 0
    %p102 = por %p100, %p101
    %p103 = scmp.ne.s32.totalorder %s91, %s92
    %p104 = scmp.eq.s32.totalorder %s19, 1
    %p105 = por %p103, %p104
    %p107 = scmp.ne.s32.totalorder %s92, %s106
    %p108 = scmp.eq.s32.totalorder %s19, 0
    %p109 = por %p107, %p108
    %s111 = sadd.s32 %s110, 1
    %p114 = scmp.eq.s32.totalorder %s13, 1
    %p115 = scmp.ne.s32.totalorder %s110, %s112
    %p116 = scmp.eq.s32.totalorder %s13, 0
    %p117 = por %p115, %p116
    %p118 = scmp.ne.s32.totalorder %s110, %s112
    %p119 = scmp.eq.s32.totalorder %s18, 1
    %p120 = por %p118, %p119
    %p121 = scmp.ne.s32.totalorder %s112, %s113
    %p122 = scmp.eq.s32.totalorder %s18, 0
    %p123 = por %p121, %p122
    %p124 = scmp.ne.s32.totalorder %s112, %s113
    %p125 = scmp.eq.s32.totalorder %s19, 1
    %p126 = por %p124, %p125
    %p128 = scmp.ne.s32.totalorder %s113, %s127
    %p129 = scmp.eq.s32.totalorder %s19, 0
    %p130 = por %p128, %p129
    %s132 = sadd.s32 %s131, 1
    %p135 = scmp.eq.s32.totalorder %s13, 1
    %p136 = scmp.ne.s32.totalorder %s131, %s133
    %p137 = scmp.eq.s32.totalorder %s13, 0
    %p138 = por %p136, %p137
    %p139 = scmp.ne.s32.totalorder %s131, %s133
    %p140 = scmp.eq.s32.totalorder %s18, 1
    %p141 = por %p139, %p140
    %p142 = scmp.ne.s32.totalorder %s133, %s134
    %p143 = scmp.eq.s32.totalorder %s18, 0
    %p144 = por %p142, %p143
    %p145 = scmp.ne.s32.totalorder %s133, %s134
    %p146 = scmp.eq.s32.totalorder %s19, 1
    %p147 = por %p145, %p146
    %p149 = scmp.ne.s32.totalorder %s134, %s148
    %p150 = scmp.eq.s32.totalorder %s19, 0
    %p151 = por %p149, %p150
    %s153 = sadd.s32 %s152, 1
    %p156 = scmp.eq.s32.totalorder %s13, 1
    %p157 = scmp.ne.s32.totalorder %s152, %s154
    %p158 = scmp.eq.s32.totalorder %s13, 0
    %p159 = por %p157, %p158
    %p160 = scmp.ne.s32.totalorder %s152, %s154
    %p161 = scmp.eq.s32.totalorder %s18, 1
    %p162 = por %p160, %p161
    %p163 = scmp.ne.s32.totalorder %s154, %s155
    %p164 = scmp.eq.s32.totalorder %s18, 0
    %p165 = por %p163, %p164
    %p166 = scmp.ne.s32.totalorder %s154, %s155
    %p167 = scmp.eq.s32.totalorder %s19, 1
    %p168 = por %p166, %p167
    %p170 = scmp.ne.s32.totalorder %s155, %s169
    %p171 = scmp.eq.s32.totalorder %s19, 0
    %p172 = por %p170, %p171
    %s173 = ssub.s32 %s13, %s20
    %p174 = scmp.eq.s32.totalorder %s173, 0
    %s176 = sadd.s32 %s175, 1
    %s177 = scalar_select %p174, %s175, %s176
    %p180 = pneg %p174
    %p181 = scmp.eq.s32.totalorder %s13, 1
    %p182 = por %p180, %p181
    %p183 = scmp.ne.s32.totalorder %s175, %s178
    %p184 = scmp.eq.s32.totalorder %s13, 0
    %p185 = por %p183, %p184
    %p186 = scmp.ne.s32.totalorder %s175, %s178
    %p187 = scmp.eq.s32.totalorder %s18, 1
    %p188 = por %p186, %p187
    %p189 = scmp.ne.s32.totalorder %s178, %s179
    %p190 = scmp.eq.s32.totalorder %s18, 0
    %p191 = por %p189, %p190
    %p192 = scmp.ne.s32.totalorder %s178, %s179
    %p193 = scmp.eq.s32.totalorder %s19, 1
    %p194 = por %p192, %p193
    %p196 = scmp.ne.s32.totalorder %s179, %s195
    %p197 = scmp.eq.s32.totalorder %s19, 0
    %p198 = por %p196, %p197
    %p199 = scmp.le.s32.totalorder 1, %s13
    %p200 = scmp.lt.s32.totalorder %s13, 3
    %p201 = pnand %p199, %p200
    %p202 = pneg %p201
    // Predicated region
    $region9: #{foldnet_encoder_forward.6} parent=5 // pred_check
      _
    $region10: #{foldnet_encoder_forward.6} parent=5 // pred_check_branch
      %204 = sbr.rel (%p201) target = $region12
    $region11: #{foldnet_encoder_forward.6} parent=5 // pred_region
      %s205 = ssub.s32 %s13, 1
      // Predicated region
      $region13: #{foldnet_encoder_forward.6} parent=11 // pred_check
        %p206 = pneg %p60
      $region14: #{foldnet_encoder_forward.6} parent=11 // pred_check_branch
        %208 = sbr.rel (%p206) target = $region16
      $region15: #{foldnet_encoder_forward.6} parent=11 // pred_region
        _
      $region16: #{foldnet_encoder_forward.6} parent=11 // pred_fallthru
        _
      // Predicated region
      $region17: #{foldnet_encoder_forward.6} parent=11 // pred_check
        %p209 = pneg %p81
      $region18: #{foldnet_encoder_forward.6} parent=11 // pred_check_branch
        %211 = sbr.rel (%p209) target = $region20
      $region19: #{foldnet_encoder_forward.6} parent=11 // pred_region
        _
      $region20: #{foldnet_encoder_forward.6} parent=11 // pred_fallthru
        _
      // Predicated region
      $region21: #{foldnet_encoder_forward.6} parent=11 // pred_check
        %p212 = pneg %p102
      $region22: #{foldnet_encoder_forward.6} parent=11 // pred_check_branch
        %214 = sbr.rel (%p212) target = $region24
      $region23: #{foldnet_encoder_forward.6} parent=11 // pred_region
        _
      $region24: #{foldnet_encoder_forward.6} parent=11 // pred_fallthru
        _
      // Predicated region
      $region25: #{foldnet_encoder_forward.6} parent=11 // pred_check
        %p215 = pneg %p123
      $region26: #{foldnet_encoder_forward.6} parent=11 // pred_check_branch
        %217 = sbr.rel (%p215) target = $region28
      $region27: #{foldnet_encoder_forward.6} parent=11 // pred_region
        _
      $region28: #{foldnet_encoder_forward.6} parent=11 // pred_fallthru
        _
      // Predicated region
      $region29: #{foldnet_encoder_forward.6} parent=11 // pred_check
        %p218 = pneg %p144
      $region30: #{foldnet_encoder_forward.6} parent=11 // pred_check_branch
        %220 = sbr.rel (%p218) target = $region32
      $region31: #{foldnet_encoder_forward.6} parent=11 // pred_region
        _
      $region32: #{foldnet_encoder_forward.6} parent=11 // pred_fallthru
        _
      // Predicated region
      $region33: #{foldnet_encoder_forward.6} parent=11 // pred_check
        %p221 = pneg %p165
      $region34: #{foldnet_encoder_forward.6} parent=11 // pred_check_branch
        %223 = sbr.rel (%p221) target = $region36
      $region35: #{foldnet_encoder_forward.6} parent=11 // pred_region
        _
      $region36: #{foldnet_encoder_forward.6} parent=11 // pred_fallthru
        _
    $region12: #{foldnet_encoder_forward.6} parent=5 // pred_fallthru
      _
    %p224 = scmp.lt.s32.totalorder %s13, 2
    // Predicated region
    $region37: #{foldnet_encoder_forward.6} parent=5 // pred_check
      %p225 = pneg %p224
    $region38: #{foldnet_encoder_forward.6} parent=5 // pred_check_branch
      %227 = sbr.rel (%p225) target = $region40
    $region39: #{foldnet_encoder_forward.6} parent=5 // pred_region
      // Predicated region
      $region41: #{foldnet_encoder_forward.6} parent=39 // pred_check
        %p228 = pneg %p33
      $region42: #{foldnet_encoder_forward.6} parent=39 // pred_check_branch
        %230 = sbr.rel (%p228) target = $region44
      $region43: #{foldnet_encoder_forward.6} parent=39 // pred_region
        %s231 = smul.u32 16, %s13
        %p232 = scmp.lt.s32.totalorder %s231, 31
        %s233 = scalar_select %p232, %s231, 31
        %s234 = smul.addr %s233, 8
        %s235 = scalar_lea.vmem %s0, %s234
        %s236 = smul.u32 16, %s13
      $region44: #{foldnet_encoder_forward.6} parent=39 // pred_fallthru
        _
    $region40: #{foldnet_encoder_forward.6} parent=5 // pred_fallthru
      _
    %p237 = scmp.le.s32.totalorder 1, %s13
    %p238 = scmp.lt.s32.totalorder %s13, 3
    %p239 = pnand %p237, %p238
    %p240 = pneg %p239
    // Predicated region
    $region45: #{foldnet_encoder_forward.6} parent=5 // pred_check
      _
    $region46: #{foldnet_encoder_forward.6} parent=5 // pred_check_branch
      %242 = sbr.rel (%p239) target = $region48
    $region47: #{foldnet_encoder_forward.6} parent=5 // pred_region
      %s243 = ssub.s32 %s13, 1
      %s244 = smul.u32 16, %s18
      %p245 = scmp.lt.s32.totalorder %s244, 31
      %s246 = scalar_select %p245, %s244, 31
      %s247 = smul.addr %s246, 8
      %s248 = scalar_lea.vmem %s0, %s247
      %p249 = pneg %p39
      %p250 = pneg %p36
      %p251 = pneg %p60
      %p252 = pneg %p57
      %p253 = pneg %p81
      %p254 = pneg %p78
      %p255 = pneg %p102
      %p256 = pneg %p99
      %p257 = pneg %p123
      %p258 = pneg %p120
      %p259 = pneg %p144
      %p260 = pneg %p141
      %p261 = pneg %p165
      %p262 = pneg %p162
      %p263 = pneg %p191
      %p264 = pneg %p188
      %s265 = smul.u32 16, %s18
      %p266 = scmp.lt.s32.totalorder %s265, 31
      %s267 = scalar_select %p266, %s265, 31
      %s268 = smul.addr %s267, 4
      %s269 = scalar_lea.vmem %s7, %s268
      %s270 = smul.u32 16, %s18
      %p271 = scmp.lt.s32.totalorder %s270, 31
      %s272 = scalar_select %p271, %s270, 31
      %s273 = smul.addr %s272, 8
      %s274 = scalar_lea.vmem %s0, %s273
      %s275 = smul.u32 16, %s18
      %s276 = smul.u32 16, %s18
      %p277 = scmp.lt.s32.totalorder %s276, 31
      %s278 = scalar_select %p277, %s276, 31
      %s279 = smul.addr %s278, 4
      %s280 = scalar_lea.vmem %s7, %s279
      %s281 = smul.u32 16, %s18
      %v283 = vld [vmem:[%s274] sm:$0xff]
      %v284 = vld [vmem:[%s274 + $0x8] sm:$0xff]
      %v285 = vld [vmem:[%s274 + $0x10] sm:$0xff]
      %v286 = vld [vmem:[%s274 + $0x18] sm:$0xff]
      %v287 = vld [vmem:[%s274 + $0x20] sm:$0xff]
      %v288 = vld [vmem:[%s274 + $0x28] sm:$0xff]
      %v289 = vld [vmem:[%s274 + $0x30] sm:$0xff]
      %v290 = vld [vmem:[%s274 + $0x38] sm:$0xff]
      %v291 = vld [vmem:[%s274 + $0x40] sm:$0xff]
      %v292 = vld [vmem:[%s274 + $0x48] sm:$0xff]
      %v293 = vld [vmem:[%s274 + $0x50] sm:$0xff]
      %v294 = vld [vmem:[%s274 + $0x58] sm:$0xff]
      %v295 = vld [vmem:[%s274 + $0x60] sm:$0xff]
      %v296 = vld [vmem:[%s274 + $0x68] sm:$0xff]
      %v297 = vld [vmem:[%s274 + $0x70] sm:$0xff]
      %v298 = vld [vmem:[%s274 + $0x78] sm:$0xff]
      %v299 = vld [vmem:[%s1] sm:$0xf]
      %v300 = vld [vmem:[%s1 + $0x4] sm:$0x3]
      %v301 = vld [vmem:[%s2] sm:$0x1]
      %v302 = vpack.c.bf16 %v284, %v283
      %v303 = vpack.c.bf16 %v286, %v285
      %v304 = vpack.c.bf16 %v288, %v287
      %v305 = vpack.c.bf16 %v290, %v289
      %v306 = vpack.c.bf16 %v292, %v291
      %v307 = vpack.c.bf16 %v294, %v293
      %v308 = vpack.c.bf16 %v296, %v295
      %v309 = vpack.c.bf16 %v298, %v297
      %v311 = vlaneseq
      %v312 = vshrl.u32 %v311, 7
      %v313 = vsub.s32 0, %v312
      %v314 = vrot.slane %v301, %v313
      %v318 = vunpack.c.l.b16 %v299
      %v319 = vunpack.c.l.b16 %v300
      %v320 = vpack.c.b16 %v319, %v318
      %vm321 = vcmask 97280
      %v323 = vsel %vm321, %v302, 0
      %v326 = vsel %vm321, %v303, 0
      %v329 = vsel %vm321, %v304, 0
      %v332 = vsel %vm321, %v305, 0
      %v335 = vsel %vm321, %v306, 0
      %v338 = vsel %vm321, %v307, 0
      %v341 = vsel %vm321, %v308, 0
      %v344 = vsel %vm321, %v309, 0
      %vm346 = vcmask 1045504
      %v348 = vsel %vm346, %v320, 0
      %350 = vmatprep.subr.bf16.mxu0 0
      %351 = vmatpush1.bf16.msra.mxu0 %v348
      %352 = vmatprep.subr.bf16.mxu0 0
      %353 = vmatpush1.bf16.msra.mxu0 0
      %354 = vmatprep.subr.bf16.mxu0 0
      %355 = vmatpush1.bf16.msra.mxu0 0
      %356 = vmatprep.subr.bf16.mxu0 0
      %357 = vmatpush1.bf16.msra.mxu0 0
      %358 = vmatprep.subr.bf16.mxu0 0
      %359 = vmatpush1.bf16.msra.mxu0 0
      %360 = vmatprep.subr.bf16.mxu0 0
      %361 = vmatpush1.bf16.msra.mxu0 0
      %362 = vmatprep.subr.bf16.mxu0 0
      %363 = vmatpush1.bf16.msra.mxu0 0
      %364 = vmatprep.subr.bf16.mxu0 0
      %365 = vmatpush1.bf16.msra.mxu0 0
      %366 = vmatprep.subr.bf16.mxu0 0
      %367 = vmatpush1.bf16.msra.mxu0 0
      %368 = vmatprep.subr.bf16.mxu0 0
      %369 = vmatpush1.bf16.msra.mxu0 0
      %370 = vmatprep.subr.bf16.mxu0 0
      %371 = vmatpush1.bf16.msra.mxu0 0
      %372 = vmatprep.subr.bf16.mxu0 0
      %373 = vmatpush1.bf16.msra.mxu0 0
      %374 = vmatprep.subr.bf16.mxu0 0
      %375 = vmatpush1.bf16.msra.mxu0 0
      %376 = vmatprep.subr.bf16.mxu0 0
      %377 = vmatpush1.bf16.msra.mxu0 0
      %378 = vmatprep.subr.bf16.mxu0 0
      %379 = vmatpush1.bf16.msra.mxu0 0
      %380 = vmatprep.subr.bf16.mxu0 0
      %381 = vmatpush1.bf16.msra.mxu0 0
      %382 = vmatprep.mubr.bf16.mxu0 0
      %383 = vmatmul.mubr.bf16.gmra.mrb[0].mxu0 %v323
      %v384 = vpop.f32.mrb[0].mxu0
      %v385 = vadd.f32 %v314, %v384
      %v386 = vpop.f32.mrb[0].mxu0
      %v387 = vpop.f32.mrb[0].mxu0
      %v388 = vadd.f32 %v314, %v387
      %v389 = vpop.f32.mrb[0].mxu0
      %390 = vmatprep.mubr.bf16.mxu0 0
      %391 = vmatmul.mubr.bf16.gmra.mrb[0].mxu0 %v326
      %v392 = vpop.f32.mrb[0].mxu0
      %v393 = vadd.f32 %v314, %v392
      %v394 = vpop.f32.mrb[0].mxu0
      %v395 = vpop.f32.mrb[0].mxu0
      %v396 = vadd.f32 %v314, %v395
      %v397 = vpop.f32.mrb[0].mxu0
      %398 = vmatprep.mubr.bf16.mxu0 0
      %399 = vmatmul.mubr.bf16.gmra.mrb[0].mxu0 %v329
      %v400 = vpop.f32.mrb[0].mxu0
      %v401 = vadd.f32 %v314, %v400
      %v402 = vpop.f32.mrb[0].mxu0
      %v403 = vpop.f32.mrb[0].mxu0
      %v404 = vadd.f32 %v314, %v403
      %v405 = vpop.f32.mrb[0].mxu0
      %406 = vmatprep.mubr.bf16.mxu0 0
      %407 = vmatmul.mubr.bf16.gmra.mrb[0].mxu0 %v332
      %v408 = vpop.f32.mrb[0].mxu0
      %v409 = vadd.f32 %v314, %v408
      %v410 = vpop.f32.mrb[0].mxu0
      %v411 = vpop.f32.mrb[0].mxu0
      %v412 = vadd.f32 %v314, %v411
      %v413 = vpop.f32.mrb[0].mxu0
      %414 = vmatprep.mubr.bf16.mxu0 0
      %415 = vmatmul.mubr.bf16.gmra.mrb[0].mxu0 %v335
      %v416 = vpop.f32.mrb[0].mxu0
      %v417 = vadd.f32 %v314, %v416
      %v418 = vpop.f32.mrb[0].mxu0
      %v419 = vpop.f32.mrb[0].mxu0
      %v420 = vadd.f32 %v314, %v419
      %v421 = vpop.f32.mrb[0].mxu0
      %422 = vmatprep.mubr.bf16.mxu0 0
      %423 = vmatmul.mubr.bf16.gmra.mrb[0].mxu0 %v338
      %v424 = vpop.f32.mrb[0].mxu0
      %v425 = vadd.f32 %v314, %v424
      %v426 = vpop.f32.mrb[0].mxu0
      %v427 = vpop.f32.mrb[0].mxu0
      %v428 = vadd.f32 %v314, %v427
      %v429 = vpop.f32.mrb[0].mxu0
      %430 = vmatprep.mubr.bf16.mxu0 0
      %431 = vmatmul.mubr.bf16.gmra.mrb[0].mxu0 %v341
      %v432 = vpop.f32.mrb[0].mxu0
      %v433 = vadd.f32 %v314, %v432
      %v434 = vpop.f32.mrb[0].mxu0
      %v435 = vpop.f32.mrb[0].mxu0
      %v436 = vadd.f32 %v314, %v435
      %v437 = vpop.f32.mrb[0].mxu0
      %438 = vmatprep.mubr.bf16.mxu0 0
      %439 = vmatmul.mubr.bf16.gmra.mrb[0].mxu0 %v344
      %v440 = vpop.f32.mrb[0].mxu0
      %v441 = vadd.f32 %v314, %v440
      %v442 = vpop.f32.mrb[0].mxu0
      %v443 = vpop.f32.mrb[0].mxu0
      %v444 = vadd.f32 %v314, %v443
      %v445 = vpop.f32.mrb[0].mxu0
      %446 = vdwg.mxu0
      %v447 = vmax.f32 %v385, 0.0
      %v448 = vmax.f32 %v388, 0.0
      %v449 = vmax.f32 %v393, 0.0
      %v450 = vmax.f32 %v396, 0.0
      %v451 = vmax.f32 %v401, 0.0
      %v452 = vmax.f32 %v404, 0.0
      %v453 = vmax.f32 %v409, 0.0
      %v454 = vmax.f32 %v412, 0.0
      %v455 = vmax.f32 %v417, 0.0
      %v456 = vmax.f32 %v420, 0.0
      %v457 = vmax.f32 %v425, 0.0
      %v458 = vmax.f32 %v428, 0.0
      %v459 = vmax.f32 %v433, 0.0
      %v460 = vmax.f32 %v436, 0.0
      %v461 = vmax.f32 %v441, 0.0
      %v462 = vmax.f32 %v444, 0.0
      %v463 = vld [vmem:[%s3] sm:$0xf]
      %v464 = vld [vmem:[%s3 + $0x4] sm:$0xf]
      %v465 = vld [vmem:[%s3 + $0x8] sm:$0xf]
      %v466 = vld [vmem:[%s3 + $0xc] sm:$0xf]
      %v467 = vld [vmem:[%s3 + $0x10] sm:$0xf]
      %v468 = vld [vmem:[%s3 + $0x14] sm:$0xf]
      %v469 = vld [vmem:[%s3 + $0x18] sm:$0xf]
      %v470 = vld [vmem:[%s3 + $0x1c] sm:$0xf]
      %v471 = vld [vmem:[%s4] sm:$0x1]
      %v472 = vpack.c.bf16 %v448, %v447
      %v473 = vpack.c.bf16 %v450, %v449
      %v474 = vpack.c.bf16 %v452, %v451
      %v475 = vpack.c.bf16 %v454, %v453
      %v476 = vpack.c.bf16 %v456, %v455
      %v477 = vpack.c.bf16 %v458, %v457
      %v478 = vpack.c.bf16 %v460, %v459
      %v479 = vpack.c.bf16 %v462, %v461
      %v481 = vlaneseq
      %v482 = vshrl.u32 %v481, 7
      %v483 = vsub.s32 0, %v482
      %v484 = vrot.slane %v471, %v483
      %v494 = vunpack.c.l.b16 %v463
      %v495 = vunpack.c.l.b16 %v464
      %v496 = vunpack.c.l.b16 %v465
      %v497 = vunpack.c.l.b16 %v466
      %v498 = vunpack.c.l.b16 %v467
      %v499 = vunpack.c.l.b16 %v468
      %v500 = vunpack.c.l.b16 %v469
      %v501 = vunpack.c.l.b16 %v470
      %v502 = vpack.c.b16 %v495, %v494
      %v503 = vpack.c.b16 %v497, %v496
      %v504 = vpack.c.b16 %v499, %v498
      %v505 = vpack.c.b16 %v501, %v500
      %vm510 = vcmask 523264
      %v512 = vsel %vm510, %v472, 0
      %v515 = vsel %vm510, %v473, 0
      %v518 = vsel %vm510, %v474, 0
      %v521 = vsel %vm510, %v475, 0
      %v524 = vsel %vm510, %v476, 0
      %v527 = vsel %vm510, %v477, 0
      %v530 = vsel %vm510, %v478, 0
      %v533 = vsel %vm510, %v479, 0
      %535 = vmatprep.subr.bf16.mxu0 0
      %536 = vmatpush1.bf16.msra.mxu0 %v502
      %537 = vmatprep.subr.bf16.mxu0 0
      %538 = vmatpush1.bf16.msra.mxu0 %v503
      %539 = vmatprep.subr.bf16.mxu0 0
      %540 = vmatpush1.bf16.msra.mxu0 %v504
      %541 = vmatprep.subr.bf16.mxu0 0
      %542 = vmatpush1.bf16.msra.mxu0 %v505
      %543 = vmatprep.subr.bf16.mxu0 0
      %544 = vmatpush1.bf16.msra.mxu0 0
      %545 = vmatprep.subr.bf16.mxu0 0
      %546 = vmatpush1.bf16.msra.mxu0 0
      %547 = vmatprep.subr.bf16.mxu0 0
      %548 = vmatpush1.bf16.msra.mxu0 0
      %549 = vmatprep.subr.bf16.mxu0 0
      %550 = vmatpush1.bf16.msra.mxu0 0
      %551 = vmatprep.subr.bf16.mxu0 0
      %552 = vmatpush1.bf16.msra.mxu0 0
      %553 = vmatprep.subr.bf16.mxu0 0
      %554 = vmatpush1.bf16.msra.mxu0 0
      %555 = vmatprep.subr.bf16.mxu0 0
      %556 = vmatpush1.bf16.msra.mxu0 0
      %557 = vmatprep.subr.bf16.mxu0 0
      %558 = vmatpush1.bf16.msra.mxu0 0
      %559 = vmatprep.subr.bf16.mxu0 0
      %560 = vmatpush1.bf16.msra.mxu0 0
      %561 = vmatprep.subr.bf16.mxu0 0
      %562 = vmatpush1.bf16.msra.mxu0 0
      %563 = vmatprep.subr.bf16.mxu0 0
      %564 = vmatpush1.bf16.msra.mxu0 0
      %565 = vmatprep.subr.bf16.mxu0 0
      %566 = vmatpush1.bf16.msra.mxu0 0
      %567 = vmatprep.mubr.bf16.mxu0 0
      %568 = vmatmul.mubr.bf16.gmra.mrb[0].mxu0 %v512
      %v569 = vpop.f32.mrb[0].mxu0
      %v570 = vadd.f32 %v484, %v569
      %v571 = vpop.f32.mrb[0].mxu0
      %v572 = vpop.f32.mrb[0].mxu0
      %v573 = vadd.f32 %v484, %v572
      %v574 = vpop.f32.mrb[0].mxu0
      %575 = vmatprep.mubr.bf16.mxu0 0
      %576 = vmatmul.mubr.bf16.gmra.mrb[0].mxu0 %v515
      %v577 = vpop.f32.mrb[0].mxu0
      %v578 = vadd.f32 %v484, %v577
      %v579 = vpop.f32.mrb[0].mxu0
      %v580 = vpop.f32.mrb[0].mxu0
      %v581 = vadd.f32 %v484, %v580
      %v582 = vpop.f32.mrb[0].mxu0
      %583 = vmatprep.mubr.bf16.mxu0 0
      %584 = vmatmul.mubr.bf16.gmra.mrb[0].mxu0 %v518
      %v585 = vpop.f32.mrb[0].mxu0
      %v586 = vadd.f32 %v484, %v585
      %v587 = vpop.f32.mrb[0].mxu0
      %v588 = vpop.f32.mrb[0].mxu0
      %v589 = vadd.f32 %v484, %v588
      %v590 = vpop.f32.mrb[0].mxu0
      %591 = vmatprep.mubr.bf16.mxu0 0
      %592 = vmatmul.mubr.bf16.gmra.mrb[0].mxu0 %v521
      %v593 = vpop.f32.mrb[0].mxu0
      %v594 = vadd.f32 %v484, %v593
      %v595 = vpop.f32.mrb[0].mxu0
      %v596 = vpop.f32.mrb[0].mxu0
      %v597 = vadd.f32 %v484, %v596
      %v598 = vpop.f32.mrb[0].mxu0
      %599 = vmatprep.mubr.bf16.mxu0 0
      %600 = vmatmul.mubr.bf16.gmra.mrb[0].mxu0 %v524
      %v601 = vpop.f32.mrb[0].mxu0
      %v602 = vadd.f32 %v484, %v601
      %v603 = vpop.f32.mrb[0].mxu0
      %v604 = vpop.f32.mrb[0].mxu0
      %v605 = vadd.f32 %v484, %v604
      %v606 = vpop.f32.mrb[0].mxu0
      %607 = vmatprep.mubr.bf16.mxu0 0
      %608 = vmatmul.mubr.bf16.gmra.mrb[0].mxu0 %v527
      %v609 = vpop.f32.mrb[0].mxu0
      %v610 = vadd.f32 %v484, %v609
      %v611 = vpop.f32.mrb[0].mxu0
      %v612 = vpop.f32.mrb[0].mxu0
      %v613 = vadd.f32 %v484, %v612
      %v614 = vpop.f32.mrb[0].mxu0
      %615 = vmatprep.mubr.bf16.mxu0 0
      %616 = vmatmul.mubr.bf16.gmra.mrb[0].mxu0 %v530
      %v617 = vpop.f32.mrb[0].mxu0
      %v618 = vadd.f32 %v484, %v617
      %v619 = vpop.f32.mrb[0].mxu0
      %v620 = vpop.f32.mrb[0].mxu0
      %v621 = vadd.f32 %v484, %v620
      %v622 = vpop.f32.mrb[0].mxu0
      %623 = vmatprep.mubr.bf16.mxu0 0
      %624 = vmatmul.mubr.bf16.gmra.mrb[0].mxu0 %v533
      %v625 = vpop.f32.mrb[0].mxu0
      %v626 = vadd.f32 %v484, %v625
      %v627 = vpop.f32.mrb[0].mxu0
      %v628 = vpop.f32.mrb[0].mxu0
      %v629 = vadd.f32 %v484, %v628
      %v630 = vpop.f32.mrb[0].mxu0
      %631 = vdwg.mxu0
      %v632 = vmax.f32 %v570, 0.0
      %v633 = vmax.f32 %v573, 0.0
      %v634 = vmax.f32 %v578, 0.0
      %v635 = vmax.f32 %v581, 0.0
      %v636 = vmax.f32 %v586, 0.0
      %v637 = vmax.f32 %v589, 0.0
      %v638 = vmax.f32 %v594, 0.0
      %v639 = vmax.f32 %v597, 0.0
      %v640 = vmax.f32 %v602, 0.0
      %v641 = vmax.f32 %v605, 0.0
      %v642 = vmax.f32 %v610, 0.0
      %v643 = vmax.f32 %v613, 0.0
      %v644 = vmax.f32 %v618, 0.0
      %v645 = vmax.f32 %v621, 0.0
      %v646 = vmax.f32 %v626, 0.0
      %v647 = vmax.f32 %v629, 0.0
      %v648 = vld [vmem:[%s5] sm:$0xf]
      %v649 = vld [vmem:[%s5 + $0x4] sm:$0xf]
      %v650 = vld [vmem:[%s5 + $0x8] sm:$0xf]
      %v651 = vld [vmem:[%s5 + $0xc] sm:$0xf]
      %v652 = vld [vmem:[%s5 + $0x10] sm:$0xf]
      %v653 = vld [vmem:[%s5 + $0x14] sm:$0xf]
      %v654 = vld [vmem:[%s5 + $0x18] sm:$0xf]
      %v655 = vld [vmem:[%s5 + $0x1c] sm:$0xf]
      %v656 = vld [vmem:[%s6] sm:$0x1]
      %v657 = vpack.c.bf16 %v633, %v632
      %v658 = vpack.c.bf16 %v635, %v634
      %v659 = vpack.c.bf16 %v637, %v636
      %v660 = vpack.c.bf16 %v639, %v638
      %v661 = vpack.c.bf16 %v641, %v640
      %v662 = vpack.c.bf16 %v643, %v642
      %v663 = vpack.c.bf16 %v645, %v644
      %v664 = vpack.c.bf16 %v647, %v646
      %v666 = vlaneseq
      %v667 = vshrl.u32 %v666, 7
      %v668 = vsub.s32 0, %v667
      %v669 = vrot.slane %v656, %v668
      %v679 = vunpack.c.l.b16 %v648
      %v680 = vunpack.c.l.b16 %v649
      %v681 = vunpack.c.l.b16 %v650
      %v682 = vunpack.c.l.b16 %v651
      %v683 = vunpack.c.l.b16 %v652
      %v684 = vunpack.c.l.b16 %v653
      %v685 = vunpack.c.l.b16 %v654
      %v686 = vunpack.c.l.b16 %v655
      %v687 = vpack.c.b16 %v680, %v679
      %v688 = vpack.c.b16 %v682, %v681
      %v689 = vpack.c.b16 %v684, %v683
      %v690 = vpack.c.b16 %v686, %v685
      %v696 = vsel %vm510, %v657, 0
      %v699 = vsel %vm510, %v658, 0
      %v702 = vsel %vm510, %v659, 0
      %v705 = vsel %vm510, %v660, 0
      %v708 = vsel %vm510, %v661, 0
      %v711 = vsel %vm510, %v662, 0
      %v714 = vsel %vm510, %v663, 0
      %v717 = vsel %vm510, %v664, 0
      %719 = vmatprep.subr.bf16.mxu0 0
      %720 = vmatpush1.bf16.msra.mxu0 %v687
      %721 = vmatprep.subr.bf16.mxu0 0
      %722 = vmatpush1.bf16.msra.mxu0 %v688
      %723 = vmatprep.subr.bf16.mxu0 0
      %724 = vmatpush1.bf16.msra.mxu0 %v689
      %725 = vmatprep.subr.bf16.mxu0 0
      %726 = vmatpush1.bf16.msra.mxu0 %v690
      %727 = vmatprep.subr.bf16.mxu0 0
      %728 = vmatpush1.bf16.msra.mxu0 0
      %729 = vmatprep.subr.bf16.mxu0 0
      %730 = vmatpush1.bf16.msra.mxu0 0
      %731 = vmatprep.subr.bf16.mxu0 0
      %732 = vmatpush1.bf16.msra.mxu0 0
      %733 = vmatprep.subr.bf16.mxu0 0
      %734 = vmatpush1.bf16.msra.mxu0 0
      %735 = vmatprep.subr.bf16.mxu0 0
      %736 = vmatpush1.bf16.msra.mxu0 0
      %737 = vmatprep.subr.bf16.mxu0 0
      %738 = vmatpush1.bf16.msra.mxu0 0
      %739 = vmatprep.subr.bf16.mxu0 0
      %740 = vmatpush1.bf16.msra.mxu0 0
      %741 = vmatprep.subr.bf16.mxu0 0
      %742 = vmatpush1.bf16.msra.mxu0 0
      %743 = vmatprep.subr.bf16.mxu0 0
      %744 = vmatpush1.bf16.msra.mxu0 0
      %745 = vmatprep.subr.bf16.mxu0 0
      %746 = vmatpush1.bf16.msra.mxu0 0
      %747 = vmatprep.subr.bf16.mxu0 0
      %748 = vmatpush1.bf16.msra.mxu0 0
      %749 = vmatprep.subr.bf16.mxu0 0
      %750 = vmatpush1.bf16.msra.mxu0 0
      %751 = vmatprep.mubr.bf16.mxu0 0
      %752 = vmatmul.mubr.bf16.gmra.mrb[0].mxu0 %v696
      %v753 = vpop.f32.mrb[0].mxu0
      %v754 = vadd.f32 %v669, %v753
      %v755 = vpop.f32.mrb[0].mxu0
      %v756 = vpop.f32.mrb[0].mxu0
      %v757 = vadd.f32 %v669, %v756
      %v758 = vpop.f32.mrb[0].mxu0
      %759 = vmatprep.mubr.bf16.mxu0 0
      %760 = vmatmul.mubr.bf16.gmra.mrb[0].mxu0 %v699
      %v761 = vpop.f32.mrb[0].mxu0
      %v762 = vadd.f32 %v669, %v761
      %v763 = vpop.f32.mrb[0].mxu0
      %v764 = vpop.f32.mrb[0].mxu0
      %v765 = vadd.f32 %v669, %v764
      %v766 = vpop.f32.mrb[0].mxu0
      %767 = vmatprep.mubr.bf16.mxu0 0
      %768 = vmatmul.mubr.bf16.gmra.mrb[0].mxu0 %v702
      %v769 = vpop.f32.mrb[0].mxu0
      %v770 = vadd.f32 %v669, %v769
      %v771 = vpop.f32.mrb[0].mxu0
      %v772 = vpop.f32.mrb[0].mxu0
      %v773 = vadd.f32 %v669, %v772
      %v774 = vpop.f32.mrb[0].mxu0
      %775 = vmatprep.mubr.bf16.mxu0 0
      %776 = vmatmul.mubr.bf16.gmra.mrb[0].mxu0 %v705
      %v777 = vpop.f32.mrb[0].mxu0
      %v778 = vadd.f32 %v669, %v777
      %v779 = vpop.f32.mrb[0].mxu0
      %v780 = vpop.f32.mrb[0].mxu0
      %v781 = vadd.f32 %v669, %v780
      %v782 = vpop.f32.mrb[0].mxu0
      %783 = vmatprep.mubr.bf16.mxu0 0
      %784 = vmatmul.mubr.bf16.gmra.mrb[0].mxu0 %v708
      %v785 = vpop.f32.mrb[0].mxu0
      %v786 = vadd.f32 %v669, %v785
      %v787 = vpop.f32.mrb[0].mxu0
      %v788 = vpop.f32.mrb[0].mxu0
      %v789 = vadd.f32 %v669, %v788
      %v790 = vpop.f32.mrb[0].mxu0
      %791 = vmatprep.mubr.bf16.mxu0 0
      %792 = vmatmul.mubr.bf16.gmra.mrb[0].mxu0 %v711
      %v793 = vpop.f32.mrb[0].mxu0
      %v794 = vadd.f32 %v669, %v793
      %v795 = vpop.f32.mrb[0].mxu0
      %v796 = vpop.f32.mrb[0].mxu0
      %v797 = vadd.f32 %v669, %v796
      %v798 = vpop.f32.mrb[0].mxu0
      %799 = vmatprep.mubr.bf16.mxu0 0
      %800 = vmatmul.mubr.bf16.gmra.mrb[0].mxu0 %v714
      %v801 = vpop.f32.mrb[0].mxu0
      %v802 = vadd.f32 %v669, %v801
      %v803 = vpop.f32.mrb[0].mxu0
      %v804 = vpop.f32.mrb[0].mxu0
      %v805 = vadd.f32 %v669, %v804
      %v806 = vpop.f32.mrb[0].mxu0
      %807 = vmatprep.mubr.bf16.mxu0 0
      %808 = vmatmul.mubr.bf16.gmra.mrb[0].mxu0 %v717
      %v809 = vpop.f32.mrb[0].mxu0
      %v810 = vadd.f32 %v669, %v809
      %v811 = vpop.f32.mrb[0].mxu0
      %v812 = vpop.f32.mrb[0].mxu0
      %v813 = vadd.f32 %v669, %v812
      %v814 = vpop.f32.mrb[0].mxu0
      %815 = vdwg.mxu0
      %v816 = vmax.f32 %v754, 0.0
      %v817 = vmax.f32 %v757, 0.0
      %v818 = vmax.f32 %v762, 0.0
      %v819 = vmax.f32 %v765, 0.0
      %v820 = vmax.f32 %v770, 0.0
      %v821 = vmax.f32 %v773, 0.0
      %v822 = vmax.f32 %v778, 0.0
      %v823 = vmax.f32 %v781, 0.0
      %v824 = vmax.f32 %v786, 0.0
      %v825 = vmax.f32 %v789, 0.0
      %v826 = vmax.f32 %v794, 0.0
      %v827 = vmax.f32 %v797, 0.0
      %v828 = vmax.f32 %v802, 0.0
      %v829 = vmax.f32 %v805, 0.0
      %v830 = vmax.f32 %v810, 0.0
      %v831 = vmax.f32 %v813, 0.0
      %v832 = vpack.c.bf16 %v817, %v816
      %v833 = vpack.c.bf16 %v819, %v818
      %v834 = vpack.c.bf16 %v821, %v820
      %v835 = vpack.c.bf16 %v823, %v822
      %v836 = vpack.c.bf16 %v825, %v824
      %v837 = vpack.c.bf16 %v827, %v826
      %v838 = vpack.c.bf16 %v829, %v828
      %v839 = vpack.c.bf16 %v831, %v830
      %v848 = vunpack.c.l.b16 %v832
      %v849 = vunpack.c.h.b16 %v832
      %v850 = vunpack.c.l.b16 %v833
      %v851 = vunpack.c.h.b16 %v833
      %v852 = vunpack.c.l.b16 %v834
      %v853 = vunpack.c.h.b16 %v834
      %v854 = vunpack.c.l.b16 %v835
      %v855 = vunpack.c.h.b16 %v835
      %v856 = vunpack.c.l.b16 %v836
      %v857 = vunpack.c.h.b16 %v836
      %v858 = vunpack.c.l.b16 %v837
      %v859 = vunpack.c.h.b16 %v837
      %v860 = vunpack.c.l.b16 %v838
      %v861 = vunpack.c.h.b16 %v838
      %v862 = vunpack.c.l.b16 %v839
      %v863 = vunpack.c.h.b16 %v839
      %v864 = vpack.c.b16 %v848, %v848
      %v865 = vpack.c.b16 %v849, %v849
      %v866 = vpack.c.b16 %v850, %v850
      %v867 = vpack.c.b16 %v851, %v851
      %v868 = vpack.c.b16 %v852, %v852
      %v869 = vpack.c.b16 %v853, %v853
      %v870 = vpack.c.b16 %v854, %v854
      %v871 = vpack.c.b16 %v855, %v855
      %v872 = vpack.c.b16 %v856, %v856
      %v873 = vpack.c.b16 %v857, %v857
      %v874 = vpack.c.b16 %v858, %v858
      %v875 = vpack.c.b16 %v859, %v859
      %v876 = vpack.c.b16 %v860, %v860
      %v877 = vpack.c.b16 %v861, %v861
      %v878 = vpack.c.b16 %v862, %v862
      %v879 = vpack.c.b16 %v863, %v863
      %vm896 = vcmask 519168
      %897 = vst.msk [vmem:[%s280] sm:$0xf] %vm896, %v864
      %898 = vst.msk [vmem:[%s280 + $0x4] sm:$0xf] %vm896, %v865
      %899 = vst.msk [vmem:[%s280 + $0x8] sm:$0xf] %vm896, %v866
      %900 = vst.msk [vmem:[%s280 + $0xc] sm:$0xf] %vm896, %v867
      %901 = vst.msk [vmem:[%s280 + $0x10] sm:$0xf] %vm896, %v868
      %902 = vst.msk [vmem:[%s280 + $0x14] sm:$0xf] %vm896, %v869
      %903 = vst.msk [vmem:[%s280 + $0x18] sm:$0xf] %vm896, %v870
      %904 = vst.msk [vmem:[%s280 + $0x1c] sm:$0xf] %vm896, %v871
      %905 = vst.msk [vmem:[%s280 + $0x20] sm:$0xf] %vm896, %v872
      %906 = vst.msk [vmem:[%s280 + $0x24] sm:$0xf] %vm896, %v873
      %907 = vst.msk [vmem:[%s280 + $0x28] sm:$0xf] %vm896, %v874
      %908 = vst.msk [vmem:[%s280 + $0x2c] sm:$0xf] %vm896, %v875
      %909 = vst.msk [vmem:[%s280 + $0x30] sm:$0xf] %vm896, %v876
      %910 = vst.msk [vmem:[%s280 + $0x34] sm:$0xf] %vm896, %v877
      %911 = vst.msk [vmem:[%s280 + $0x38] sm:$0xf] %vm896, %v878
      %912 = vst.msk [vmem:[%s280 + $0x3c] sm:$0xf] %vm896, %v879
      %s913 = smul.u32 16, %s18
      %p914 = scmp.lt.s32.totalorder %s913, 31
      %s915 = scalar_select %p914, %s913, 31
      %s916 = smul.addr %s915, 4
      %s917 = scalar_lea.vmem %s7, %s916
      // Predicated region
      $region49: #{foldnet_encoder_forward.6} parent=47 // pred_check
        %p918 = pneg %p188
      $region50: #{foldnet_encoder_forward.6} parent=47 // pred_check_branch
        %920 = sbr.rel (%p918) target = $region52
      $region51: #{foldnet_encoder_forward.6} parent=47 // pred_region
        %s921 = smul.u32 16, %s18
      $region52: #{foldnet_encoder_forward.6} parent=47 // pred_fallthru
        _
    $region48: #{foldnet_encoder_forward.6} parent=5 // pred_fallthru
      _
    %p922 = scmp.le.s32.totalorder 2, %s13
    // Predicated region
    $region53: #{foldnet_encoder_forward.6} parent=5 // pred_check
      %p923 = pneg %p922
    $region54: #{foldnet_encoder_forward.6} parent=5 // pred_check_branch
      %925 = sbr.rel (%p923) target = $region56
    $region55: #{foldnet_encoder_forward.6} parent=5 // pred_region
      %s926 = ssub.s32 %s13, 2
      // Predicated region
      $region57: #{foldnet_encoder_forward.6} parent=55 // pred_check
        %p927 = pneg %p194
      $region58: #{foldnet_encoder_forward.6} parent=55 // pred_check_branch
        %929 = sbr.rel (%p927) target = $region60
      $region59: #{foldnet_encoder_forward.6} parent=55 // pred_region
        %s930 = smul.u32 16, %s19
        %p931 = scmp.lt.s32.totalorder %s930, 31
        %s932 = scalar_select %p931, %s930, 31
        %s933 = smul.addr %s932, 4
        %s934 = scalar_lea.vmem %s7, %s933
      $region60: #{foldnet_encoder_forward.6} parent=55 // pred_fallthru
        _
    $region56: #{foldnet_encoder_forward.6} parent=5 // pred_fallthru
      _
  $region6: #{foldnet_encoder_forward.6} parent=0 // loop_footer
    %s17 = sadd.s32 1, %s13
  $region7: #{foldnet_encoder_forward.6} parent=0 // loop_footer_branch
    %12 = sbr.rel target = $region3
  $region8: #{foldnet_encoder_forward.6} parent=0 // loop_exit
    _

// kernel: foldnet_encoder_forward.7
$region0: #{foldnet_encoder_forward.7}
  #allocation0 [shape = 'u32[]', space=smem, size = 0x4, offset = 0x4, fixed_abs, tag = 'smem constant byte address 0x4 - core index']
  #allocation1 [shape = 'u32[144,128]{1,0:T(1,128)}', space=vmem, size = 0x12000, scoped, tag = 'internal scratch']
  %s0 = inlined_call_operand.vmem [shape: bf16[256,64], index: 0, kind: input, shape index: {}]
  %s1 = inlined_call_operand.vmem [shape: bf16[64,128], index: 1, kind: input, shape index: {}]
  %s2 = inlined_call_operand.vmem [shape: f32[1,128], index: 2, kind: input, shape index: {}]
  %s3 = inlined_call_operand.vmem [shape: bf16[256,128], index: 3, kind: output, shape index: {}]
  %s4 = sld [smem:[#allocation0]]
  $region45: #{foldnet_encoder_forward.7} parent=0
    _
  %s6 = ssub.s32 1, %s4
  %s7 = scalar_select 0, %s6, %s4
  loop: start=0, step=1, limit=4
  $region2: #{foldnet_encoder_forward.7} parent=0 // loop_pre_header
    _
  $region3: #{foldnet_encoder_forward.7} parent=0 // loop_header
    %s9 = sphi 0, %s13
    %p10 = scmp.ge.s32.totalorder %s9, 4
    %s19 = sphi 0, %s21
    %s22 = sphi 0, %s19
    %s23 = sphi 0, %s22
    %s39 = sphi 0, %s23
    %s43 = sphi 0, %s43
    %s45 = sphi 0, %s43
    %s46 = sphi 0, %s45
    %s60 = sphi 0, %s46
    %s64 = sphi 0, %s64
    %s66 = sphi 0, %s64
    %s67 = sphi 0, %s66
    %s81 = sphi 0, %s67
    %s87 = sphi 0, %s89
    %s90 = sphi 0, %s87
    %s91 = sphi 0, %s90
    %s107 = sphi 0, %s91
  $region4: #{foldnet_encoder_forward.7} parent=0 // loop_header_branch
    %12 = sbr.rel (%p10) target = $region8
  $region5: #{foldnet_encoder_forward.7} parent=0 // loop_body
    %s14 = ssub.s32 %s9, 1
    %s15 = ssub.s32 %s9, 2
    %s16 = sadd.s32 %s9, 1
    %s17 = ssub.s32 %s9, %s16
    %p18 = scmp.eq.s32.totalorder %s17, 0
    %s20 = sadd.s32 %s19, 1
    %s21 = scalar_select %p18, %s19, %s20
    %p24 = pneg %p18
    %p25 = scmp.eq.s32.totalorder %s9, 1
    %p26 = por %p24, %p25
    %p27 = scmp.ne.s32.totalorder %s19, %s22
    %p28 = scmp.eq.s32.totalorder %s9, 0
    %p29 = por %p27, %p28
    %p30 = scmp.ne.s32.totalorder %s19, %s22
    %p31 = scmp.eq.s32.totalorder %s14, 1
    %p32 = por %p30, %p31
    %p33 = scmp.ne.s32.totalorder %s22, %s23
    %p34 = scmp.eq.s32.totalorder %s14, 0
    %p35 = por %p33, %p34
    %p36 = scmp.ne.s32.totalorder %s22, %s23
    %p37 = scmp.eq.s32.totalorder %s15, 1
    %p38 = por %p36, %p37
    %p40 = scmp.ne.s32.totalorder %s23, %s39
    %p41 = scmp.eq.s32.totalorder %s15, 0
    %p42 = por %p40, %p41
    %s44 = sadd.s32 %s43, 1
    %p47 = scmp.eq.s32.totalorder %s9, 1
    %p48 = scmp.ne.s32.totalorder %s43, %s45
    %p49 = scmp.eq.s32.totalorder %s9, 0
    %p50 = por %p48, %p49
    %p51 = scmp.ne.s32.totalorder %s43, %s45
    %p52 = scmp.eq.s32.totalorder %s14, 1
    %p53 = por %p51, %p52
    %p54 = scmp.ne.s32.totalorder %s45, %s46
    %p55 = scmp.eq.s32.totalorder %s14, 0
    %p56 = por %p54, %p55
    %p57 = scmp.ne.s32.totalorder %s45, %s46
    %p58 = scmp.eq.s32.totalorder %s15, 1
    %p59 = por %p57, %p58
    %p61 = scmp.ne.s32.totalorder %s46, %s60
    %p62 = scmp.eq.s32.totalorder %s15, 0
    %p63 = por %p61, %p62
    %s65 = sadd.s32 %s64, 1
    %p68 = scmp.eq.s32.totalorder %s9, 1
    %p69 = scmp.ne.s32.totalorder %s64, %s66
    %p70 = scmp.eq.s32.totalorder %s9, 0
    %p71 = por %p69, %p70
    %p72 = scmp.ne.s32.totalorder %s64, %s66
    %p73 = scmp.eq.s32.totalorder %s14, 1
    %p74 = por %p72, %p73
    %p75 = scmp.ne.s32.totalorder %s66, %s67
    %p76 = scmp.eq.s32.totalorder %s14, 0
    %p77 = por %p75, %p76
    %p78 = scmp.ne.s32.totalorder %s66, %s67
    %p79 = scmp.eq.s32.totalorder %s15, 1
    %p80 = por %p78, %p79
    %p82 = scmp.ne.s32.totalorder %s67, %s81
    %p83 = scmp.eq.s32.totalorder %s15, 0
    %p84 = por %p82, %p83
    %s85 = ssub.s32 %s9, %s16
    %p86 = scmp.eq.s32.totalorder %s85, 0
    %s88 = sadd.s32 %s87, 1
    %s89 = scalar_select %p86, %s87, %s88
    %p92 = pneg %p86
    %p93 = scmp.eq.s32.totalorder %s9, 1
    %p94 = por %p92, %p93
    %p95 = scmp.ne.s32.totalorder %s87, %s90
    %p96 = scmp.eq.s32.totalorder %s9, 0
    %p97 = por %p95, %p96
    %p98 = scmp.ne.s32.totalorder %s87, %s90
    %p99 = scmp.eq.s32.totalorder %s14, 1
    %p100 = por %p98, %p99
    %p101 = scmp.ne.s32.totalorder %s90, %s91
    %p102 = scmp.eq.s32.totalorder %s14, 0
    %p103 = por %p101, %p102
    %p104 = scmp.ne.s32.totalorder %s90, %s91
    %p105 = scmp.eq.s32.totalorder %s15, 1
    %p106 = por %p104, %p105
    %p108 = scmp.ne.s32.totalorder %s91, %s107
    %p109 = scmp.eq.s32.totalorder %s15, 0
    %p110 = por %p108, %p109
    %p111 = scmp.le.s32.totalorder 1, %s9
    %p112 = scmp.lt.s32.totalorder %s9, 3
    %p113 = pnand %p111, %p112
    %p114 = pneg %p113
    // Predicated region
    $region9: #{foldnet_encoder_forward.7} parent=5 // pred_check
      _
    $region10: #{foldnet_encoder_forward.7} parent=5 // pred_check_branch
      %116 = sbr.rel (%p113) target = $region12
    $region11: #{foldnet_encoder_forward.7} parent=5 // pred_region
      %s117 = ssub.s32 %s9, 1
      // Predicated region
      $region13: #{foldnet_encoder_forward.7} parent=11 // pred_check
        %p118 = pneg %p56
      $region14: #{foldnet_encoder_forward.7} parent=11 // pred_check_branch
        %120 = sbr.rel (%p118) target = $region16
      $region15: #{foldnet_encoder_forward.7} parent=11 // pred_region
        _
      $region16: #{foldnet_encoder_forward.7} parent=11 // pred_fallthru
        _
      // Predicated region
      $region17: #{foldnet_encoder_forward.7} parent=11 // pred_check
        %p121 = pneg %p77
      $region18: #{foldnet_encoder_forward.7} parent=11 // pred_check_branch
        %123 = sbr.rel (%p121) target = $region20
      $region19: #{foldnet_encoder_forward.7} parent=11 // pred_region
        _
      $region20: #{foldnet_encoder_forward.7} parent=11 // pred_fallthru
        _
    $region12: #{foldnet_encoder_forward.7} parent=5 // pred_fallthru
      _
    %p124 = scmp.lt.s32.totalorder %s9, 2
    // Predicated region
    $region21: #{foldnet_encoder_forward.7} parent=5 // pred_check
      %p125 = pneg %p124
    $region22: #{foldnet_encoder_forward.7} parent=5 // pred_check_branch
      %127 = sbr.rel (%p125) target = $region24
    $region23: #{foldnet_encoder_forward.7} parent=5 // pred_region
      // Predicated region
      $region25: #{foldnet_encoder_forward.7} parent=23 // pred_check
        %p128 = pneg %p29
      $region26: #{foldnet_encoder_forward.7} parent=23 // pred_check_branch
        %130 = sbr.rel (%p128) target = $region28
      $region27: #{foldnet_encoder_forward.7} parent=23 // pred_region
        %s131 = smul.u32 16, %s9
        %p132 = scmp.lt.s32.totalorder %s131, 31
        %s133 = scalar_select %p132, %s131, 31
        %s134 = smul.addr %s133, 4
        %s135 = scalar_lea.vmem %s0, %s134
        %s136 = smul.u32 16, %s9
      $region28: #{foldnet_encoder_forward.7} parent=23 // pred_fallthru
        _
    $region24: #{foldnet_encoder_forward.7} parent=5 // pred_fallthru
      _
    %p137 = scmp.le.s32.totalorder 1, %s9
    %p138 = scmp.lt.s32.totalorder %s9, 3
    %p139 = pnand %p137, %p138
    %p140 = pneg %p139
    // Predicated region
    $region29: #{foldnet_encoder_forward.7} parent=5 // pred_check
      _
    $region30: #{foldnet_encoder_forward.7} parent=5 // pred_check_branch
      %142 = sbr.rel (%p139) target = $region32
    $region31: #{foldnet_encoder_forward.7} parent=5 // pred_region
      %s143 = ssub.s32 %s9, 1
      %s144 = smul.u32 16, %s14
      %p145 = scmp.lt.s32.totalorder %s144, 31
      %s146 = scalar_select %p145, %s144, 31
      %s147 = smul.addr %s146, 4
      %s148 = scalar_lea.vmem %s0, %s147
      %p149 = pneg %p35
      %p150 = pneg %p32
      %p151 = pneg %p56
      %p152 = pneg %p53
      %p153 = pneg %p77
      %p154 = pneg %p74
      %p155 = pneg %p103
      %p156 = pneg %p100
      %s157 = smul.u32 16, %s14
      %p158 = scmp.lt.s32.totalorder %s157, 31
      %s159 = scalar_select %p158, %s157, 31
      %s160 = smul.addr %s159, 4
      %s161 = scalar_lea.vmem %s3, %s160
      %s162 = smul.u32 16, %s14
      %p163 = scmp.lt.s32.totalorder %s162, 31
      %s164 = scalar_select %p163, %s162, 31
      %s165 = smul.addr %s164, 4
      %s166 = scalar_lea.vmem %s0, %s165
      %s167 = smul.u32 16, %s14
      %s168 = smul.u32 16, %s14
      %p169 = scmp.lt.s32.totalorder %s168, 31
      %s170 = scalar_select %p169, %s168, 31
      %s171 = smul.addr %s170, 4
      %s172 = scalar_lea.vmem %s3, %s171
      %s173 = smul.u32 16, %s14
      %v175 = vld [vmem:[%s166] sm:$0xf]
      %v176 = vld [vmem:[%s166 + $0x4] sm:$0xf]
      %v177 = vld [vmem:[%s166 + $0x8] sm:$0xf]
      %v178 = vld [vmem:[%s166 + $0xc] sm:$0xf]
      %v179 = vld [vmem:[%s166 + $0x10] sm:$0xf]
      %v180 = vld [vmem:[%s166 + $0x14] sm:$0xf]
      %v181 = vld [vmem:[%s166 + $0x18] sm:$0xf]
      %v182 = vld [vmem:[%s166 + $0x1c] sm:$0xf]
      %v183 = vld [vmem:[%s166 + $0x20] sm:$0xf]
      %v184 = vld [vmem:[%s166 + $0x24] sm:$0xf]
      %v185 = vld [vmem:[%s166 + $0x28] sm:$0xf]
      %v186 = vld [vmem:[%s166 + $0x2c] sm:$0xf]
      %v187 = vld [vmem:[%s166 + $0x30] sm:$0xf]
      %v188 = vld [vmem:[%s166 + $0x34] sm:$0xf]
      %v189 = vld [vmem:[%s166 + $0x38] sm:$0xf]
      %v190 = vld [vmem:[%s166 + $0x3c] sm:$0xf]
      %v191 = vld [vmem:[%s1] sm:$0xf]
      %v192 = vld [vmem:[%s1 + $0x4] sm:$0xf]
      %v193 = vld [vmem:[%s1 + $0x8] sm:$0xf]
      %v194 = vld [vmem:[%s1 + $0xc] sm:$0xf]
      %v195 = vld [vmem:[%s1 + $0x10] sm:$0xf]
      %v196 = vld [vmem:[%s1 + $0x14] sm:$0xf]
      %v197 = vld [vmem:[%s1 + $0x18] sm:$0xf]
      %v198 = vld [vmem:[%s1 + $0x1c] sm:$0xf]
      %v199 = vld [vmem:[%s2] sm:$0x1]
      %v201 = vlaneseq
      %v202 = vshrl.u32 %v201, 7
      %v203 = vsub.s32 0, %v202
      %v204 = vrot.slane %v199, %v203
      %v222 = vunpack.c.l.b16 %v175
      %v223 = vunpack.c.l.b16 %v176
      %v224 = vunpack.c.l.b16 %v177
      %v225 = vunpack.c.l.b16 %v178
      %v226 = vunpack.c.l.b16 %v179
      %v227 = vunpack.c.l.b16 %v180
      %v228 = vunpack.c.l.b16 %v181
      %v229 = vunpack.c.l.b16 %v182
      %v230 = vunpack.c.l.b16 %v183
      %v231 = vunpack.c.l.b16 %v184
      %v232 = vunpack.c.l.b16 %v185
      %v233 = vunpack.c.l.b16 %v186
      %v234 = vunpack.c.l.b16 %v187
      %v235 = vunpack.c.l.b16 %v188
      %v236 = vunpack.c.l.b16 %v189
      %v237 = vunpack.c.l.b16 %v190
      %v238 = vpack.c.b16 %v223, %v222
      %v239 = vpack.c.b16 %v225, %v224
      %v240 = vpack.c.b16 %v227, %v226
      %v241 = vpack.c.b16 %v229, %v228
      %v242 = vpack.c.b16 %v231, %v230
      %v243 = vpack.c.b16 %v233, %v232
      %v244 = vpack.c.b16 %v235, %v234
      %v245 = vpack.c.b16 %v237, %v236
      %v254 = vunpack.c.l.b16 %v191
      %v255 = vunpack.c.l.b16 %v192
      %v256 = vunpack.c.l.b16 %v193
      %v257 = vunpack.c.l.b16 %v194
      %v258 = vunpack.c.l.b16 %v195
      %v259 = vunpack.c.l.b16 %v196
      %v260 = vunpack.c.l.b16 %v197
      %v261 = vunpack.c.l.b16 %v198
      %v262 = vpack.c.b16 %v255, %v254
      %v263 = vpack.c.b16 %v257, %v256
      %v264 = vpack.c.b16 %v259, %v258
      %v265 = vpack.c.b16 %v261, %v260
      %vm270 = vcmask 523264
      %v272 = vsel %vm270, %v238, 0
      %v275 = vsel %vm270, %v239, 0
      %v278 = vsel %vm270, %v240, 0
      %v281 = vsel %vm270, %v241, 0
      %v284 = vsel %vm270, %v242, 0
      %v287 = vsel %vm270, %v243, 0
      %v290 = vsel %vm270, %v244, 0
      %v293 = vsel %vm270, %v245, 0
      %295 = vmatprep.subr.bf16.mxu0 0
      %296 = vmatpush1.bf16.msra.mxu0 %v262
      %297 = vmatprep.subr.bf16.mxu0 0
      %298 = vmatpush1.bf16.msra.mxu0 %v263
      %299 = vmatprep.subr.bf16.mxu0 0
      %300 = vmatpush1.bf16.msra.mxu0 %v264
      %301 = vmatprep.subr.bf16.mxu0 0
      %302 = vmatpush1.bf16.msra.mxu0 %v265
      %303 = vmatprep.subr.bf16.mxu0 0
      %304 = vmatpush1.bf16.msra.mxu0 0
      %305 = vmatprep.subr.bf16.mxu0 0
      %306 = vmatpush1.bf16.msra.mxu0 0
      %307 = vmatprep.subr.bf16.mxu0 0
      %308 = vmatpush1.bf16.msra.mxu0 0
      %309 = vmatprep.subr.bf16.mxu0 0
      %310 = vmatpush1.bf16.msra.mxu0 0
      %311 = vmatprep.subr.bf16.mxu0 0
      %312 = vmatpush1.bf16.msra.mxu0 0
      %313 = vmatprep.subr.bf16.mxu0 0
      %314 = vmatpush1.bf16.msra.mxu0 0
      %315 = vmatprep.subr.bf16.mxu0 0
      %316 = vmatpush1.bf16.msra.mxu0 0
      %317 = vmatprep.subr.bf16.mxu0 0
      %318 = vmatpush1.bf16.msra.mxu0 0
      %319 = vmatprep.subr.bf16.mxu0 0
      %320 = vmatpush1.bf16.msra.mxu0 0
      %321 = vmatprep.subr.bf16.mxu0 0
      %322 = vmatpush1.bf16.msra.mxu0 0
      %323 = vmatprep.subr.bf16.mxu0 0
      %324 = vmatpush1.bf16.msra.mxu0 0
      %325 = vmatprep.subr.bf16.mxu0 0
      %326 = vmatpush1.bf16.msra.mxu0 0
      %327 = vmatprep.mubr.bf16.mxu0 0
      %328 = vmatmul.mubr.bf16.gmra.mrb[0].mxu0 %v272
      %v329 = vpop.f32.mrb[0].mxu0
      %v330 = vadd.f32 %v204, %v329
      %v331 = vpop.f32.mrb[0].mxu0
      %v332 = vpop.f32.mrb[0].mxu0
      %v333 = vadd.f32 %v204, %v332
      %v334 = vpop.f32.mrb[0].mxu0
      %335 = vmatprep.mubr.bf16.mxu0 0
      %336 = vmatmul.mubr.bf16.gmra.mrb[0].mxu0 %v275
      %v337 = vpop.f32.mrb[0].mxu0
      %v338 = vadd.f32 %v204, %v337
      %v339 = vpop.f32.mrb[0].mxu0
      %v340 = vpop.f32.mrb[0].mxu0
      %v341 = vadd.f32 %v204, %v340
      %v342 = vpop.f32.mrb[0].mxu0
      %343 = vmatprep.mubr.bf16.mxu0 0
      %344 = vmatmul.mubr.bf16.gmra.mrb[0].mxu0 %v278
      %v345 = vpop.f32.mrb[0].mxu0
      %v346 = vadd.f32 %v204, %v345
      %v347 = vpop.f32.mrb[0].mxu0
      %v348 = vpop.f32.mrb[0].mxu0
      %v349 = vadd.f32 %v204, %v348
      %v350 = vpop.f32.mrb[0].mxu0
      %351 = vmatprep.mubr.bf16.mxu0 0
      %352 = vmatmul.mubr.bf16.gmra.mrb[0].mxu0 %v281
      %v353 = vpop.f32.mrb[0].mxu0
      %v354 = vadd.f32 %v204, %v353
      %v355 = vpop.f32.mrb[0].mxu0
      %v356 = vpop.f32.mrb[0].mxu0
      %v357 = vadd.f32 %v204, %v356
      %v358 = vpop.f32.mrb[0].mxu0
      %359 = vmatprep.mubr.bf16.mxu0 0
      %360 = vmatmul.mubr.bf16.gmra.mrb[0].mxu0 %v284
      %v361 = vpop.f32.mrb[0].mxu0
      %v362 = vadd.f32 %v204, %v361
      %v363 = vpop.f32.mrb[0].mxu0
      %v364 = vpop.f32.mrb[0].mxu0
      %v365 = vadd.f32 %v204, %v364
      %v366 = vpop.f32.mrb[0].mxu0
      %367 = vmatprep.mubr.bf16.mxu0 0
      %368 = vmatmul.mubr.bf16.gmra.mrb[0].mxu0 %v287
      %v369 = vpop.f32.mrb[0].mxu0
      %v370 = vadd.f32 %v204, %v369
      %v371 = vpop.f32.mrb[0].mxu0
      %v372 = vpop.f32.mrb[0].mxu0
      %v373 = vadd.f32 %v204, %v372
      %v374 = vpop.f32.mrb[0].mxu0
      %375 = vmatprep.mubr.bf16.mxu0 0
      %376 = vmatmul.mubr.bf16.gmra.mrb[0].mxu0 %v290
      %v377 = vpop.f32.mrb[0].mxu0
      %v378 = vadd.f32 %v204, %v377
      %v379 = vpop.f32.mrb[0].mxu0
      %v380 = vpop.f32.mrb[0].mxu0
      %v381 = vadd.f32 %v204, %v380
      %v382 = vpop.f32.mrb[0].mxu0
      %383 = vmatprep.mubr.bf16.mxu0 0
      %384 = vmatmul.mubr.bf16.gmra.mrb[0].mxu0 %v293
      %v385 = vpop.f32.mrb[0].mxu0
      %v386 = vadd.f32 %v204, %v385
      %v387 = vpop.f32.mrb[0].mxu0
      %v388 = vpop.f32.mrb[0].mxu0
      %v389 = vadd.f32 %v204, %v388
      %v390 = vpop.f32.mrb[0].mxu0
      %391 = vdwg.mxu0
      %v392 = vmax.f32 %v330, 0.0
      %v393 = vmax.f32 %v333, 0.0
      %v394 = vmax.f32 %v338, 0.0
      %v395 = vmax.f32 %v341, 0.0
      %v396 = vmax.f32 %v346, 0.0
      %v397 = vmax.f32 %v349, 0.0
      %v398 = vmax.f32 %v354, 0.0
      %v399 = vmax.f32 %v357, 0.0
      %v400 = vmax.f32 %v362, 0.0
      %v401 = vmax.f32 %v365, 0.0
      %v402 = vmax.f32 %v370, 0.0
      %v403 = vmax.f32 %v373, 0.0
      %v404 = vmax.f32 %v378, 0.0
      %v405 = vmax.f32 %v381, 0.0
      %v406 = vmax.f32 %v386, 0.0
      %v407 = vmax.f32 %v389, 0.0
      %v408 = vpack.c.bf16 %v393, %v392
      %v409 = vpack.c.bf16 %v395, %v394
      %v410 = vpack.c.bf16 %v397, %v396
      %v411 = vpack.c.bf16 %v399, %v398
      %v412 = vpack.c.bf16 %v401, %v400
      %v413 = vpack.c.bf16 %v403, %v402
      %v414 = vpack.c.bf16 %v405, %v404
      %v415 = vpack.c.bf16 %v407, %v406
      %v424 = vunpack.c.l.b16 %v408
      %v425 = vunpack.c.h.b16 %v408
      %v426 = vunpack.c.l.b16 %v409
      %v427 = vunpack.c.h.b16 %v409
      %v428 = vunpack.c.l.b16 %v410
      %v429 = vunpack.c.h.b16 %v410
      %v430 = vunpack.c.l.b16 %v411
      %v431 = vunpack.c.h.b16 %v411
      %v432 = vunpack.c.l.b16 %v412
      %v433 = vunpack.c.h.b16 %v412
      %v434 = vunpack.c.l.b16 %v413
      %v435 = vunpack.c.h.b16 %v413
      %v436 = vunpack.c.l.b16 %v414
      %v437 = vunpack.c.h.b16 %v414
      %v438 = vunpack.c.l.b16 %v415
      %v439 = vunpack.c.h.b16 %v415
      %v440 = vpack.c.b16 %v424, %v424
      %v441 = vpack.c.b16 %v425, %v425
      %v442 = vpack.c.b16 %v426, %v426
      %v443 = vpack.c.b16 %v427, %v427
      %v444 = vpack.c.b16 %v428, %v428
      %v445 = vpack.c.b16 %v429, %v429
      %v446 = vpack.c.b16 %v430, %v430
      %v447 = vpack.c.b16 %v431, %v431
      %v448 = vpack.c.b16 %v432, %v432
      %v449 = vpack.c.b16 %v433, %v433
      %v450 = vpack.c.b16 %v434, %v434
      %v451 = vpack.c.b16 %v435, %v435
      %v452 = vpack.c.b16 %v436, %v436
      %v453 = vpack.c.b16 %v437, %v437
      %v454 = vpack.c.b16 %v438, %v438
      %v455 = vpack.c.b16 %v439, %v439
      %472 = vst [vmem:[%s172] sm:$0xf] %v440
      %473 = vst [vmem:[%s172 + $0x4] sm:$0xf] %v441
      %474 = vst [vmem:[%s172 + $0x8] sm:$0xf] %v442
      %475 = vst [vmem:[%s172 + $0xc] sm:$0xf] %v443
      %476 = vst [vmem:[%s172 + $0x10] sm:$0xf] %v444
      %477 = vst [vmem:[%s172 + $0x14] sm:$0xf] %v445
      %478 = vst [vmem:[%s172 + $0x18] sm:$0xf] %v446
      %479 = vst [vmem:[%s172 + $0x1c] sm:$0xf] %v447
      %480 = vst [vmem:[%s172 + $0x20] sm:$0xf] %v448
      %481 = vst [vmem:[%s172 + $0x24] sm:$0xf] %v449
      %482 = vst [vmem:[%s172 + $0x28] sm:$0xf] %v450
      %483 = vst [vmem:[%s172 + $0x2c] sm:$0xf] %v451
      %484 = vst [vmem:[%s172 + $0x30] sm:$0xf] %v452
      %485 = vst [vmem:[%s172 + $0x34] sm:$0xf] %v453
      %486 = vst [vmem:[%s172 + $0x38] sm:$0xf] %v454
      %487 = vst [vmem:[%s172 + $0x3c] sm:$0xf] %v455
      %s488 = smul.u32 16, %s14
      %p489 = scmp.lt.s32.totalorder %s488, 31
      %s490 = scalar_select %p489, %s488, 31
      %s491 = smul.addr %s490, 4
      %s492 = scalar_lea.vmem %s3, %s491
      // Predicated region
      $region33: #{foldnet_encoder_forward.7} parent=31 // pred_check
        %p493 = pneg %p100
      $region34: #{foldnet_encoder_forward.7} parent=31 // pred_check_branch
        %495 = sbr.rel (%p493) target = $region36
      $region35: #{foldnet_encoder_forward.7} parent=31 // pred_region
        %s496 = smul.u32 16, %s14
      $region36: #{foldnet_encoder_forward.7} parent=31 // pred_fallthru
        _
    $region32: #{foldnet_encoder_forward.7} parent=5 // pred_fallthru
      _
    %p497 = scmp.le.s32.totalorder 2, %s9
    // Predicated region
    $region37: #{foldnet_encoder_forward.7} parent=5 // pred_check
      %p498 = pneg %p497
    $region38: #{foldnet_encoder_forward.7} parent=5 // pred_check_branch
      %500 = sbr.rel (%p498) target = $region40
    $region39: #{foldnet_encoder_forward.7} parent=5 // pred_region
      %s501 = ssub.s32 %s9, 2
      // Predicated region
      $region41: #{foldnet_encoder_forward.7} parent=39 // pred_check
        %p502 = pneg %p106
      $region42: #{foldnet_encoder_forward.7} parent=39 // pred_check_branch
        %504 = sbr.rel (%p502) target = $region44
      $region43: #{foldnet_encoder_forward.7} parent=39 // pred_region
        %s505 = smul.u32 16, %s15
        %p506 = scmp.lt.s32.totalorder %s505, 31
        %s507 = scalar_select %p506, %s505, 31
        %s508 = smul.addr %s507, 4
        %s509 = scalar_lea.vmem %s3, %s508
      $region44: #{foldnet_encoder_forward.7} parent=39 // pred_fallthru
        _
    $region40: #{foldnet_encoder_forward.7} parent=5 // pred_fallthru
      _
  $region6: #{foldnet_encoder_forward.7} parent=0 // loop_footer
    %s13 = sadd.s32 1, %s9
  $region7: #{foldnet_encoder_forward.7} parent=0 // loop_footer_branch
    %8 = sbr.rel target = $region3
  $region8: #{foldnet_encoder_forward.7} parent=0 // loop_exit
    _

// kernel: foldnet_encoder_forward.8
$region0: #{foldnet_encoder_forward.8}
  #allocation0 [shape = 'u32[]', space=smem, size = 0x4, offset = 0x4, fixed_abs, tag = 'smem constant byte address 0x4 - core index']
  #allocation1 [shape = 'u32[144,128]{1,0:T(1,128)}', space=vmem, size = 0x12000, scoped, tag = 'internal scratch']
  #allocation2 [shape = 'f32[1,1024]{1,0:T(1,128)}', space=vmem, size = 0x1000, scoped, tag = 'scratch operand']
  %s0 = inlined_call_operand.vmem [shape: bf16[2,128,128], index: 0, kind: input, shape index: {}]
  %s1 = inlined_call_operand.vmem [shape: bf16[128,1024], index: 1, kind: input, shape index: {}]
  %s2 = inlined_call_operand.vmem [shape: f32[1,1024], index: 2, kind: input, shape index: {}]
  %s3 = inlined_call_operand.vmem [shape: f32[2,1,1024], index: 3, kind: output, shape index: {}]
  %s4 = sld [smem:[#allocation0]]
  $region53: #{foldnet_encoder_forward.8} parent=0
    _
  %s6 = ssub.s32 1, %s4
  %s7 = scalar_select 0, %s6, %s4
  loop: start=0, step=1, limit=4
  $region2: #{foldnet_encoder_forward.8} parent=0 // loop_pre_header
    _
  $region3: #{foldnet_encoder_forward.8} parent=0 // loop_header
    %s9 = sphi 0, %s13
    %p10 = scmp.ge.s32.totalorder %s9, 4
    %s16 = sphi 0, %s28
    %s17 = sphi 0, %s24
    %s18 = sphi 0, %s16
    %s19 = sphi 0, %s17
    %s20 = sphi 0, %s18
    %s21 = sphi 0, %s19
    %s33 = sphi 0, %s35
    %s36 = sphi 0, %s33
    %s37 = sphi 0, %s36
    %s53 = sphi 0, %s37
    %s57 = sphi 0, %s57
    %s59 = sphi 0, %s57
    %s60 = sphi 0, %s59
    %s74 = sphi 0, %s60
    %s78 = sphi 0, %s78
    %s80 = sphi 0, %s78
    %s81 = sphi 0, %s80
    %s95 = sphi 0, %s81
    %s101 = sphi 0, %s103
    %s104 = sphi 0, %s101
    %s105 = sphi 0, %s104
    %s121 = sphi 0, %s105
  $region4: #{foldnet_encoder_forward.8} parent=0 // loop_header_branch
    %12 = sbr.rel (%p10) target = $region8
  $region5: #{foldnet_encoder_forward.8} parent=0 // loop_body
    %s14 = ssub.s32 %s9, 1
    %s15 = ssub.s32 %s9, 2
    %s22 = sadd.s32 1, %s17
    %p23 = scmp.ge.s32.totalorder %s22, 1
    %s24 = scalar_select %p23, 0, %s22
    %s25 = sadd.s32 1, %s16
    %s26 = scalar_select %p23, %s25, %s16
    %p27 = scmp.ge.s32.totalorder %s26, 2
    %s28 = scalar_select %p27, 0, %s26
    %s29 = ssub.s32 %s16, %s28
    %s30 = ssub.s32 %s17, %s24
    %s31 = sor.u32 %s29, %s30
    %p32 = scmp.eq.s32.totalorder %s31, 0
    %s34 = sadd.s32 %s33, 1
    %s35 = scalar_select %p32, %s33, %s34
    %p38 = pneg %p32
    %p39 = scmp.eq.s32.totalorder %s9, 1
    %p40 = por %p38, %p39
    %p41 = scmp.ne.s32.totalorder %s33, %s36
    %p42 = scmp.eq.s32.totalorder %s9, 0
    %p43 = por %p41, %p42
    %p44 = scmp.ne.s32.totalorder %s33, %s36
    %p45 = scmp.eq.s32.totalorder %s14, 1
    %p46 = por %p44, %p45
    %p47 = scmp.ne.s32.totalorder %s36, %s37
    %p48 = scmp.eq.s32.totalorder %s14, 0
    %p49 = por %p47, %p48
    %p50 = scmp.ne.s32.totalorder %s36, %s37
    %p51 = scmp.eq.s32.totalorder %s15, 1
    %p52 = por %p50, %p51
    %p54 = scmp.ne.s32.totalorder %s37, %s53
    %p55 = scmp.eq.s32.totalorder %s15, 0
    %p56 = por %p54, %p55
    %s58 = sadd.s32 %s57, 1
    %p61 = scmp.eq.s32.totalorder %s9, 1
    %p62 = scmp.ne.s32.totalorder %s57, %s59
    %p63 = scmp.eq.s32.totalorder %s9, 0
    %p64 = por %p62, %p63
    %p65 = scmp.ne.s32.totalorder %s57, %s59
    %p66 = scmp.eq.s32.totalorder %s14, 1
    %p67 = por %p65, %p66
    %p68 = scmp.ne.s32.totalorder %s59, %s60
    %p69 = scmp.eq.s32.totalorder %s14, 0
    %p70 = por %p68, %p69
    %p71 = scmp.ne.s32.totalorder %s59, %s60
    %p72 = scmp.eq.s32.totalorder %s15, 1
    %p73 = por %p71, %p72
    %p75 = scmp.ne.s32.totalorder %s60, %s74
    %p76 = scmp.eq.s32.totalorder %s15, 0
    %p77 = por %p75, %p76
    %s79 = sadd.s32 %s78, 1
    %p82 = scmp.eq.s32.totalorder %s9, 1
    %p83 = scmp.ne.s32.totalorder %s78, %s80
    %p84 = scmp.eq.s32.totalorder %s9, 0
    %p85 = por %p83, %p84
    %p86 = scmp.ne.s32.totalorder %s78, %s80
    %p87 = scmp.eq.s32.totalorder %s14, 1
    %p88 = por %p86, %p87
    %p89 = scmp.ne.s32.totalorder %s80, %s81
    %p90 = scmp.eq.s32.totalorder %s14, 0
    %p91 = por %p89, %p90
    %p92 = scmp.ne.s32.totalorder %s80, %s81
    %p93 = scmp.eq.s32.totalorder %s15, 1
    %p94 = por %p92, %p93
    %p96 = scmp.ne.s32.totalorder %s81, %s95
    %p97 = scmp.eq.s32.totalorder %s15, 0
    %p98 = por %p96, %p97
    %s99 = ssub.s32 %s16, %s28
    %p100 = scmp.eq.s32.totalorder %s99, 0
    %s102 = sadd.s32 %s101, 1
    %s103 = scalar_select %p100, %s101, %s102
    %p106 = pneg %p100
    %p107 = scmp.eq.s32.totalorder %s9, 1
    %p108 = por %p106, %p107
    %p109 = scmp.ne.s32.totalorder %s101, %s104
    %p110 = scmp.eq.s32.totalorder %s9, 0
    %p111 = por %p109, %p110
    %p112 = scmp.ne.s32.totalorder %s101, %s104
    %p113 = scmp.eq.s32.totalorder %s14, 1
    %p114 = por %p112, %p113
    %p115 = scmp.ne.s32.totalorder %s104, %s105
    %p116 = scmp.eq.s32.totalorder %s14, 0
    %p117 = por %p115, %p116
    %p118 = scmp.ne.s32.totalorder %s104, %s105
    %p119 = scmp.eq.s32.totalorder %s15, 1
    %p120 = por %p118, %p119
    %p122 = scmp.ne.s32.totalorder %s105, %s121
    %p123 = scmp.eq.s32.totalorder %s15, 0
    %p124 = por %p122, %p123
    %p125 = scmp.le.s32.totalorder 1, %s9
    %p126 = scmp.lt.s32.totalorder %s9, 3
    %p127 = pnand %p125, %p126
    %p128 = pneg %p127
    // Predicated region
    $region9: #{foldnet_encoder_forward.8} parent=5 // pred_check
      _
    $region10: #{foldnet_encoder_forward.8} parent=5 // pred_check_branch
      %130 = sbr.rel (%p127) target = $region12
    $region11: #{foldnet_encoder_forward.8} parent=5 // pred_region
      %s131 = ssub.s32 %s9, 1
      // Predicated region
      $region13: #{foldnet_encoder_forward.8} parent=11 // pred_check
        %p132 = pneg %p70
      $region14: #{foldnet_encoder_forward.8} parent=11 // pred_check_branch
        %134 = sbr.rel (%p132) target = $region16
      $region15: #{foldnet_encoder_forward.8} parent=11 // pred_region
        _
      $region16: #{foldnet_encoder_forward.8} parent=11 // pred_fallthru
        _
      // Predicated region
      $region17: #{foldnet_encoder_forward.8} parent=11 // pred_check
        %p135 = pneg %p91
      $region18: #{foldnet_encoder_forward.8} parent=11 // pred_check_branch
        %137 = sbr.rel (%p135) target = $region20
      $region19: #{foldnet_encoder_forward.8} parent=11 // pred_region
        _
      $region20: #{foldnet_encoder_forward.8} parent=11 // pred_fallthru
        _
    $region12: #{foldnet_encoder_forward.8} parent=5 // pred_fallthru
      _
    %p138 = scmp.lt.s32.totalorder %s9, 2
    // Predicated region
    $region21: #{foldnet_encoder_forward.8} parent=5 // pred_check
      %p139 = pneg %p138
    $region22: #{foldnet_encoder_forward.8} parent=5 // pred_check_branch
      %141 = sbr.rel (%p139) target = $region24
    $region23: #{foldnet_encoder_forward.8} parent=5 // pred_region
      // Predicated region
      $region25: #{foldnet_encoder_forward.8} parent=23 // pred_check
        %p142 = pneg %p43
      $region26: #{foldnet_encoder_forward.8} parent=23 // pred_check_branch
        %144 = sbr.rel (%p142) target = $region28
      $region27: #{foldnet_encoder_forward.8} parent=23 // pred_region
        %s145 = smul.u32 16, %s17
        %p146 = scmp.lt.s32.totalorder %s16, 1
        %s147 = scalar_select %p146, %s16, 1
        %p148 = scmp.lt.s32.totalorder %s145, 15
        %s149 = scalar_select %p148, %s145, 15
        %s150 = smul.addr %s147, 16
        %s151 = sadd.s32 %s149, %s150
        %s152 = smul.addr %s151, 4
        %s153 = scalar_lea.vmem %s0, %s152
        %s154 = smul.u32 16, %s17
      $region28: #{foldnet_encoder_forward.8} parent=23 // pred_fallthru
        _
    $region24: #{foldnet_encoder_forward.8} parent=5 // pred_fallthru
      _
    %p155 = scmp.le.s32.totalorder 1, %s9
    %p156 = scmp.lt.s32.totalorder %s9, 3
    %p157 = pnand %p155, %p156
    %p158 = pneg %p157
    // Predicated region
    $region29: #{foldnet_encoder_forward.8} parent=5 // pred_check
      _
    $region30: #{foldnet_encoder_forward.8} parent=5 // pred_check_branch
      %160 = sbr.rel (%p157) target = $region32
    $region31: #{foldnet_encoder_forward.8} parent=5 // pred_region
      %s161 = ssub.s32 %s9, 1
      %s162 = smul.u32 16, %s19
      %p163 = scmp.lt.s32.totalorder %s18, 1
      %s164 = scalar_select %p163, %s18, 1
      %p165 = scmp.lt.s32.totalorder %s162, 15
      %s166 = scalar_select %p165, %s162, 15
      %s167 = smul.addr %s164, 16
      %s168 = sadd.s32 %s166, %s167
      %s169 = smul.addr %s168, 4
      %s170 = scalar_lea.vmem %s0, %s169
      %p171 = pneg %p49
      %p172 = pneg %p46
      %p173 = pneg %p70
      %p174 = pneg %p67
      %p175 = pneg %p91
      %p176 = pneg %p88
      %p177 = pneg %p117
      %p178 = pneg %p114
      %p179 = scmp.lt.s32.totalorder %s18, 1
      %s180 = scalar_select %p179, %s18, 1
      %s181 = smul.addr %s180, 8
      %s182 = scalar_lea.vmem %s3, %s181
      %s183 = smul.u32 16, %s19
      %p184 = scmp.lt.s32.totalorder %s18, 1
      %s185 = scalar_select %p184, %s18, 1
      %p186 = scmp.lt.s32.totalorder %s183, 15
      %s187 = scalar_select %p186, %s183, 15
      %s188 = smul.addr %s185, 16
      %s189 = sadd.s32 %s187, %s188
      %s190 = smul.addr %s189, 4
      %s191 = scalar_lea.vmem %s0, %s190
      %s192 = smul.u32 16, %s19
      %p193 = scmp.lt.s32.totalorder %s18, 1
      %s194 = scalar_select %p193, %s18, 1
      %s195 = smul.addr %s194, 8
      %s196 = scalar_lea.vmem %s3, %s195
      %p198 = scmp.eq.s32.totalorder %s19, 0
      // Predicated region
      $region33: #{foldnet_encoder_forward.8} parent=31 // pred_check
        %p199 = pneg %p198
      $region34: #{foldnet_encoder_forward.8} parent=31 // pred_check_branch
        %201 = sbr.rel (%p199) target = $region36
      $region35: #{foldnet_encoder_forward.8} parent=31 // pred_region
        %202 = vst [vmem:[#allocation2] sm:$0xff] -inf
      $region36: #{foldnet_encoder_forward.8} parent=31 // pred_fallthru
        _
      %v203 = vld [vmem:[%s191] sm:$0xf]
      %v204 = vld [vmem:[%s191 + $0x4] sm:$0xf]
      %v205 = vld [vmem:[%s191 + $0x8] sm:$0xf]
      %v206 = vld [vmem:[%s191 + $0xc] sm:$0xf]
      %v207 = vld [vmem:[%s191 + $0x10] sm:$0xf]
      %v208 = vld [vmem:[%s191 + $0x14] sm:$0xf]
      %v209 = vld [vmem:[%s191 + $0x18] sm:$0xf]
      %v210 = vld [vmem:[%s191 + $0x1c] sm:$0xf]
      %v211 = vld [vmem:[%s191 + $0x20] sm:$0xf]
      %v212 = vld [vmem:[%s191 + $0x24] sm:$0xf]
      %v213 = vld [vmem:[%s191 + $0x28] sm:$0xf]
      %v214 = vld [vmem:[%s191 + $0x2c] sm:$0xf]
      %v215 = vld [vmem:[%s191 + $0x30] sm:$0xf]
      %v216 = vld [vmem:[%s191 + $0x34] sm:$0xf]
      %v217 = vld [vmem:[%s191 + $0x38] sm:$0xf]
      %v218 = vld [vmem:[%s191 + $0x3c] sm:$0xf]
      %v219 = vld [vmem:[%s1] sm:$0xff]
      %v220 = vld [vmem:[%s1 + $0x8] sm:$0xff]
      %v221 = vld [vmem:[%s1 + $0x10] sm:$0xff]
      %v222 = vld [vmem:[%s1 + $0x18] sm:$0xff]
      %v223 = vld [vmem:[%s1 + $0x20] sm:$0xff]
      %v224 = vld [vmem:[%s1 + $0x28] sm:$0xff]
      %v225 = vld [vmem:[%s1 + $0x30] sm:$0xff]
      %v226 = vld [vmem:[%s1 + $0x38] sm:$0xff]
      %v227 = vld [vmem:[%s1 + $0x40] sm:$0xff]
      %v228 = vld [vmem:[%s1 + $0x48] sm:$0xff]
      %v229 = vld [vmem:[%s1 + $0x50] sm:$0xff]
      %v230 = vld [vmem:[%s1 + $0x58] sm:$0xff]
      %v231 = vld [vmem:[%s1 + $0x60] sm:$0xff]
      %v232 = vld [vmem:[%s1 + $0x68] sm:$0xff]
      %v233 = vld [vmem:[%s1 + $0x70] sm:$0xff]
      %v234 = vld [vmem:[%s1 + $0x78] sm:$0xff]
      %v235 = vld [vmem:[%s1 + $0x80] sm:$0xff]
      %v236 = vld [vmem:[%s1 + $0x88] sm:$0xff]
      %v237 = vld [vmem:[%s1 + $0x90] sm:$0xff]
      %v238 = vld [vmem:[%s1 + $0x98] sm:$0xff]
      %v239 = vld [vmem:[%s1 + $0xa0] sm:$0xff]
      %v240 = vld [vmem:[%s1 + $0xa8] sm:$0xff]
      %v241 = vld [vmem:[%s1 + $0xb0] sm:$0xff]
      %v242 = vld [vmem:[%s1 + $0xb8] sm:$0xff]
      %v243 = vld [vmem:[%s1 + $0xc0] sm:$0xff]
      %v244 = vld [vmem:[%s1 + $0xc8] sm:$0xff]
      %v245 = vld [vmem:[%s1 + $0xd0] sm:$0xff]
      %v246 = vld [vmem:[%s1 + $0xd8] sm:$0xff]
      %v247 = vld [vmem:[%s1 + $0xe0] sm:$0xff]
      %v248 = vld [vmem:[%s1 + $0xe8] sm:$0xff]
      %v249 = vld [vmem:[%s1 + $0xf0] sm:$0xff]
      %v250 = vld [vmem:[%s1 + $0xf8] sm:$0xff]
      %v251 = vld [vmem:[%s1 + $0x100] sm:$0xff]
      %v252 = vld [vmem:[%s1 + $0x108] sm:$0xff]
      %v253 = vld [vmem:[%s1 + $0x110] sm:$0xff]
      %v254 = vld [vmem:[%s1 + $0x118] sm:$0xff]
      %v255 = vld [vmem:[%s1 + $0x120] sm:$0xff]
      %v256 = vld [vmem:[%s1 + $0x128] sm:$0xff]
      %v257 = vld [vmem:[%s1 + $0x130] sm:$0xff]
      %v258 = vld [vmem:[%s1 + $0x138] sm:$0xff]
      %v259 = vld [vmem:[%s1 + $0x140] sm:$0xff]
      %v260 = vld [vmem:[%s1 + $0x148] sm:$0xff]
      %v261 = vld [vmem:[%s1 + $0x150] sm:$0xff]
      %v262 = vld [vmem:[%s1 + $0x158] sm:$0xff]
      %v263 = vld [vmem:[%s1 + $0x160] sm:$0xff]
      %v264 = vld [vmem:[%s1 + $0x168] sm:$0xff]
      %v265 = vld [vmem:[%s1 + $0x170] sm:$0xff]
      %v266 = vld [vmem:[%s1 + $0x178] sm:$0xff]
      %v267 = vld [vmem:[%s1 + $0x180] sm:$0xff]
      %v268 = vld [vmem:[%s1 + $0x188] sm:$0xff]
      %v269 = vld [vmem:[%s1 + $0x190] sm:$0xff]
      %v270 = vld [vmem:[%s1 + $0x198] sm:$0xff]
      %v271 = vld [vmem:[%s1 + $0x1a0] sm:$0xff]
      %v272 = vld [vmem:[%s1 + $0x1a8] sm:$0xff]
      %v273 = vld [vmem:[%s1 + $0x1b0] sm:$0xff]
      %v274 = vld [vmem:[%s1 + $0x1b8] sm:$0xff]
      %v275 = vld [vmem:[%s1 + $0x1c0] sm:$0xff]
      %v276 = vld [vmem:[%s1 + $0x1c8] sm:$0xff]
      %v277 = vld [vmem:[%s1 + $0x1d0] sm:$0xff]
      %v278 = vld [vmem:[%s1 + $0x1d8] sm:$0xff]
      %v279 = vld [vmem:[%s1 + $0x1e0] sm:$0xff]
      %v280 = vld [vmem:[%s1 + $0x1e8] sm:$0xff]
      %v281 = vld [vmem:[%s1 + $0x1f0] sm:$0xff]
      %v282 = vld [vmem:[%s1 + $0x1f8] sm:$0xff]
      %v299 = vunpack.c.l.b16 %v203
      %v300 = vunpack.c.l.b16 %v204
      %v301 = vunpack.c.l.b16 %v205
      %v302 = vunpack.c.l.b16 %v206
      %v303 = vunpack.c.l.b16 %v207
      %v304 = vunpack.c.l.b16 %v208
      %v305 = vunpack.c.l.b16 %v209
      %v306 = vunpack.c.l.b16 %v210
      %v307 = vunpack.c.l.b16 %v211
      %v308 = vunpack.c.l.b16 %v212
      %v309 = vunpack.c.l.b16 %v213
      %v310 = vunpack.c.l.b16 %v214
      %v311 = vunpack.c.l.b16 %v215
      %v312 = vunpack.c.l.b16 %v216
      %v313 = vunpack.c.l.b16 %v217
      %v314 = vunpack.c.l.b16 %v218
      %v315 = vpack.c.b16 %v300, %v299
      %v316 = vpack.c.b16 %v302, %v301
      %v317 = vpack.c.b16 %v304, %v303
      %v318 = vpack.c.b16 %v306, %v305
      %v319 = vpack.c.b16 %v308, %v307
      %v320 = vpack.c.b16 %v310, %v309
      %v321 = vpack.c.b16 %v312, %v311
      %v322 = vpack.c.b16 %v314, %v313
      %v395 = vunpack.c.l.b16 %v219
      %v396 = vunpack.c.h.b16 %v219
      %v397 = vunpack.c.l.b16 %v220
      %v398 = vunpack.c.h.b16 %v220
      %v399 = vunpack.c.l.b16 %v221
      %v400 = vunpack.c.h.b16 %v221
      %v401 = vunpack.c.l.b16 %v222
      %v402 = vunpack.c.h.b16 %v222
      %v403 = vunpack.c.l.b16 %v223
      %v404 = vunpack.c.h.b16 %v223
      %v405 = vunpack.c.l.b16 %v224
      %v406 = vunpack.c.h.b16 %v224
      %v407 = vunpack.c.l.b16 %v225
      %v408 = vunpack.c.h.b16 %v225
      %v409 = vunpack.c.l.b16 %v226
      %v410 = vunpack.c.h.b16 %v226
      %v411 = vunpack.c.l.b16 %v227
      %v412 = vunpack.c.h.b16 %v227
      %v413 = vunpack.c.l.b16 %v228
      %v414 = vunpack.c.h.b16 %v228
      %v415 = vunpack.c.l.b16 %v229
      %v416 = vunpack.c.h.b16 %v229
      %v417 = vunpack.c.l.b16 %v230
      %v418 = vunpack.c.h.b16 %v230
      %v419 = vunpack.c.l.b16 %v231
      %v420 = vunpack.c.h.b16 %v231
      %v421 = vunpack.c.l.b16 %v232
      %v422 = vunpack.c.h.b16 %v232
      %v423 = vunpack.c.l.b16 %v233
      %v424 = vunpack.c.h.b16 %v233
      %v425 = vunpack.c.l.b16 %v234
      %v426 = vunpack.c.h.b16 %v234
      %v427 = vunpack.c.l.b16 %v235
      %v428 = vunpack.c.h.b16 %v235
      %v429 = vunpack.c.l.b16 %v236
      %v430 = vunpack.c.h.b16 %v236
      %v431 = vunpack.c.l.b16 %v237
      %v432 = vunpack.c.h.b16 %v237
      %v433 = vunpack.c.l.b16 %v238
      %v434 = vunpack.c.h.b16 %v238
      %v435 = vunpack.c.l.b16 %v239
      %v436 = vunpack.c.h.b16 %v239
      %v437 = vunpack.c.l.b16 %v240
      %v438 = vunpack.c.h.b16 %v240
      %v439 = vunpack.c.l.b16 %v241
      %v440 = vunpack.c.h.b16 %v241
      %v441 = vunpack.c.l.b16 %v242
      %v442 = vunpack.c.h.b16 %v242
      %v443 = vunpack.c.l.b16 %v243
      %v444 = vunpack.c.h.b16 %v243
      %v445 = vunpack.c.l.b16 %v244
      %v446 = vunpack.c.h.b16 %v244
      %v447 = vunpack.c.l.b16 %v245
      %v448 = vunpack.c.h.b16 %v245
      %v449 = vunpack.c.l.b16 %v246
      %v450 = vunpack.c.h.b16 %v246
      %v451 = vunpack.c.l.b16 %v247
      %v452 = vunpack.c.h.b16 %v247
      %v453 = vunpack.c.l.b16 %v248
      %v454 = vunpack.c.h.b16 %v248
      %v455 = vunpack.c.l.b16 %v249
      %v456 = vunpack.c.h.b16 %v249
      %v457 = vunpack.c.l.b16 %v250
      %v458 = vunpack.c.h.b16 %v250
      %v459 = vunpack.c.l.b16 %v251
      %v460 = vunpack.c.h.b16 %v251
      %v461 = vunpack.c.l.b16 %v252
      %v462 = vunpack.c.h.b16 %v252
      %v463 = vunpack.c.l.b16 %v253
      %v464 = vunpack.c.h.b16 %v253
      %v465 = vunpack.c.l.b16 %v254
      %v466 = vunpack.c.h.b16 %v254
      %v467 = vunpack.c.l.b16 %v255
      %v468 = vunpack.c.h.b16 %v255
      %v469 = vunpack.c.l.b16 %v256
      %v470 = vunpack.c.h.b16 %v256
      %v471 = vunpack.c.l.b16 %v257
      %v472 = vunpack.c.h.b16 %v257
      %v473 = vunpack.c.l.b16 %v258
      %v474 = vunpack.c.h.b16 %v258
      %v475 = vunpack.c.l.b16 %v259
      %v476 = vunpack.c.h.b16 %v259
      %v477 = vunpack.c.l.b16 %v260
      %v478 = vunpack.c.h.b16 %v260
      %v479 = vunpack.c.l.b16 %v261
      %v480 = vunpack.c.h.b16 %v261
      %v481 = vunpack.c.l.b16 %v262
      %v482 = vunpack.c.h.b16 %v262
      %v483 = vunpack.c.l.b16 %v263
      %v484 = vunpack.c.h.b16 %v263
      %v485 = vunpack.c.l.b16 %v264
      %v486 = vunpack.c.h.b16 %v264
      %v487 = vunpack.c.l.b16 %v265
      %v488 = vunpack.c.h.b16 %v265
      %v489 = vunpack.c.l.b16 %v266
      %v490 = vunpack.c.h.b16 %v266
      %v491 = vunpack.c.l.b16 %v267
      %v492 = vunpack.c.h.b16 %v267
      %v493 = vunpack.c.l.b16 %v268
      %v494 = vunpack.c.h.b16 %v268
      %v495 = vunpack.c.l.b16 %v269
      %v496 = vunpack.c.h.b16 %v269
      %v497 = vunpack.c.l.b16 %v270
      %v498 = vunpack.c.h.b16 %v270
      %v499 = vunpack.c.l.b16 %v271
      %v500 = vunpack.c.h.b16 %v271
      %v501 = vunpack.c.l.b16 %v272
      %v502 = vunpack.c.h.b16 %v272
      %v503 = vunpack.c.l.b16 %v273
      %v504 = vunpack.c.h.b16 %v273
      %v505 = vunpack.c.l.b16 %v274
      %v506 = vunpack.c.h.b16 %v274
      %v507 = vunpack.c.l.b16 %v275
      %v508 = vunpack.c.h.b16 %v275
      %v509 = vunpack.c.l.b16 %v276
      %v510 = vunpack.c.h.b16 %v276
      %v511 = vunpack.c.l.b16 %v277
      %v512 = vunpack.c.h.b16 %v277
      %v513 = vunpack.c.l.b16 %v278
      %v514 = vunpack.c.h.b16 %v278
      %v515 = vunpack.c.l.b16 %v279
      %v516 = vunpack.c.h.b16 %v279
      %v517 = vunpack.c.l.b16 %v280
      %v518 = vunpack.c.h.b16 %v280
      %v519 = vunpack.c.l.b16 %v281
      %v520 = vunpack.c.h.b16 %v281
      %v521 = vunpack.c.l.b16 %v282
      %v522 = vunpack.c.h.b16 %v282
      %v523 = vpack.c.b16 %v403, %v395
      %v524 = vpack.c.b16 %v404, %v396
      %v525 = vpack.c.b16 %v405, %v397
      %v526 = vpack.c.b16 %v406, %v398
      %v527 = vpack.c.b16 %v407, %v399
      %v528 = vpack.c.b16 %v408, %v400
      %v529 = vpack.c.b16 %v409, %v401
      %v530 = vpack.c.b16 %v410, %v402
      %v531 = vpack.c.b16 %v419, %v411
      %v532 = vpack.c.b16 %v420, %v412
      %v533 = vpack.c.b16 %v421, %v413
      %v534 = vpack.c.b16 %v422, %v414
      %v535 = vpack.c.b16 %v423, %v415
      %v536 = vpack.c.b16 %v424, %v416
      %v537 = vpack.c.b16 %v425, %v417
      %v538 = vpack.c.b16 %v426, %v418
      %v539 = vpack.c.b16 %v435, %v427
      %v540 = vpack.c.b16 %v436, %v428
      %v541 = vpack.c.b16 %v437, %v429
      %v542 = vpack.c.b16 %v438, %v430
      %v543 = vpack.c.b16 %v439, %v431
      %v544 = vpack.c.b16 %v440, %v432
      %v545 = vpack.c.b16 %v441, %v433
      %v546 = vpack.c.b16 %v442, %v434
      %v547 = vpack.c.b16 %v451, %v443
      %v548 = vpack.c.b16 %v452, %v444
      %v549 = vpack.c.b16 %v453, %v445
      %v550 = vpack.c.b16 %v454, %v446
      %v551 = vpack.c.b16 %v455, %v447
      %v552 = vpack.c.b16 %v456, %v448
      %v553 = vpack.c.b16 %v457, %v449
      %v554 = vpack.c.b16 %v458, %v450
      %v555 = vpack.c.b16 %v467, %v459
      %v556 = vpack.c.b16 %v468, %v460
      %v557 = vpack.c.b16 %v469, %v461
      %v558 = vpack.c.b16 %v470, %v462
      %v559 = vpack.c.b16 %v471, %v463
      %v560 = vpack.c.b16 %v472, %v464
      %v561 = vpack.c.b16 %v473, %v465
      %v562 = vpack.c.b16 %v474, %v466
      %v563 = vpack.c.b16 %v483, %v475
      %v564 = vpack.c.b16 %v484, %v476
      %v565 = vpack.c.b16 %v485, %v477
      %v566 = vpack.c.b16 %v486, %v478
      %v567 = vpack.c.b16 %v487, %v479
      %v568 = vpack.c.b16 %v488, %v480
      %v569 = vpack.c.b16 %v489, %v481
      %v570 = vpack.c.b16 %v490, %v482
      %v571 = vpack.c.b16 %v499, %v491
      %v572 = vpack.c.b16 %v500, %v492
      %v573 = vpack.c.b16 %v501, %v493
      %v574 = vpack.c.b16 %v502, %v494
      %v575 = vpack.c.b16 %v503, %v495
      %v576 = vpack.c.b16 %v504, %v496
      %v577 = vpack.c.b16 %v505, %v497
      %v578 = vpack.c.b16 %v506, %v498
      %v579 = vpack.c.b16 %v515, %v507
      %v580 = vpack.c.b16 %v516, %v508
      %v581 = vpack.c.b16 %v517, %v509
      %v582 = vpack.c.b16 %v518, %v510
      %v583 = vpack.c.b16 %v519, %v511
      %v584 = vpack.c.b16 %v520, %v512
      %v585 = vpack.c.b16 %v521, %v513
      %v586 = vpack.c.b16 %v522, %v514
      %651 = vmatprep.subr.bf16.mxu0 %v524
      %652 = vmatpush1.bf16.msra.mxu0 %v523
      %653 = vmatprep.subr.bf16.mxu0 %v532
      %654 = vmatpush1.bf16.msra.mxu0 %v531
      %655 = vmatprep.subr.bf16.mxu0 %v540
      %656 = vmatpush1.bf16.msra.mxu0 %v539
      %657 = vmatprep.subr.bf16.mxu0 %v548
      %658 = vmatpush1.bf16.msra.mxu0 %v547
      %659 = vmatprep.subr.bf16.mxu0 %v556
      %660 = vmatpush1.bf16.msra.mxu0 %v555
      %661 = vmatprep.subr.bf16.mxu0 %v564
      %662 = vmatpush1.bf16.msra.mxu0 %v563
      %663 = vmatprep.subr.bf16.mxu0 %v572
      %664 = vmatpush1.bf16.msra.mxu0 %v571
      %665 = vmatprep.subr.bf16.mxu0 %v580
      %666 = vmatpush1.bf16.msra.mxu0 %v579
      %667 = vmatprep.subr.bf16.mxu0 0
      %668 = vmatpush1.bf16.msra.mxu0 0
      %669 = vmatprep.subr.bf16.mxu0 0
      %670 = vmatpush1.bf16.msra.mxu0 0
      %671 = vmatprep.subr.bf16.mxu0 0
      %672 = vmatpush1.bf16.msra.mxu0 0
      %673 = vmatprep.subr.bf16.mxu0 0
      %674 = vmatpush1.bf16.msra.mxu0 0
      %675 = vmatprep.subr.bf16.mxu0 0
      %676 = vmatpush1.bf16.msra.mxu0 0
      %677 = vmatprep.subr.bf16.mxu0 0
      %678 = vmatpush1.bf16.msra.mxu0 0
      %679 = vmatprep.subr.bf16.mxu0 0
      %680 = vmatpush1.bf16.msra.mxu0 0
      %681 = vmatprep.subr.bf16.mxu0 0
      %682 = vmatpush1.bf16.msra.mxu0 0
      %683 = vmatprep.mubr.bf16.mxu0 0
      %684 = vmatmul.mubr.bf16.gmra.mrb[0].mxu0 %v315
      %v685 = vpop.f32.mrb[0].mxu0
      %v686 = vadd.f32 0.0, %v685
      %v687 = vpop.f32.mrb[0].mxu0
      %v688 = vadd.f32 0.0, %v687
      %v689 = vpop.f32.mrb[0].mxu0
      %v690 = vadd.f32 0.0, %v689
      %v691 = vpop.f32.mrb[0].mxu0
      %v692 = vadd.f32 0.0, %v691
      %693 = vmatprep.mubr.bf16.mxu0 0
      %694 = vmatmul.mubr.bf16.gmra.mrb[0].mxu0 %v316
      %v695 = vpop.f32.mrb[0].mxu0
      %v696 = vadd.f32 0.0, %v695
      %v697 = vpop.f32.mrb[0].mxu0
      %v698 = vadd.f32 0.0, %v697
      %v699 = vpop.f32.mrb[0].mxu0
      %v700 = vadd.f32 0.0, %v699
      %v701 = vpop.f32.mrb[0].mxu0
      %v702 = vadd.f32 0.0, %v701
      %703 = vmatprep.mubr.bf16.mxu0 0
      %704 = vmatmul.mubr.bf16.gmra.mrb[0].mxu0 %v317
      %v705 = vpop.f32.mrb[0].mxu0
      %v706 = vadd.f32 0.0, %v705
      %v707 = vpop.f32.mrb[0].mxu0
      %v708 = vadd.f32 0.0, %v707
      %v709 = vpop.f32.mrb[0].mxu0
      %v710 = vadd.f32 0.0, %v709
      %v711 = vpop.f32.mrb[0].mxu0
      %v712 = vadd.f32 0.0, %v711
      %713 = vmatprep.mubr.bf16.mxu0 0
      %714 = vmatmul.mubr.bf16.gmra.mrb[0].mxu0 %v318
      %v715 = vpop.f32.mrb[0].mxu0
      %v716 = vadd.f32 0.0, %v715
      %v717 = vpop.f32.mrb[0].mxu0
      %v718 = vadd.f32 0.0, %v717
      %v719 = vpop.f32.mrb[0].mxu0
      %v720 = vadd.f32 0.0, %v719
      %v721 = vpop.f32.mrb[0].mxu0
      %v722 = vadd.f32 0.0, %v721
      %723 = vmatprep.mubr.bf16.mxu0 0
      %724 = vmatmul.mubr.bf16.gmra.mrb[0].mxu0 %v319
      %v725 = vpop.f32.mrb[0].mxu0
      %v726 = vadd.f32 0.0, %v725
      %v727 = vpop.f32.mrb[0].mxu0
      %v728 = vadd.f32 0.0, %v727
      %v729 = vpop.f32.mrb[0].mxu0
      %v730 = vadd.f32 0.0, %v729
      %v731 = vpop.f32.mrb[0].mxu0
      %v732 = vadd.f32 0.0, %v731
      %733 = vmatprep.mubr.bf16.mxu0 0
      %734 = vmatmul.mubr.bf16.gmra.mrb[0].mxu0 %v320
      %v735 = vpop.f32.mrb[0].mxu0
      %v736 = vadd.f32 0.0, %v735
      %v737 = vpop.f32.mrb[0].mxu0
      %v738 = vadd.f32 0.0, %v737
      %v739 = vpop.f32.mrb[0].mxu0
      %v740 = vadd.f32 0.0, %v739
      %v741 = vpop.f32.mrb[0].mxu0
      %v742 = vadd.f32 0.0, %v741
      %743 = vmatprep.mubr.bf16.mxu0 0
      %744 = vmatmul.mubr.bf16.gmra.mrb[0].mxu0 %v321
      %v745 = vpop.f32.mrb[0].mxu0
      %v746 = vadd.f32 0.0, %v745
      %v747 = vpop.f32.mrb[0].mxu0
      %v748 = vadd.f32 0.0, %v747
      %v749 = vpop.f32.mrb[0].mxu0
      %v750 = vadd.f32 0.0, %v749
      %v751 = vpop.f32.mrb[0].mxu0
      %v752 = vadd.f32 0.0, %v751
      %753 = vmatprep.mubr.bf16.mxu0 0
      %754 = vmatmul.mubr.bf16.gmra.mrb[0].mxu0 %v322
      %v755 = vpop.f32.mrb[0].mxu0
      %v756 = vadd.f32 0.0, %v755
      %v757 = vpop.f32.mrb[0].mxu0
      %v758 = vadd.f32 0.0, %v757
      %v759 = vpop.f32.mrb[0].mxu0
      %v760 = vadd.f32 0.0, %v759
      %v761 = vpop.f32.mrb[0].mxu0
      %v762 = vadd.f32 0.0, %v761
      %763 = vdwg.mxu0
      %764 = vmatprep.subr.bf16.mxu0 %v526
      %765 = vmatpush1.bf16.msra.mxu0 %v525
      %766 = vmatprep.subr.bf16.mxu0 %v534
      %767 = vmatpush1.bf16.msra.mxu0 %v533
      %768 = vmatprep.subr.bf16.mxu0 %v542
      %769 = vmatpush1.bf16.msra.mxu0 %v541
      %770 = vmatprep.subr.bf16.mxu0 %v550
      %771 = vmatpush1.bf16.msra.mxu0 %v549
      %772 = vmatprep.subr.bf16.mxu0 %v558
      %773 = vmatpush1.bf16.msra.mxu0 %v557
      %774 = vmatprep.subr.bf16.mxu0 %v566
      %775 = vmatpush1.bf16.msra.mxu0 %v565
      %776 = vmatprep.subr.bf16.mxu0 %v574
      %777 = vmatpush1.bf16.msra.mxu0 %v573
      %778 = vmatprep.subr.bf16.mxu0 %v582
      %779 = vmatpush1.bf16.msra.mxu0 %v581
      %780 = vmatprep.subr.bf16.mxu0 0
      %781 = vmatpush1.bf16.msra.mxu0 0
      %782 = vmatprep.subr.bf16.mxu0 0
      %783 = vmatpush1.bf16.msra.mxu0 0
      %784 = vmatprep.subr.bf16.mxu0 0
      %785 = vmatpush1.bf16.msra.mxu0 0
      %786 = vmatprep.subr.bf16.mxu0 0
      %787 = vmatpush1.bf16.msra.mxu0 0
      %788 = vmatprep.subr.bf16.mxu0 0
      %789 = vmatpush1.bf16.msra.mxu0 0
      %790 = vmatprep.subr.bf16.mxu0 0
      %791 = vmatpush1.bf16.msra.mxu0 0
      %792 = vmatprep.subr.bf16.mxu0 0
      %793 = vmatpush1.bf16.msra.mxu0 0
      %794 = vmatprep.subr.bf16.mxu0 0
      %795 = vmatpush1.bf16.msra.mxu0 0
      %796 = vmatprep.mubr.bf16.mxu0 0
      %797 = vmatmul.mubr.bf16.gmra.mrb[0].mxu0 %v315
      %v798 = vpop.f32.mrb[0].mxu0
      %v799 = vadd.f32 0.0, %v798
      %v800 = vpop.f32.mrb[0].mxu0
      %v801 = vadd.f32 0.0, %v800
      %v802 = vpop.f32.mrb[0].mxu0
      %v803 = vadd.f32 0.0, %v802
      %v804 = vpop.f32.mrb[0].mxu0
      %v805 = vadd.f32 0.0, %v804
      %806 = vmatprep.mubr.bf16.mxu0 0
      %807 = vmatmul.mubr.bf16.gmra.mrb[0].mxu0 %v316
      %v808 = vpop.f32.mrb[0].mxu0
      %v809 = vadd.f32 0.0, %v808
      %v810 = vpop.f32.mrb[0].mxu0
      %v811 = vadd.f32 0.0, %v810
      %v812 = vpop.f32.mrb[0].mxu0
      %v813 = vadd.f32 0.0, %v812
      %v814 = vpop.f32.mrb[0].mxu0
      %v815 = vadd.f32 0.0, %v814
      %816 = vmatprep.mubr.bf16.mxu0 0
      %817 = vmatmul.mubr.bf16.gmra.mrb[0].mxu0 %v317
      %v818 = vpop.f32.mrb[0].mxu0
      %v819 = vadd.f32 0.0, %v818
      %v820 = vpop.f32.mrb[0].mxu0
      %v821 = vadd.f32 0.0, %v820
      %v822 = vpop.f32.mrb[0].mxu0
      %v823 = vadd.f32 0.0, %v822
      %v824 = vpop.f32.mrb[0].mxu0
      %v825 = vadd.f32 0.0, %v824
      %826 = vmatprep.mubr.bf16.mxu0 0
      %827 = vmatmul.mubr.bf16.gmra.mrb[0].mxu0 %v318
      %v828 = vpop.f32.mrb[0].mxu0
      %v829 = vadd.f32 0.0, %v828
      %v830 = vpop.f32.mrb[0].mxu0
      %v831 = vadd.f32 0.0, %v830
      %v832 = vpop.f32.mrb[0].mxu0
      %v833 = vadd.f32 0.0, %v832
      %v834 = vpop.f32.mrb[0].mxu0
      %v835 = vadd.f32 0.0, %v834
      %836 = vmatprep.mubr.bf16.mxu0 0
      %837 = vmatmul.mubr.bf16.gmra.mrb[0].mxu0 %v319
      %v838 = vpop.f32.mrb[0].mxu0
      %v839 = vadd.f32 0.0, %v838
      %v840 = vpop.f32.mrb[0].mxu0
      %v841 = vadd.f32 0.0, %v840
      %v842 = vpop.f32.mrb[0].mxu0
      %v843 = vadd.f32 0.0, %v842
      %v844 = vpop.f32.mrb[0].mxu0
      %v845 = vadd.f32 0.0, %v844
      %846 = vmatprep.mubr.bf16.mxu0 0
      %847 = vmatmul.mubr.bf16.gmra.mrb[0].mxu0 %v320
      %v848 = vpop.f32.mrb[0].mxu0
      %v849 = vadd.f32 0.0, %v848
      %v850 = vpop.f32.mrb[0].mxu0
      %v851 = vadd.f32 0.0, %v850
      %v852 = vpop.f32.mrb[0].mxu0
      %v853 = vadd.f32 0.0, %v852
      %v854 = vpop.f32.mrb[0].mxu0
      %v855 = vadd.f32 0.0, %v854
      %856 = vmatprep.mubr.bf16.mxu0 0
      %857 = vmatmul.mubr.bf16.gmra.mrb[0].mxu0 %v321
      %v858 = vpop.f32.mrb[0].mxu0
      %v859 = vadd.f32 0.0, %v858
      %v860 = vpop.f32.mrb[0].mxu0
      %v861 = vadd.f32 0.0, %v860
      %v862 = vpop.f32.mrb[0].mxu0
      %v863 = vadd.f32 0.0, %v862
      %v864 = vpop.f32.mrb[0].mxu0
      %v865 = vadd.f32 0.0, %v864
      %866 = vmatprep.mubr.bf16.mxu0 0
      %867 = vmatmul.mubr.bf16.gmra.mrb[0].mxu0 %v322
      %v868 = vpop.f32.mrb[0].mxu0
      %v869 = vadd.f32 0.0, %v868
      %v870 = vpop.f32.mrb[0].mxu0
      %v871 = vadd.f32 0.0, %v870
      %v872 = vpop.f32.mrb[0].mxu0
      %v873 = vadd.f32 0.0, %v872
      %v874 = vpop.f32.mrb[0].mxu0
      %v875 = vadd.f32 0.0, %v874
      %876 = vdwg.mxu0
      %877 = vmatprep.subr.bf16.mxu0 %v528
      %878 = vmatpush1.bf16.msra.mxu0 %v527
      %879 = vmatprep.subr.bf16.mxu0 %v536
      %880 = vmatpush1.bf16.msra.mxu0 %v535
      %881 = vmatprep.subr.bf16.mxu0 %v544
      %882 = vmatpush1.bf16.msra.mxu0 %v543
      %883 = vmatprep.subr.bf16.mxu0 %v552
      %884 = vmatpush1.bf16.msra.mxu0 %v551
      %885 = vmatprep.subr.bf16.mxu0 %v560
      %886 = vmatpush1.bf16.msra.mxu0 %v559
      %887 = vmatprep.subr.bf16.mxu0 %v568
      %888 = vmatpush1.bf16.msra.mxu0 %v567
      %889 = vmatprep.subr.bf16.mxu0 %v576
      %890 = vmatpush1.bf16.msra.mxu0 %v575
      %891 = vmatprep.subr.bf16.mxu0 %v584
      %892 = vmatpush1.bf16.msra.mxu0 %v583
      %893 = vmatprep.subr.bf16.mxu0 0
      %894 = vmatpush1.bf16.msra.mxu0 0
      %895 = vmatprep.subr.bf16.mxu0 0
      %896 = vmatpush1.bf16.msra.mxu0 0
      %897 = vmatprep.subr.bf16.mxu0 0
      %898 = vmatpush1.bf16.msra.mxu0 0
      %899 = vmatprep.subr.bf16.mxu0 0
      %900 = vmatpush1.bf16.msra.mxu0 0
      %901 = vmatprep.subr.bf16.mxu0 0
      %902 = vmatpush1.bf16.msra.mxu0 0
      %903 = vmatprep.subr.bf16.mxu0 0
      %904 = vmatpush1.bf16.msra.mxu0 0
      %905 = vmatprep.subr.bf16.mxu0 0
      %906 = vmatpush1.bf16.msra.mxu0 0
      %907 = vmatprep.subr.bf16.mxu0 0
      %908 = vmatpush1.bf16.msra.mxu0 0
      %909 = vmatprep.mubr.bf16.mxu0 0
      %910 = vmatmul.mubr.bf16.gmra.mrb[0].mxu0 %v315
      %v911 = vpop.f32.mrb[0].mxu0
      %v912 = vadd.f32 0.0, %v911
      %v913 = vpop.f32.mrb[0].mxu0
      %v914 = vadd.f32 0.0, %v913
      %v915 = vpop.f32.mrb[0].mxu0
      %v916 = vadd.f32 0.0, %v915
      %v917 = vpop.f32.mrb[0].mxu0
      %v918 = vadd.f32 0.0, %v917
      %919 = vmatprep.mubr.bf16.mxu0 0
      %920 = vmatmul.mubr.bf16.gmra.mrb[0].mxu0 %v316
      %v921 = vpop.f32.mrb[0].mxu0
      %v922 = vadd.f32 0.0, %v921
      %v923 = vpop.f32.mrb[0].mxu0
      %v924 = vadd.f32 0.0, %v923
      %v925 = vpop.f32.mrb[0].mxu0
      %v926 = vadd.f32 0.0, %v925
      %v927 = vpop.f32.mrb[0].mxu0
      %v928 = vadd.f32 0.0, %v927
      %929 = vmatprep.mubr.bf16.mxu0 0
      %930 = vmatmul.mubr.bf16.gmra.mrb[0].mxu0 %v317
      %v931 = vpop.f32.mrb[0].mxu0
      %v932 = vadd.f32 0.0, %v931
      %v933 = vpop.f32.mrb[0].mxu0
      %v934 = vadd.f32 0.0, %v933
      %v935 = vpop.f32.mrb[0].mxu0
      %v936 = vadd.f32 0.0, %v935
      %v937 = vpop.f32.mrb[0].mxu0
      %v938 = vadd.f32 0.0, %v937
      %939 = vmatprep.mubr.bf16.mxu0 0
      %940 = vmatmul.mubr.bf16.gmra.mrb[0].mxu0 %v318
      %v941 = vpop.f32.mrb[0].mxu0
      %v942 = vadd.f32 0.0, %v941
      %v943 = vpop.f32.mrb[0].mxu0
      %v944 = vadd.f32 0.0, %v943
      %v945 = vpop.f32.mrb[0].mxu0
      %v946 = vadd.f32 0.0, %v945
      %v947 = vpop.f32.mrb[0].mxu0
      %v948 = vadd.f32 0.0, %v947
      %949 = vmatprep.mubr.bf16.mxu0 0
      %950 = vmatmul.mubr.bf16.gmra.mrb[0].mxu0 %v319
      %v951 = vpop.f32.mrb[0].mxu0
      %v952 = vadd.f32 0.0, %v951
      %v953 = vpop.f32.mrb[0].mxu0
      %v954 = vadd.f32 0.0, %v953
      %v955 = vpop.f32.mrb[0].mxu0
      %v956 = vadd.f32 0.0, %v955
      %v957 = vpop.f32.mrb[0].mxu0
      %v958 = vadd.f32 0.0, %v957
      %959 = vmatprep.mubr.bf16.mxu0 0
      %960 = vmatmul.mubr.bf16.gmra.mrb[0].mxu0 %v320
      %v961 = vpop.f32.mrb[0].mxu0
      %v962 = vadd.f32 0.0, %v961
      %v963 = vpop.f32.mrb[0].mxu0
      %v964 = vadd.f32 0.0, %v963
      %v965 = vpop.f32.mrb[0].mxu0
      %v966 = vadd.f32 0.0, %v965
      %v967 = vpop.f32.mrb[0].mxu0
      %v968 = vadd.f32 0.0, %v967
      %969 = vmatprep.mubr.bf16.mxu0 0
      %970 = vmatmul.mubr.bf16.gmra.mrb[0].mxu0 %v321
      %v971 = vpop.f32.mrb[0].mxu0
      %v972 = vadd.f32 0.0, %v971
      %v973 = vpop.f32.mrb[0].mxu0
      %v974 = vadd.f32 0.0, %v973
      %v975 = vpop.f32.mrb[0].mxu0
      %v976 = vadd.f32 0.0, %v975
      %v977 = vpop.f32.mrb[0].mxu0
      %v978 = vadd.f32 0.0, %v977
      %979 = vmatprep.mubr.bf16.mxu0 0
      %980 = vmatmul.mubr.bf16.gmra.mrb[0].mxu0 %v322
      %v981 = vpop.f32.mrb[0].mxu0
      %v982 = vadd.f32 0.0, %v981
      %v983 = vpop.f32.mrb[0].mxu0
      %v984 = vadd.f32 0.0, %v983
      %v985 = vpop.f32.mrb[0].mxu0
      %v986 = vadd.f32 0.0, %v985
      %v987 = vpop.f32.mrb[0].mxu0
      %v988 = vadd.f32 0.0, %v987
      %989 = vdwg.mxu0
      %990 = vmatprep.subr.bf16.mxu0 %v530
      %991 = vmatpush1.bf16.msra.mxu0 %v529
      %992 = vmatprep.subr.bf16.mxu0 %v538
      %993 = vmatpush1.bf16.msra.mxu0 %v537
      %994 = vmatprep.subr.bf16.mxu0 %v546
      %995 = vmatpush1.bf16.msra.mxu0 %v545
      %996 = vmatprep.subr.bf16.mxu0 %v554
      %997 = vmatpush1.bf16.msra.mxu0 %v553
      %998 = vmatprep.subr.bf16.mxu0 %v562
      %999 = vmatpush1.bf16.msra.mxu0 %v561
      %1000 = vmatprep.subr.bf16.mxu0 %v570
      %1001 = vmatpush1.bf16.msra.mxu0 %v569
      %1002 = vmatprep.subr.bf16.mxu0 %v578
      %1003 = vmatpush1.bf16.msra.mxu0 %v577
      %1004 = vmatprep.subr.bf16.mxu0 %v586
      %1005 = vmatpush1.bf16.msra.mxu0 %v585
      %1006 = vmatprep.subr.bf16.mxu0 0
      %1007 = vmatpush1.bf16.msra.mxu0 0
      %1008 = vmatprep.subr.bf16.mxu0 0
      %1009 = vmatpush1.bf16.msra.mxu0 0
      %1010 = vmatprep.subr.bf16.mxu0 0
      %1011 = vmatpush1.bf16.msra.mxu0 0
      %1012 = vmatprep.subr.bf16.mxu0 0
      %1013 = vmatpush1.bf16.msra.mxu0 0
      %1014 = vmatprep.subr.bf16.mxu0 0
      %1015 = vmatpush1.bf16.msra.mxu0 0
      %1016 = vmatprep.subr.bf16.mxu0 0
      %1017 = vmatpush1.bf16.msra.mxu0 0
      %1018 = vmatprep.subr.bf16.mxu0 0
      %1019 = vmatpush1.bf16.msra.mxu0 0
      %1020 = vmatprep.subr.bf16.mxu0 0
      %1021 = vmatpush1.bf16.msra.mxu0 0
      %1022 = vmatprep.mubr.bf16.mxu0 0
      %1023 = vmatmul.mubr.bf16.gmra.mrb[0].mxu0 %v315
      %v1024 = vpop.f32.mrb[0].mxu0
      %v1025 = vadd.f32 0.0, %v1024
      %v1026 = vpop.f32.mrb[0].mxu0
      %v1027 = vadd.f32 0.0, %v1026
      %v1028 = vpop.f32.mrb[0].mxu0
      %v1029 = vadd.f32 0.0, %v1028
      %v1030 = vpop.f32.mrb[0].mxu0
      %v1031 = vadd.f32 0.0, %v1030
      %1032 = vmatprep.mubr.bf16.mxu0 0
      %1033 = vmatmul.mubr.bf16.gmra.mrb[0].mxu0 %v316
      %v1034 = vpop.f32.mrb[0].mxu0
      %v1035 = vadd.f32 0.0, %v1034
      %v1036 = vpop.f32.mrb[0].mxu0
      %v1037 = vadd.f32 0.0, %v1036
      %v1038 = vpop.f32.mrb[0].mxu0
      %v1039 = vadd.f32 0.0, %v1038
      %v1040 = vpop.f32.mrb[0].mxu0
      %v1041 = vadd.f32 0.0, %v1040
      %1042 = vmatprep.mubr.bf16.mxu0 0
      %1043 = vmatmul.mubr.bf16.gmra.mrb[0].mxu0 %v317
      %v1044 = vpop.f32.mrb[0].mxu0
      %v1045 = vadd.f32 0.0, %v1044
      %v1046 = vpop.f32.mrb[0].mxu0
      %v1047 = vadd.f32 0.0, %v1046
      %v1048 = vpop.f32.mrb[0].mxu0
      %v1049 = vadd.f32 0.0, %v1048
      %v1050 = vpop.f32.mrb[0].mxu0
      %v1051 = vadd.f32 0.0, %v1050
      %1052 = vmatprep.mubr.bf16.mxu0 0
      %1053 = vmatmul.mubr.bf16.gmra.mrb[0].mxu0 %v318
      %v1054 = vpop.f32.mrb[0].mxu0
      %v1055 = vadd.f32 0.0, %v1054
      %v1056 = vpop.f32.mrb[0].mxu0
      %v1057 = vadd.f32 0.0, %v1056
      %v1058 = vpop.f32.mrb[0].mxu0
      %v1059 = vadd.f32 0.0, %v1058
      %v1060 = vpop.f32.mrb[0].mxu0
      %v1061 = vadd.f32 0.0, %v1060
      %1062 = vmatprep.mubr.bf16.mxu0 0
      %1063 = vmatmul.mubr.bf16.gmra.mrb[0].mxu0 %v319
      %v1064 = vpop.f32.mrb[0].mxu0
      %v1065 = vadd.f32 0.0, %v1064
      %v1066 = vpop.f32.mrb[0].mxu0
      %v1067 = vadd.f32 0.0, %v1066
      %v1068 = vpop.f32.mrb[0].mxu0
      %v1069 = vadd.f32 0.0, %v1068
      %v1070 = vpop.f32.mrb[0].mxu0
      %v1071 = vadd.f32 0.0, %v1070
      %1072 = vmatprep.mubr.bf16.mxu0 0
      %1073 = vmatmul.mubr.bf16.gmra.mrb[0].mxu0 %v320
      %v1074 = vpop.f32.mrb[0].mxu0
      %v1075 = vadd.f32 0.0, %v1074
      %v1076 = vpop.f32.mrb[0].mxu0
      %v1077 = vadd.f32 0.0, %v1076
      %v1078 = vpop.f32.mrb[0].mxu0
      %v1079 = vadd.f32 0.0, %v1078
      %v1080 = vpop.f32.mrb[0].mxu0
      %v1081 = vadd.f32 0.0, %v1080
      %1082 = vmatprep.mubr.bf16.mxu0 0
      %1083 = vmatmul.mubr.bf16.gmra.mrb[0].mxu0 %v321
      %v1084 = vpop.f32.mrb[0].mxu0
      %v1085 = vadd.f32 0.0, %v1084
      %v1086 = vpop.f32.mrb[0].mxu0
      %v1087 = vadd.f32 0.0, %v1086
      %v1088 = vpop.f32.mrb[0].mxu0
      %v1089 = vadd.f32 0.0, %v1088
      %v1090 = vpop.f32.mrb[0].mxu0
      %v1091 = vadd.f32 0.0, %v1090
      %1092 = vmatprep.mubr.bf16.mxu0 0
      %1093 = vmatmul.mubr.bf16.gmra.mrb[0].mxu0 %v322
      %v1094 = vpop.f32.mrb[0].mxu0
      %v1095 = vadd.f32 0.0, %v1094
      %v1096 = vpop.f32.mrb[0].mxu0
      %v1097 = vadd.f32 0.0, %v1096
      %v1098 = vpop.f32.mrb[0].mxu0
      %v1099 = vadd.f32 0.0, %v1098
      %v1100 = vpop.f32.mrb[0].mxu0
      %v1101 = vadd.f32 0.0, %v1100
      %1102 = vdwg.mxu0
      %v1103 = vld [vmem:[#allocation2] sm:$0xff]
      %v1104 = vmax.f32 %v686, %v690
      %v1105 = vmax.f32 %v1104, %v696
      %v1106 = vmax.f32 %v1105, %v700
      %v1107 = vmax.f32 %v1106, %v706
      %v1108 = vmax.f32 %v1107, %v710
      %v1109 = vmax.f32 %v1108, %v716
      %v1110 = vmax.f32 %v1109, %v720
      %v1111 = vmax.f32 %v1110, %v726
      %v1112 = vmax.f32 %v1111, %v730
      %v1113 = vmax.f32 %v1112, %v736
      %v1114 = vmax.f32 %v1113, %v740
      %v1115 = vmax.f32 %v1114, %v746
      %v1116 = vmax.f32 %v1115, %v750
      %v1117 = vmax.f32 %v1116, %v756
      %v1118 = vmax.f32 %v1117, %v760
      %v1119 = vrot.slane %v1118, 4
      %v1120 = vmax.f32 %v1118, %v1119
      %v1121 = vrot.slane %v1120, 2
      %v1122 = vmax.f32 %v1120, %v1121
      %v1123 = vrot.slane %v1122, 1
      %v1124 = vmax.f32 %v1122, %v1123
      %v1125 = vmax.f32 %v688, %v692
      %v1126 = vmax.f32 %v1125, %v698
      %v1127 = vmax.f32 %v1126, %v702
      %v1128 = vmax.f32 %v1127, %v708
      %v1129 = vmax.f32 %v1128, %v712
      %v1130 = vmax.f32 %v1129, %v718
      %v1131 = vmax.f32 %v1130, %v722
      %v1132 = vmax.f32 %v1131, %v728
      %v1133 = vmax.f32 %v1132, %v732
      %v1134 = vmax.f32 %v1133, %v738
      %v1135 = vmax.f32 %v1134, %v742
      %v1136 = vmax.f32 %v1135, %v748
      %v1137 = vmax.f32 %v1136, %v752
      %v1138 = vmax.f32 %v1137, %v758
      %v1139 = vmax.f32 %v1138, %v762
      %v1140 = vrot.slane %v1139, 4
      %v1141 = vmax.f32 %v1139, %v1140
      %v1142 = vrot.slane %v1141, 2
      %v1143 = vmax.f32 %v1141, %v1142
      %v1144 = vrot.slane %v1143, 1
      %v1145 = vmax.f32 %v1143, %v1144
      %v1146 = vmax.f32 %v799, %v803
      %v1147 = vmax.f32 %v1146, %v809
      %v1148 = vmax.f32 %v1147, %v813
      %v1149 = vmax.f32 %v1148, %v819
      %v1150 = vmax.f32 %v1149, %v823
      %v1151 = vmax.f32 %v1150, %v829
      %v1152 = vmax.f32 %v1151, %v833
      %v1153 = vmax.f32 %v1152, %v839
      %v1154 = vmax.f32 %v1153, %v843
      %v1155 = vmax.f32 %v1154, %v849
      %v1156 = vmax.f32 %v1155, %v853
      %v1157 = vmax.f32 %v1156, %v859
      %v1158 = vmax.f32 %v1157, %v863
      %v1159 = vmax.f32 %v1158, %v869
      %v1160 = vmax.f32 %v1159, %v873
      %v1161 = vrot.slane %v1160, 4
      %v1162 = vmax.f32 %v1160, %v1161
      %v1163 = vrot.slane %v1162, 2
      %v1164 = vmax.f32 %v1162, %v1163
      %v1165 = vrot.slane %v1164, 1
      %v1166 = vmax.f32 %v1164, %v1165
      %v1167 = vmax.f32 %v801, %v805
      %v1168 = vmax.f32 %v1167, %v811
      %v1169 = vmax.f32 %v1168, %v815
      %v1170 = vmax.f32 %v1169, %v821
      %v1171 = vmax.f32 %v1170, %v825
      %v1172 = vmax.f32 %v1171, %v831
      %v1173 = vmax.f32 %v1172, %v835
      %v1174 = vmax.f32 %v1173, %v841
      %v1175 = vmax.f32 %v1174, %v845
      %v1176 = vmax.f32 %v1175, %v851
      %v1177 = vmax.f32 %v1176, %v855
      %v1178 = vmax.f32 %v1177, %v861
      %v1179 = vmax.f32 %v1178, %v865
      %v1180 = vmax.f32 %v1179, %v871
      %v1181 = vmax.f32 %v1180, %v875
      %v1182 = vrot.slane %v1181, 4
      %v1183 = vmax.f32 %v1181, %v1182
      %v1184 = vrot.slane %v1183, 2
      %v1185 = vmax.f32 %v1183, %v1184
      %v1186 = vrot.slane %v1185, 1
      %v1187 = vmax.f32 %v1185, %v1186
      %v1188 = vmax.f32 %v912, %v916
      %v1189 = vmax.f32 %v1188, %v922
      %v1190 = vmax.f32 %v1189, %v926
      %v1191 = vmax.f32 %v1190, %v932
      %v1192 = vmax.f32 %v1191, %v936
      %v1193 = vmax.f32 %v1192, %v942
      %v1194 = vmax.f32 %v1193, %v946
      %v1195 = vmax.f32 %v1194, %v952
      %v1196 = vmax.f32 %v1195, %v956
      %v1197 = vmax.f32 %v1196, %v962
      %v1198 = vmax.f32 %v1197, %v966
      %v1199 = vmax.f32 %v1198, %v972
      %v1200 = vmax.f32 %v1199, %v976
      %v1201 = vmax.f32 %v1200, %v982
      %v1202 = vmax.f32 %v1201, %v986
      %v1203 = vrot.slane %v1202, 4
      %v1204 = vmax.f32 %v1202, %v1203
      %v1205 = vrot.slane %v1204, 2
      %v1206 = vmax.f32 %v1204, %v1205
      %v1207 = vrot.slane %v1206, 1
      %v1208 = vmax.f32 %v1206, %v1207
      %v1209 = vmax.f32 %v914, %v918
      %v1210 = vmax.f32 %v1209, %v924
      %v1211 = vmax.f32 %v1210, %v928
      %v1212 = vmax.f32 %v1211, %v934
      %v1213 = vmax.f32 %v1212, %v938
      %v1214 = vmax.f32 %v1213, %v944
      %v1215 = vmax.f32 %v1214, %v948
      %v1216 = vmax.f32 %v1215, %v954
      %v1217 = vmax.f32 %v1216, %v958
      %v1218 = vmax.f32 %v1217, %v964
      %v1219 = vmax.f32 %v1218, %v968
      %v1220 = vmax.f32 %v1219, %v974
      %v1221 = vmax.f32 %v1220, %v978
      %v1222 = vmax.f32 %v1221, %v984
      %v1223 = vmax.f32 %v1222, %v988
      %v1224 = vrot.slane %v1223, 4
      %v1225 = vmax.f32 %v1223, %v1224
      %v1226 = vrot.slane %v1225, 2
      %v1227 = vmax.f32 %v1225, %v1226
      %v1228 = vrot.slane %v1227, 1
      %v1229 = vmax.f32 %v1227, %v1228
      %v1230 = vmax.f32 %v1025, %v1029
      %v1231 = vmax.f32 %v1230, %v1035
      %v1232 = vmax.f32 %v1231, %v1039
      %v1233 = vmax.f32 %v1232, %v1045
      %v1234 = vmax.f32 %v1233, %v1049
      %v1235 = vmax.f32 %v1234, %v1055
      %v1236 = vmax.f32 %v1235, %v1059
      %v1237 = vmax.f32 %v1236, %v1065
      %v1238 = vmax.f32 %v1237, %v1069
      %v1239 = vmax.f32 %v1238, %v1075
      %v1240 = vmax.f32 %v1239, %v1079
      %v1241 = vmax.f32 %v1240, %v1085
      %v1242 = vmax.f32 %v1241, %v1089
      %v1243 = vmax.f32 %v1242, %v1095
      %v1244 = vmax.f32 %v1243, %v1099
      %v1245 = vrot.slane %v1244, 4
      %v1246 = vmax.f32 %v1244, %v1245
      %v1247 = vrot.slane %v1246, 2
      %v1248 = vmax.f32 %v1246, %v1247
      %v1249 = vrot.slane %v1248, 1
      %v1250 = vmax.f32 %v1248, %v1249
      %v1251 = vmax.f32 %v1027, %v1031
      %v1252 = vmax.f32 %v1251, %v1037
      %v1253 = vmax.f32 %v1252, %v1041
      %v1254 = vmax.f32 %v1253, %v1047
      %v1255 = vmax.f32 %v1254, %v1051
      %v1256 = vmax.f32 %v1255, %v1057
      %v1257 = vmax.f32 %v1256, %v1061
      %v1258 = vmax.f32 %v1257, %v1067
      %v1259 = vmax.f32 %v1258, %v1071
      %v1260 = vmax.f32 %v1259, %v1077
      %v1261 = vmax.f32 %v1260, %v1081
      %v1262 = vmax.f32 %v1261, %v1087
      %v1263 = vmax.f32 %v1262, %v1091
      %v1264 = vmax.f32 %v1263, %v1097
      %v1265 = vmax.f32 %v1264, %v1101
      %v1266 = vrot.slane %v1265, 4
      %v1267 = vmax.f32 %v1265, %v1266
      %v1268 = vrot.slane %v1267, 2
      %v1269 = vmax.f32 %v1267, %v1268
      %v1270 = vrot.slane %v1269, 1
      %v1271 = vmax.f32 %v1269, %v1270
      %v1280 = vcombine.low %v1124, %v1145
      %v1281 = vcombine.low %v1166, %v1187
      %v1282 = vcombine.low %v1208, %v1229
      %v1283 = vcombine.low %v1250, %v1271
      %v1285 = vunpack.c.l.s4 1966171168
      %v1286 = vunpack.c.0.s8 %v1285
      %v1287 = vlaneseq
      %v1288 = vshrl.u32 %v1287, 7
      %v1289 = vsub.s32 %v1286, %v1288
      %v1290 = vrot.slane %v1280, %v1289
      %v1292 = vunpack.c.l.s4 1966171168
      %v1293 = vunpack.c.0.s8 %v1292
      %v1294 = vlaneseq
      %v1295 = vshrl.u32 %v1294, 7
      %v1296 = vsub.s32 %v1293, %v1295
      %v1297 = vrot.slane %v1281, %v1296
      %v1299 = vunpack.c.l.s4 1966171168
      %v1300 = vunpack.c.0.s8 %v1299
      %v1301 = vlaneseq
      %v1302 = vshrl.u32 %v1301, 7
      %v1303 = vsub.s32 %v1300, %v1302
      %v1304 = vrot.slane %v1282, %v1303
      %v1306 = vunpack.c.l.s4 1966171168
      %v1307 = vunpack.c.0.s8 %v1306
      %v1308 = vlaneseq
      %v1309 = vshrl.u32 %v1308, 7
      %v1310 = vsub.s32 %v1307, %v1309
      %v1311 = vrot.slane %v1283, %v1310
      %v1312 = vcombine.low %v1290, %v1297
      %v1313 = vcombine.low %v1304, %v1311
      %v1315 = vunpack.c.l.s4 1966171168
      %v1316 = vunpack.c.0.s8 %v1315
      %v1317 = vlaneseq
      %v1318 = vshrl.u32 %v1317, 7
      %v1319 = vsub.s32 %v1316, %v1318
      %v1320 = vrot.slane %v1312, %v1319
      %v1322 = vunpack.c.l.s4 1966171168
      %v1323 = vunpack.c.0.s8 %v1322
      %v1324 = vlaneseq
      %v1325 = vshrl.u32 %v1324, 7
      %v1326 = vsub.s32 %v1323, %v1325
      %v1327 = vrot.slane %v1313, %v1326
      %v1328 = vcombine.low %v1320, %v1327
      %v1330 = vmax.f32 %v1103, %v1328
      %1331 = vst [vmem:[#allocation2] sm:$0xff] %v1330
      // Predicated region
      $region37: #{foldnet_encoder_forward.8} parent=31 // pred_check
        %p1332 = pneg %p198
      $region38: #{foldnet_encoder_forward.8} parent=31 // pred_check_branch
        %1334 = sbr.rel (%p1332) target = $region40
      $region39: #{foldnet_encoder_forward.8} parent=31 // pred_region
        %v1335 = vld [vmem:[#allocation2] sm:$0xff]
        %v1336 = vld [vmem:[%s2] sm:$0xff]
        %v1337 = vadd.f32 %v1335, %v1336
        %1338 = vst [vmem:[%s196] sm:$0xff] %v1337
      $region40: #{foldnet_encoder_forward.8} parent=31 // pred_fallthru
        _
      %p1339 = scmp.lt.s32.totalorder %s18, 1
      %s1340 = scalar_select %p1339, %s18, 1
      %s1341 = smul.addr %s1340, 8
      %s1342 = scalar_lea.vmem %s3, %s1341
      // Predicated region
      $region41: #{foldnet_encoder_forward.8} parent=31 // pred_check
        %p1343 = pneg %p114
      $region42: #{foldnet_encoder_forward.8} parent=31 // pred_check_branch
        %1345 = sbr.rel (%p1343) target = $region44
      $region43: #{foldnet_encoder_forward.8} parent=31 // pred_region
        _
      $region44: #{foldnet_encoder_forward.8} parent=31 // pred_fallthru
        _
    $region32: #{foldnet_encoder_forward.8} parent=5 // pred_fallthru
      _
    %p1346 = scmp.le.s32.totalorder 2, %s9
    // Predicated region
    $region45: #{foldnet_encoder_forward.8} parent=5 // pred_check
      %p1347 = pneg %p1346
    $region46: #{foldnet_encoder_forward.8} parent=5 // pred_check_branch
      %1349 = sbr.rel (%p1347) target = $region48
    $region47: #{foldnet_encoder_forward.8} parent=5 // pred_region
      %s1350 = ssub.s32 %s9, 2
      // Predicated region
      $region49: #{foldnet_encoder_forward.8} parent=47 // pred_check
        %p1351 = pneg %p120
      $region50: #{foldnet_encoder_forward.8} parent=47 // pred_check_branch
        %1353 = sbr.rel (%p1351) target = $region52
      $region51: #{foldnet_encoder_forward.8} parent=47 // pred_region
        %p1354 = scmp.lt.s32.totalorder %s20, 1
        %s1355 = scalar_select %p1354, %s20, 1
        %s1356 = smul.addr %s1355, 8
        %s1357 = scalar_lea.vmem %s3, %s1356
      $region52: #{foldnet_encoder_forward.8} parent=47 // pred_fallthru
        _
    $region48: #{foldnet_encoder_forward.8} parent=5 // pred_fallthru
      _
  $region6: #{foldnet_encoder_forward.8} parent=0 // loop_footer
    %s13 = sadd.s32 1, %s9
  $region7: #{foldnet_encoder_forward.8} parent=0 // loop_footer_branch
    %8 = sbr.rel target = $region3
  $region8: #{foldnet_encoder_forward.8} parent=0 // loop_exit
    _

// kernel: foldnet_encoder_forward.9
$region0: #{foldnet_encoder_forward.9}
  #allocation0 [shape = 'u32[]', space=smem, size = 0x4, offset = 0x4, fixed_abs, tag = 'smem constant byte address 0x4 - core index']
  #allocation1 [shape = 'u32[144,128]{1,0:T(1,128)}', space=vmem, size = 0x12000, scoped, tag = 'internal scratch']
  %s0 = inlined_call_operand.vmem [shape: f32[8,1024], index: 0, kind: input, shape index: {}]
  %s1 = inlined_call_operand.vmem [shape: bf16[1024,512], index: 1, kind: input, shape index: {}]
  %s2 = inlined_call_operand.vmem [shape: f32[1,512], index: 2, kind: input, shape index: {}]
  %s3 = inlined_call_operand.vmem [shape: bf16[512,32], index: 3, kind: input, shape index: {}]
  %s4 = inlined_call_operand.vmem [shape: f32[1,32], index: 4, kind: input, shape index: {}]
  %s5 = inlined_call_operand.vmem [shape: f32[8,32], index: 5, kind: output, shape index: {}]
  %s6 = sld [smem:[#allocation0]]
  $region30: #{foldnet_encoder_forward.9} parent=0
    _
  %s8 = ssub.s32 1, %s6
  %s9 = scalar_select 0, %s8, %s6
  // Predicated region
  $region2: #{foldnet_encoder_forward.9} parent=0 // pred_check
    _
  $region3: #{foldnet_encoder_forward.9} parent=0 // pred_check_branch
    %11 = sbr.rel (0) target = $region5
  $region4: #{foldnet_encoder_forward.9} parent=0 // pred_region
    _
  $region5: #{foldnet_encoder_forward.9} parent=0 // pred_fallthru
    _
  // Predicated region
  $region6: #{foldnet_encoder_forward.9} parent=0 // pred_check
    _
  $region7: #{foldnet_encoder_forward.9} parent=0 // pred_check_branch
    %13 = sbr.rel (0) target = $region9
  $region8: #{foldnet_encoder_forward.9} parent=0 // pred_region
    _
  $region9: #{foldnet_encoder_forward.9} parent=0 // pred_fallthru
    _
  // Predicated region
  $region10: #{foldnet_encoder_forward.9} parent=0 // pred_check
    _
  $region11: #{foldnet_encoder_forward.9} parent=0 // pred_check_branch
    %15 = sbr.rel (0) target = $region13
  $region12: #{foldnet_encoder_forward.9} parent=0 // pred_region
    _
  $region13: #{foldnet_encoder_forward.9} parent=0 // pred_fallthru
    _
  // Predicated region
  $region14: #{foldnet_encoder_forward.9} parent=0 // pred_check
    _
  $region15: #{foldnet_encoder_forward.9} parent=0 // pred_check_branch
    %17 = sbr.rel (0) target = $region17
  $region16: #{foldnet_encoder_forward.9} parent=0 // pred_region
    _
  $region17: #{foldnet_encoder_forward.9} parent=0 // pred_fallthru
    _
  // Predicated region
  $region18: #{foldnet_encoder_forward.9} parent=0 // pred_check
    _
  $region19: #{foldnet_encoder_forward.9} parent=0 // pred_check_branch
    %19 = sbr.rel (0) target = $region21
  $region20: #{foldnet_encoder_forward.9} parent=0 // pred_region
    _
  $region21: #{foldnet_encoder_forward.9} parent=0 // pred_fallthru
    _
  %v21 = vld [vmem:[%s0] sm:$0xff]
  %v22 = vld [vmem:[%s0 + $0x8] sm:$0xff]
  %v23 = vld [vmem:[%s0 + $0x10] sm:$0xff]
  %v24 = vld [vmem:[%s0 + $0x18] sm:$0xff]
  %v25 = vld [vmem:[%s0 + $0x20] sm:$0xff]
  %v26 = vld [vmem:[%s0 + $0x28] sm:$0xff]
  %v27 = vld [vmem:[%s0 + $0x30] sm:$0xff]
  %v28 = vld [vmem:[%s0 + $0x38] sm:$0xff]
  %v29 = vld [vmem:[%s1] sm:$0xff]
  %v30 = vld [vmem:[%s1 + $0x8] sm:$0xff]
  %v31 = vld [vmem:[%s1 + $0x10] sm:$0xff]
  %v32 = vld [vmem:[%s1 + $0x18] sm:$0xff]
  %v33 = vld [vmem:[%s1 + $0x20] sm:$0xff]
  %v34 = vld [vmem:[%s1 + $0x28] sm:$0xff]
  %v35 = vld [vmem:[%s1 + $0x30] sm:$0xff]
  %v36 = vld [vmem:[%s1 + $0x38] sm:$0xff]
  %v37 = vld [vmem:[%s1 + $0x40] sm:$0xff]
  %v38 = vld [vmem:[%s1 + $0x48] sm:$0xff]
  %v39 = vld [vmem:[%s1 + $0x50] sm:$0xff]
  %v40 = vld [vmem:[%s1 + $0x58] sm:$0xff]
  %v41 = vld [vmem:[%s1 + $0x60] sm:$0xff]
  %v42 = vld [vmem:[%s1 + $0x68] sm:$0xff]
  %v43 = vld [vmem:[%s1 + $0x70] sm:$0xff]
  %v44 = vld [vmem:[%s1 + $0x78] sm:$0xff]
  %v45 = vld [vmem:[%s1 + $0x80] sm:$0xff]
  %v46 = vld [vmem:[%s1 + $0x88] sm:$0xff]
  %v47 = vld [vmem:[%s1 + $0x90] sm:$0xff]
  %v48 = vld [vmem:[%s1 + $0x98] sm:$0xff]
  %v49 = vld [vmem:[%s1 + $0xa0] sm:$0xff]
  %v50 = vld [vmem:[%s1 + $0xa8] sm:$0xff]
  %v51 = vld [vmem:[%s1 + $0xb0] sm:$0xff]
  %v52 = vld [vmem:[%s1 + $0xb8] sm:$0xff]
  %v53 = vld [vmem:[%s1 + $0xc0] sm:$0xff]
  %v54 = vld [vmem:[%s1 + $0xc8] sm:$0xff]
  %v55 = vld [vmem:[%s1 + $0xd0] sm:$0xff]
  %v56 = vld [vmem:[%s1 + $0xd8] sm:$0xff]
  %v57 = vld [vmem:[%s1 + $0xe0] sm:$0xff]
  %v58 = vld [vmem:[%s1 + $0xe8] sm:$0xff]
  %v59 = vld [vmem:[%s1 + $0xf0] sm:$0xff]
  %v60 = vld [vmem:[%s1 + $0xf8] sm:$0xff]
  %v61 = vld [vmem:[%s1 + $0x100] sm:$0xff]
  %v62 = vld [vmem:[%s1 + $0x108] sm:$0xff]
  %v63 = vld [vmem:[%s1 + $0x110] sm:$0xff]
  %v64 = vld [vmem:[%s1 + $0x118] sm:$0xff]
  %v65 = vld [vmem:[%s1 + $0x120] sm:$0xff]
  %v66 = vld [vmem:[%s1 + $0x128] sm:$0xff]
  %v67 = vld [vmem:[%s1 + $0x130] sm:$0xff]
  %v68 = vld [vmem:[%s1 + $0x138] sm:$0xff]
  %v69 = vld [vmem:[%s1 + $0x140] sm:$0xff]
  %v70 = vld [vmem:[%s1 + $0x148] sm:$0xff]
  %v71 = vld [vmem:[%s1 + $0x150] sm:$0xff]
  %v72 = vld [vmem:[%s1 + $0x158] sm:$0xff]
  %v73 = vld [vmem:[%s1 + $0x160] sm:$0xff]
  %v74 = vld [vmem:[%s1 + $0x168] sm:$0xff]
  %v75 = vld [vmem:[%s1 + $0x170] sm:$0xff]
  %v76 = vld [vmem:[%s1 + $0x178] sm:$0xff]
  %v77 = vld [vmem:[%s1 + $0x180] sm:$0xff]
  %v78 = vld [vmem:[%s1 + $0x188] sm:$0xff]
  %v79 = vld [vmem:[%s1 + $0x190] sm:$0xff]
  %v80 = vld [vmem:[%s1 + $0x198] sm:$0xff]
  %v81 = vld [vmem:[%s1 + $0x1a0] sm:$0xff]
  %v82 = vld [vmem:[%s1 + $0x1a8] sm:$0xff]
  %v83 = vld [vmem:[%s1 + $0x1b0] sm:$0xff]
  %v84 = vld [vmem:[%s1 + $0x1b8] sm:$0xff]
  %v85 = vld [vmem:[%s1 + $0x1c0] sm:$0xff]
  %v86 = vld [vmem:[%s1 + $0x1c8] sm:$0xff]
  %v87 = vld [vmem:[%s1 + $0x1d0] sm:$0xff]
  %v88 = vld [vmem:[%s1 + $0x1d8] sm:$0xff]
  %v89 = vld [vmem:[%s1 + $0x1e0] sm:$0xff]
  %v90 = vld [vmem:[%s1 + $0x1e8] sm:$0xff]
  %v91 = vld [vmem:[%s1 + $0x1f0] sm:$0xff]
  %v92 = vld [vmem:[%s1 + $0x1f8] sm:$0xff]
  %v93 = vld [vmem:[%s1 + $0x200] sm:$0xff]
  %v94 = vld [vmem:[%s1 + $0x208] sm:$0xff]
  %v95 = vld [vmem:[%s1 + $0x210] sm:$0xff]
  %v96 = vld [vmem:[%s1 + $0x218] sm:$0xff]
  %v97 = vld [vmem:[%s1 + $0x220] sm:$0xff]
  %v98 = vld [vmem:[%s1 + $0x228] sm:$0xff]
  %v99 = vld [vmem:[%s1 + $0x230] sm:$0xff]
  %v100 = vld [vmem:[%s1 + $0x238] sm:$0xff]
  %v101 = vld [vmem:[%s1 + $0x240] sm:$0xff]
  %v102 = vld [vmem:[%s1 + $0x248] sm:$0xff]
  %v103 = vld [vmem:[%s1 + $0x250] sm:$0xff]
  %v104 = vld [vmem:[%s1 + $0x258] sm:$0xff]
  %v105 = vld [vmem:[%s1 + $0x260] sm:$0xff]
  %v106 = vld [vmem:[%s1 + $0x268] sm:$0xff]
  %v107 = vld [vmem:[%s1 + $0x270] sm:$0xff]
  %v108 = vld [vmem:[%s1 + $0x278] sm:$0xff]
  %v109 = vld [vmem:[%s1 + $0x280] sm:$0xff]
  %v110 = vld [vmem:[%s1 + $0x288] sm:$0xff]
  %v111 = vld [vmem:[%s1 + $0x290] sm:$0xff]
  %v112 = vld [vmem:[%s1 + $0x298] sm:$0xff]
  %v113 = vld [vmem:[%s1 + $0x2a0] sm:$0xff]
  %v114 = vld [vmem:[%s1 + $0x2a8] sm:$0xff]
  %v115 = vld [vmem:[%s1 + $0x2b0] sm:$0xff]
  %v116 = vld [vmem:[%s1 + $0x2b8] sm:$0xff]
  %v117 = vld [vmem:[%s1 + $0x2c0] sm:$0xff]
  %v118 = vld [vmem:[%s1 + $0x2c8] sm:$0xff]
  %v119 = vld [vmem:[%s1 + $0x2d0] sm:$0xff]
  %v120 = vld [vmem:[%s1 + $0x2d8] sm:$0xff]
  %v121 = vld [vmem:[%s1 + $0x2e0] sm:$0xff]
  %v122 = vld [vmem:[%s1 + $0x2e8] sm:$0xff]
  %v123 = vld [vmem:[%s1 + $0x2f0] sm:$0xff]
  %v124 = vld [vmem:[%s1 + $0x2f8] sm:$0xff]
  %v125 = vld [vmem:[%s1 + $0x300] sm:$0xff]
  %v126 = vld [vmem:[%s1 + $0x308] sm:$0xff]
  %v127 = vld [vmem:[%s1 + $0x310] sm:$0xff]
  %v128 = vld [vmem:[%s1 + $0x318] sm:$0xff]
  %v129 = vld [vmem:[%s1 + $0x320] sm:$0xff]
  %v130 = vld [vmem:[%s1 + $0x328] sm:$0xff]
  %v131 = vld [vmem:[%s1 + $0x330] sm:$0xff]
  %v132 = vld [vmem:[%s1 + $0x338] sm:$0xff]
  %v133 = vld [vmem:[%s1 + $0x340] sm:$0xff]
  %v134 = vld [vmem:[%s1 + $0x348] sm:$0xff]
  %v135 = vld [vmem:[%s1 + $0x350] sm:$0xff]
  %v136 = vld [vmem:[%s1 + $0x358] sm:$0xff]
  %v137 = vld [vmem:[%s1 + $0x360] sm:$0xff]
  %v138 = vld [vmem:[%s1 + $0x368] sm:$0xff]
  %v139 = vld [vmem:[%s1 + $0x370] sm:$0xff]
  %v140 = vld [vmem:[%s1 + $0x378] sm:$0xff]
  %v141 = vld [vmem:[%s1 + $0x380] sm:$0xff]
  %v142 = vld [vmem:[%s1 + $0x388] sm:$0xff]
  %v143 = vld [vmem:[%s1 + $0x390] sm:$0xff]
  %v144 = vld [vmem:[%s1 + $0x398] sm:$0xff]
  %v145 = vld [vmem:[%s1 + $0x3a0] sm:$0xff]
  %v146 = vld [vmem:[%s1 + $0x3a8] sm:$0xff]
  %v147 = vld [vmem:[%s1 + $0x3b0] sm:$0xff]
  %v148 = vld [vmem:[%s1 + $0x3b8] sm:$0xff]
  %v149 = vld [vmem:[%s1 + $0x3c0] sm:$0xff]
  %v150 = vld [vmem:[%s1 + $0x3c8] sm:$0xff]
  %v151 = vld [vmem:[%s1 + $0x3d0] sm:$0xff]
  %v152 = vld [vmem:[%s1 + $0x3d8] sm:$0xff]
  %v153 = vld [vmem:[%s1 + $0x3e0] sm:$0xff]
  %v154 = vld [vmem:[%s1 + $0x3e8] sm:$0xff]
  %v155 = vld [vmem:[%s1 + $0x3f0] sm:$0xff]
  %v156 = vld [vmem:[%s1 + $0x3f8] sm:$0xff]
  %v157 = vld [vmem:[%s1 + $0x400] sm:$0xff]
  %v158 = vld [vmem:[%s1 + $0x408] sm:$0xff]
  %v159 = vld [vmem:[%s1 + $0x410] sm:$0xff]
  %v160 = vld [vmem:[%s1 + $0x418] sm:$0xff]
  %v161 = vld [vmem:[%s1 + $0x420] sm:$0xff]
  %v162 = vld [vmem:[%s1 + $0x428] sm:$0xff]
  %v163 = vld [vmem:[%s1 + $0x430] sm:$0xff]
  %v164 = vld [vmem:[%s1 + $0x438] sm:$0xff]
  %v165 = vld [vmem:[%s1 + $0x440] sm:$0xff]
  %v166 = vld [vmem:[%s1 + $0x448] sm:$0xff]
  %v167 = vld [vmem:[%s1 + $0x450] sm:$0xff]
  %v168 = vld [vmem:[%s1 + $0x458] sm:$0xff]
  %v169 = vld [vmem:[%s1 + $0x460] sm:$0xff]
  %v170 = vld [vmem:[%s1 + $0x468] sm:$0xff]
  %v171 = vld [vmem:[%s1 + $0x470] sm:$0xff]
  %v172 = vld [vmem:[%s1 + $0x478] sm:$0xff]
  %v173 = vld [vmem:[%s1 + $0x480] sm:$0xff]
  %v174 = vld [vmem:[%s1 + $0x488] sm:$0xff]
  %v175 = vld [vmem:[%s1 + $0x490] sm:$0xff]
  %v176 = vld [vmem:[%s1 + $0x498] sm:$0xff]
  %v177 = vld [vmem:[%s1 + $0x4a0] sm:$0xff]
  %v178 = vld [vmem:[%s1 + $0x4a8] sm:$0xff]
  %v179 = vld [vmem:[%s1 + $0x4b0] sm:$0xff]
  %v180 = vld [vmem:[%s1 + $0x4b8] sm:$0xff]
  %v181 = vld [vmem:[%s1 + $0x4c0] sm:$0xff]
  %v182 = vld [vmem:[%s1 + $0x4c8] sm:$0xff]
  %v183 = vld [vmem:[%s1 + $0x4d0] sm:$0xff]
  %v184 = vld [vmem:[%s1 + $0x4d8] sm:$0xff]
  %v185 = vld [vmem:[%s1 + $0x4e0] sm:$0xff]
  %v186 = vld [vmem:[%s1 + $0x4e8] sm:$0xff]
  %v187 = vld [vmem:[%s1 + $0x4f0] sm:$0xff]
  %v188 = vld [vmem:[%s1 + $0x4f8] sm:$0xff]
  %v189 = vld [vmem:[%s1 + $0x500] sm:$0xff]
  %v190 = vld [vmem:[%s1 + $0x508] sm:$0xff]
  %v191 = vld [vmem:[%s1 + $0x510] sm:$0xff]
  %v192 = vld [vmem:[%s1 + $0x518] sm:$0xff]
  %v193 = vld [vmem:[%s1 + $0x520] sm:$0xff]
  %v194 = vld [vmem:[%s1 + $0x528] sm:$0xff]
  %v195 = vld [vmem:[%s1 + $0x530] sm:$0xff]
  %v196 = vld [vmem:[%s1 + $0x538] sm:$0xff]
  %v197 = vld [vmem:[%s1 + $0x540] sm:$0xff]
  %v198 = vld [vmem:[%s1 + $0x548] sm:$0xff]
  %v199 = vld [vmem:[%s1 + $0x550] sm:$0xff]
  %v200 = vld [vmem:[%s1 + $0x558] sm:$0xff]
  %v201 = vld [vmem:[%s1 + $0x560] sm:$0xff]
  %v202 = vld [vmem:[%s1 + $0x568] sm:$0xff]
  %v203 = vld [vmem:[%s1 + $0x570] sm:$0xff]
  %v204 = vld [vmem:[%s1 + $0x578] sm:$0xff]
  %v205 = vld [vmem:[%s1 + $0x580] sm:$0xff]
  %v206 = vld [vmem:[%s1 + $0x588] sm:$0xff]
  %v207 = vld [vmem:[%s1 + $0x590] sm:$0xff]
  %v208 = vld [vmem:[%s1 + $0x598] sm:$0xff]
  %v209 = vld [vmem:[%s1 + $0x5a0] sm:$0xff]
  %v210 = vld [vmem:[%s1 + $0x5a8] sm:$0xff]
  %v211 = vld [vmem:[%s1 + $0x5b0] sm:$0xff]
  %v212 = vld [vmem:[%s1 + $0x5b8] sm:$0xff]
  %v213 = vld [vmem:[%s1 + $0x5c0] sm:$0xff]
  %v214 = vld [vmem:[%s1 + $0x5c8] sm:$0xff]
  %v215 = vld [vmem:[%s1 + $0x5d0] sm:$0xff]
  %v216 = vld [vmem:[%s1 + $0x5d8] sm:$0xff]
  %v217 = vld [vmem:[%s1 + $0x5e0] sm:$0xff]
  %v218 = vld [vmem:[%s1 + $0x5e8] sm:$0xff]
  %v219 = vld [vmem:[%s1 + $0x5f0] sm:$0xff]
  %v220 = vld [vmem:[%s1 + $0x5f8] sm:$0xff]
  %v221 = vld [vmem:[%s1 + $0x600] sm:$0xff]
  %v222 = vld [vmem:[%s1 + $0x608] sm:$0xff]
  %v223 = vld [vmem:[%s1 + $0x610] sm:$0xff]
  %v224 = vld [vmem:[%s1 + $0x618] sm:$0xff]
  %v225 = vld [vmem:[%s1 + $0x620] sm:$0xff]
  %v226 = vld [vmem:[%s1 + $0x628] sm:$0xff]
  %v227 = vld [vmem:[%s1 + $0x630] sm:$0xff]
  %v228 = vld [vmem:[%s1 + $0x638] sm:$0xff]
  %v229 = vld [vmem:[%s1 + $0x640] sm:$0xff]
  %v230 = vld [vmem:[%s1 + $0x648] sm:$0xff]
  %v231 = vld [vmem:[%s1 + $0x650] sm:$0xff]
  %v232 = vld [vmem:[%s1 + $0x658] sm:$0xff]
  %v233 = vld [vmem:[%s1 + $0x660] sm:$0xff]
  %v234 = vld [vmem:[%s1 + $0x668] sm:$0xff]
  %v235 = vld [vmem:[%s1 + $0x670] sm:$0xff]
  %v236 = vld [vmem:[%s1 + $0x678] sm:$0xff]
  %v237 = vld [vmem:[%s1 + $0x680] sm:$0xff]
  %v238 = vld [vmem:[%s1 + $0x688] sm:$0xff]
  %v239 = vld [vmem:[%s1 + $0x690] sm:$0xff]
  %v240 = vld [vmem:[%s1 + $0x698] sm:$0xff]
  %v241 = vld [vmem:[%s1 + $0x6a0] sm:$0xff]
  %v242 = vld [vmem:[%s1 + $0x6a8] sm:$0xff]
  %v243 = vld [vmem:[%s1 + $0x6b0] sm:$0xff]
  %v244 = vld [vmem:[%s1 + $0x6b8] sm:$0xff]
  %v245 = vld [vmem:[%s1 + $0x6c0] sm:$0xff]
  %v246 = vld [vmem:[%s1 + $0x6c8] sm:$0xff]
  %v247 = vld [vmem:[%s1 + $0x6d0] sm:$0xff]
  %v248 = vld [vmem:[%s1 + $0x6d8] sm:$0xff]
  %v249 = vld [vmem:[%s1 + $0x6e0] sm:$0xff]
  %v250 = vld [vmem:[%s1 + $0x6e8] sm:$0xff]
  %v251 = vld [vmem:[%s1 + $0x6f0] sm:$0xff]
  %v252 = vld [vmem:[%s1 + $0x6f8] sm:$0xff]
  %v253 = vld [vmem:[%s1 + $0x700] sm:$0xff]
  %v254 = vld [vmem:[%s1 + $0x708] sm:$0xff]
  %v255 = vld [vmem:[%s1 + $0x710] sm:$0xff]
  %v256 = vld [vmem:[%s1 + $0x718] sm:$0xff]
  %v257 = vld [vmem:[%s1 + $0x720] sm:$0xff]
  %v258 = vld [vmem:[%s1 + $0x728] sm:$0xff]
  %v259 = vld [vmem:[%s1 + $0x730] sm:$0xff]
  %v260 = vld [vmem:[%s1 + $0x738] sm:$0xff]
  %v261 = vld [vmem:[%s1 + $0x740] sm:$0xff]
  %v262 = vld [vmem:[%s1 + $0x748] sm:$0xff]
  %v263 = vld [vmem:[%s1 + $0x750] sm:$0xff]
  %v264 = vld [vmem:[%s1 + $0x758] sm:$0xff]
  %v265 = vld [vmem:[%s1 + $0x760] sm:$0xff]
  %v266 = vld [vmem:[%s1 + $0x768] sm:$0xff]
  %v267 = vld [vmem:[%s1 + $0x770] sm:$0xff]
  %v268 = vld [vmem:[%s1 + $0x778] sm:$0xff]
  %v269 = vld [vmem:[%s1 + $0x780] sm:$0xff]
  %v270 = vld [vmem:[%s1 + $0x788] sm:$0xff]
  %v271 = vld [vmem:[%s1 + $0x790] sm:$0xff]
  %v272 = vld [vmem:[%s1 + $0x798] sm:$0xff]
  %v273 = vld [vmem:[%s1 + $0x7a0] sm:$0xff]
  %v274 = vld [vmem:[%s1 + $0x7a8] sm:$0xff]
  %v275 = vld [vmem:[%s1 + $0x7b0] sm:$0xff]
  %v276 = vld [vmem:[%s1 + $0x7b8] sm:$0xff]
  %v277 = vld [vmem:[%s1 + $0x7c0] sm:$0xff]
  %v278 = vld [vmem:[%s1 + $0x7c8] sm:$0xff]
  %v279 = vld [vmem:[%s1 + $0x7d0] sm:$0xff]
  %v280 = vld [vmem:[%s1 + $0x7d8] sm:$0xff]
  %v281 = vld [vmem:[%s1 + $0x7e0] sm:$0xff]
  %v282 = vld [vmem:[%s1 + $0x7e8] sm:$0xff]
  %v283 = vld [vmem:[%s1 + $0x7f0] sm:$0xff]
  %v284 = vld [vmem:[%s1 + $0x7f8] sm:$0xff]
  %v285 = vld [vmem:[%s2] sm:$0xf]
  %v286 = vpack.c.bf16 %v21, %v21
  %v287 = vpack.c.bf16 %v22, %v22
  %v288 = vpack.c.bf16 %v23, %v23
  %v289 = vpack.c.bf16 %v24, %v24
  %v290 = vpack.c.bf16 %v25, %v25
  %v291 = vpack.c.bf16 %v26, %v26
  %v292 = vpack.c.bf16 %v27, %v27
  %v293 = vpack.c.bf16 %v28, %v28
  %v295 = vlaneseq
  %v296 = vshrl.u32 %v295, 7
  %v297 = vsub.s32 0, %v296
  %v298 = vrot.slane %v285, %v297
  %v299 = vlaneseq
  %v300 = vshrl.u32 %v299, 7
  %v301 = vsub.s32 1, %v300
  %v302 = vrot.slane %v285, %v301
  %v303 = vlaneseq
  %v304 = vshrl.u32 %v303, 7
  %v305 = vsub.s32 2, %v304
  %v306 = vrot.slane %v285, %v305
  %v307 = vlaneseq
  %v308 = vshrl.u32 %v307, 7
  %v309 = vsub.s32 3, %v308
  %v310 = vrot.slane %v285, %v309
  %v571 = vunpack.c.l.b16 %v29
  %v572 = vunpack.c.h.b16 %v29
  %v573 = vunpack.c.l.b16 %v30
  %v574 = vunpack.c.h.b16 %v30
  %v575 = vunpack.c.l.b16 %v31
  %v576 = vunpack.c.h.b16 %v31
  %v577 = vunpack.c.l.b16 %v32
  %v578 = vunpack.c.h.b16 %v32
  %v579 = vunpack.c.l.b16 %v33
  %v580 = vunpack.c.h.b16 %v33
  %v581 = vunpack.c.l.b16 %v34
  %v582 = vunpack.c.h.b16 %v34
  %v583 = vunpack.c.l.b16 %v35
  %v584 = vunpack.c.h.b16 %v35
  %v585 = vunpack.c.l.b16 %v36
  %v586 = vunpack.c.h.b16 %v36
  %v587 = vunpack.c.l.b16 %v37
  %v588 = vunpack.c.h.b16 %v37
  %v589 = vunpack.c.l.b16 %v38
  %v590 = vunpack.c.h.b16 %v38
  %v591 = vunpack.c.l.b16 %v39
  %v592 = vunpack.c.h.b16 %v39
  %v593 = vunpack.c.l.b16 %v40
  %v594 = vunpack.c.h.b16 %v40
  %v595 = vunpack.c.l.b16 %v41
  %v596 = vunpack.c.h.b16 %v41
  %v597 = vunpack.c.l.b16 %v42
  %v598 = vunpack.c.h.b16 %v42
  %v599 = vunpack.c.l.b16 %v43
  %v600 = vunpack.c.h.b16 %v43
  %v601 = vunpack.c.l.b16 %v44
  %v602 = vunpack.c.h.b16 %v44
  %v603 = vunpack.c.l.b16 %v45
  %v604 = vunpack.c.h.b16 %v45
  %v605 = vunpack.c.l.b16 %v46
  %v606 = vunpack.c.h.b16 %v46
  %v607 = vunpack.c.l.b16 %v47
  %v608 = vunpack.c.h.b16 %v47
  %v609 = vunpack.c.l.b16 %v48
  %v610 = vunpack.c.h.b16 %v48
  %v611 = vunpack.c.l.b16 %v49
  %v612 = vunpack.c.h.b16 %v49
  %v613 = vunpack.c.l.b16 %v50
  %v614 = vunpack.c.h.b16 %v50
  %v615 = vunpack.c.l.b16 %v51
  %v616 = vunpack.c.h.b16 %v51
  %v617 = vunpack.c.l.b16 %v52
  %v618 = vunpack.c.h.b16 %v52
  %v619 = vunpack.c.l.b16 %v53
  %v620 = vunpack.c.h.b16 %v53
  %v621 = vunpack.c.l.b16 %v54
  %v622 = vunpack.c.h.b16 %v54
  %v623 = vunpack.c.l.b16 %v55
  %v624 = vunpack.c.h.b16 %v55
  %v625 = vunpack.c.l.b16 %v56
  %v626 = vunpack.c.h.b16 %v56
  %v627 = vunpack.c.l.b16 %v57
  %v628 = vunpack.c.h.b16 %v57
  %v629 = vunpack.c.l.b16 %v58
  %v630 = vunpack.c.h.b16 %v58
  %v631 = vunpack.c.l.b16 %v59
  %v632 = vunpack.c.h.b16 %v59
  %v633 = vunpack.c.l.b16 %v60
  %v634 = vunpack.c.h.b16 %v60
  %v635 = vunpack.c.l.b16 %v61
  %v636 = vunpack.c.h.b16 %v61
  %v637 = vunpack.c.l.b16 %v62
  %v638 = vunpack.c.h.b16 %v62
  %v639 = vunpack.c.l.b16 %v63
  %v640 = vunpack.c.h.b16 %v63
  %v641 = vunpack.c.l.b16 %v64
  %v642 = vunpack.c.h.b16 %v64
  %v643 = vunpack.c.l.b16 %v65
  %v644 = vunpack.c.h.b16 %v65
  %v645 = vunpack.c.l.b16 %v66
  %v646 = vunpack.c.h.b16 %v66
  %v647 = vunpack.c.l.b16 %v67
  %v648 = vunpack.c.h.b16 %v67
  %v649 = vunpack.c.l.b16 %v68
  %v650 = vunpack.c.h.b16 %v68
  %v651 = vunpack.c.l.b16 %v69
  %v652 = vunpack.c.h.b16 %v69
  %v653 = vunpack.c.l.b16 %v70
  %v654 = vunpack.c.h.b16 %v70
  %v655 = vunpack.c.l.b16 %v71
  %v656 = vunpack.c.h.b16 %v71
  %v657 = vunpack.c.l.b16 %v72
  %v658 = vunpack.c.h.b16 %v72
  %v659 = vunpack.c.l.b16 %v73
  %v660 = vunpack.c.h.b16 %v73
  %v661 = vunpack.c.l.b16 %v74
  %v662 = vunpack.c.h.b16 %v74
  %v663 = vunpack.c.l.b16 %v75
  %v664 = vunpack.c.h.b16 %v75
  %v665 = vunpack.c.l.b16 %v76
  %v666 = vunpack.c.h.b16 %v76
  %v667 = vunpack.c.l.b16 %v77
  %v668 = vunpack.c.h.b16 %v77
  %v669 = vunpack.c.l.b16 %v78
  %v670 = vunpack.c.h.b16 %v78
  %v671 = vunpack.c.l.b16 %v79
  %v672 = vunpack.c.h.b16 %v79
  %v673 = vunpack.c.l.b16 %v80
  %v674 = vunpack.c.h.b16 %v80
  %v675 = vunpack.c.l.b16 %v81
  %v676 = vunpack.c.h.b16 %v81
  %v677 = vunpack.c.l.b16 %v82
  %v678 = vunpack.c.h.b16 %v82
  %v679 = vunpack.c.l.b16 %v83
  %v680 = vunpack.c.h.b16 %v83
  %v681 = vunpack.c.l.b16 %v84
  %v682 = vunpack.c.h.b16 %v84
  %v683 = vunpack.c.l.b16 %v85
  %v684 = vunpack.c.h.b16 %v85
  %v685 = vunpack.c.l.b16 %v86
  %v686 = vunpack.c.h.b16 %v86
  %v687 = vunpack.c.l.b16 %v87
  %v688 = vunpack.c.h.b16 %v87
  %v689 = vunpack.c.l.b16 %v88
  %v690 = vunpack.c.h.b16 %v88
  %v691 = vunpack.c.l.b16 %v89
  %v692 = vunpack.c.h.b16 %v89
  %v693 = vunpack.c.l.b16 %v90
  %v694 = vunpack.c.h.b16 %v90
  %v695 = vunpack.c.l.b16 %v91
  %v696 = vunpack.c.h.b16 %v91
  %v697 = vunpack.c.l.b16 %v92
  %v698 = vunpack.c.h.b16 %v92
  %v699 = vunpack.c.l.b16 %v93
  %v700 = vunpack.c.h.b16 %v93
  %v701 = vunpack.c.l.b16 %v94
  %v702 = vunpack.c.h.b16 %v94
  %v703 = vunpack.c.l.b16 %v95
  %v704 = vunpack.c.h.b16 %v95
  %v705 = vunpack.c.l.b16 %v96
  %v706 = vunpack.c.h.b16 %v96
  %v707 = vunpack.c.l.b16 %v97
  %v708 = vunpack.c.h.b16 %v97
  %v709 = vunpack.c.l.b16 %v98
  %v710 = vunpack.c.h.b16 %v98
  %v711 = vunpack.c.l.b16 %v99
  %v712 = vunpack.c.h.b16 %v99
  %v713 = vunpack.c.l.b16 %v100
  %v714 = vunpack.c.h.b16 %v100
  %v715 = vunpack.c.l.b16 %v101
  %v716 = vunpack.c.h.b16 %v101
  %v717 = vunpack.c.l.b16 %v102
  %v718 = vunpack.c.h.b16 %v102
  %v719 = vunpack.c.l.b16 %v103
  %v720 = vunpack.c.h.b16 %v103
  %v721 = vunpack.c.l.b16 %v104
  %v722 = vunpack.c.h.b16 %v104
  %v723 = vunpack.c.l.b16 %v105
  %v724 = vunpack.c.h.b16 %v105
  %v725 = vunpack.c.l.b16 %v106
  %v726 = vunpack.c.h.b16 %v106
  %v727 = vunpack.c.l.b16 %v107
  %v728 = vunpack.c.h.b16 %v107
  %v729 = vunpack.c.l.b16 %v108
  %v730 = vunpack.c.h.b16 %v108
  %v731 = vunpack.c.l.b16 %v109
  %v732 = vunpack.c.h.b16 %v109
  %v733 = vunpack.c.l.b16 %v110
  %v734 = vunpack.c.h.b16 %v110
  %v735 = vunpack.c.l.b16 %v111
  %v736 = vunpack.c.h.b16 %v111
  %v737 = vunpack.c.l.b16 %v112
  %v738 = vunpack.c.h.b16 %v112
  %v739 = vunpack.c.l.b16 %v113
  %v740 = vunpack.c.h.b16 %v113
  %v741 = vunpack.c.l.b16 %v114
  %v742 = vunpack.c.h.b16 %v114
  %v743 = vunpack.c.l.b16 %v115
  %v744 = vunpack.c.h.b16 %v115
  %v745 = vunpack.c.l.b16 %v116
  %v746 = vunpack.c.h.b16 %v116
  %v747 = vunpack.c.l.b16 %v117
  %v748 = vunpack.c.h.b16 %v117
  %v749 = vunpack.c.l.b16 %v118
  %v750 = vunpack.c.h.b16 %v118
  %v751 = vunpack.c.l.b16 %v119
  %v752 = vunpack.c.h.b16 %v119
  %v753 = vunpack.c.l.b16 %v120
  %v754 = vunpack.c.h.b16 %v120
  %v755 = vunpack.c.l.b16 %v121
  %v756 = vunpack.c.h.b16 %v121
  %v757 = vunpack.c.l.b16 %v122
  %v758 = vunpack.c.h.b16 %v122
  %v759 = vunpack.c.l.b16 %v123
  %v760 = vunpack.c.h.b16 %v123
  %v761 = vunpack.c.l.b16 %v124
  %v762 = vunpack.c.h.b16 %v124
  %v763 = vunpack.c.l.b16 %v125
  %v764 = vunpack.c.h.b16 %v125
  %v765 = vunpack.c.l.b16 %v126
  %v766 = vunpack.c.h.b16 %v126
  %v767 = vunpack.c.l.b16 %v127
  %v768 = vunpack.c.h.b16 %v127
  %v769 = vunpack.c.l.b16 %v128
  %v770 = vunpack.c.h.b16 %v128
  %v771 = vunpack.c.l.b16 %v129
  %v772 = vunpack.c.h.b16 %v129
  %v773 = vunpack.c.l.b16 %v130
  %v774 = vunpack.c.h.b16 %v130
  %v775 = vunpack.c.l.b16 %v131
  %v776 = vunpack.c.h.b16 %v131
  %v777 = vunpack.c.l.b16 %v132
  %v778 = vunpack.c.h.b16 %v132
  %v779 = vunpack.c.l.b16 %v133
  %v780 = vunpack.c.h.b16 %v133
  %v781 = vunpack.c.l.b16 %v134
  %v782 = vunpack.c.h.b16 %v134
  %v783 = vunpack.c.l.b16 %v135
  %v784 = vunpack.c.h.b16 %v135
  %v785 = vunpack.c.l.b16 %v136
  %v786 = vunpack.c.h.b16 %v136
  %v787 = vunpack.c.l.b16 %v137
  %v788 = vunpack.c.h.b16 %v137
  %v789 = vunpack.c.l.b16 %v138
  %v790 = vunpack.c.h.b16 %v138
  %v791 = vunpack.c.l.b16 %v139
  %v792 = vunpack.c.h.b16 %v139
  %v793 = vunpack.c.l.b16 %v140
  %v794 = vunpack.c.h.b16 %v140
  %v795 = vunpack.c.l.b16 %v141
  %v796 = vunpack.c.h.b16 %v141
  %v797 = vunpack.c.l.b16 %v142
  %v798 = vunpack.c.h.b16 %v142
  %v799 = vunpack.c.l.b16 %v143
  %v800 = vunpack.c.h.b16 %v143
  %v801 = vunpack.c.l.b16 %v144
  %v802 = vunpack.c.h.b16 %v144
  %v803 = vunpack.c.l.b16 %v145
  %v804 = vunpack.c.h.b16 %v145
  %v805 = vunpack.c.l.b16 %v146
  %v806 = vunpack.c.h.b16 %v146
  %v807 = vunpack.c.l.b16 %v147
  %v808 = vunpack.c.h.b16 %v147
  %v809 = vunpack.c.l.b16 %v148
  %v810 = vunpack.c.h.b16 %v148
  %v811 = vunpack.c.l.b16 %v149
  %v812 = vunpack.c.h.b16 %v149
  %v813 = vunpack.c.l.b16 %v150
  %v814 = vunpack.c.h.b16 %v150
  %v815 = vunpack.c.l.b16 %v151
  %v816 = vunpack.c.h.b16 %v151
  %v817 = vunpack.c.l.b16 %v152
  %v818 = vunpack.c.h.b16 %v152
  %v819 = vunpack.c.l.b16 %v153
  %v820 = vunpack.c.h.b16 %v153
  %v821 = vunpack.c.l.b16 %v154
  %v822 = vunpack.c.h.b16 %v154
  %v823 = vunpack.c.l.b16 %v155
  %v824 = vunpack.c.h.b16 %v155
  %v825 = vunpack.c.l.b16 %v156
  %v826 = vunpack.c.h.b16 %v156
  %v827 = vunpack.c.l.b16 %v157
  %v828 = vunpack.c.h.b16 %v157
  %v829 = vunpack.c.l.b16 %v158
  %v830 = vunpack.c.h.b16 %v158
  %v831 = vunpack.c.l.b16 %v159
  %v832 = vunpack.c.h.b16 %v159
  %v833 = vunpack.c.l.b16 %v160
  %v834 = vunpack.c.h.b16 %v160
  %v835 = vunpack.c.l.b16 %v161
  %v836 = vunpack.c.h.b16 %v161
  %v837 = vunpack.c.l.b16 %v162
  %v838 = vunpack.c.h.b16 %v162
  %v839 = vunpack.c.l.b16 %v163
  %v840 = vunpack.c.h.b16 %v163
  %v841 = vunpack.c.l.b16 %v164
  %v842 = vunpack.c.h.b16 %v164
  %v843 = vunpack.c.l.b16 %v165
  %v844 = vunpack.c.h.b16 %v165
  %v845 = vunpack.c.l.b16 %v166
  %v846 = vunpack.c.h.b16 %v166
  %v847 = vunpack.c.l.b16 %v167
  %v848 = vunpack.c.h.b16 %v167
  %v849 = vunpack.c.l.b16 %v168
  %v850 = vunpack.c.h.b16 %v168
  %v851 = vunpack.c.l.b16 %v169
  %v852 = vunpack.c.h.b16 %v169
  %v853 = vunpack.c.l.b16 %v170
  %v854 = vunpack.c.h.b16 %v170
  %v855 = vunpack.c.l.b16 %v171
  %v856 = vunpack.c.h.b16 %v171
  %v857 = vunpack.c.l.b16 %v172
  %v858 = vunpack.c.h.b16 %v172
  %v859 = vunpack.c.l.b16 %v173
  %v860 = vunpack.c.h.b16 %v173
  %v861 = vunpack.c.l.b16 %v174
  %v862 = vunpack.c.h.b16 %v174
  %v863 = vunpack.c.l.b16 %v175
  %v864 = vunpack.c.h.b16 %v175
  %v865 = vunpack.c.l.b16 %v176
  %v866 = vunpack.c.h.b16 %v176
  %v867 = vunpack.c.l.b16 %v177
  %v868 = vunpack.c.h.b16 %v177
  %v869 = vunpack.c.l.b16 %v178
  %v870 = vunpack.c.h.b16 %v178
  %v871 = vunpack.c.l.b16 %v179
  %v872 = vunpack.c.h.b16 %v179
  %v873 = vunpack.c.l.b16 %v180
  %v874 = vunpack.c.h.b16 %v180
  %v875 = vunpack.c.l.b16 %v181
  %v876 = vunpack.c.h.b16 %v181
  %v877 = vunpack.c.l.b16 %v182
  %v878 = vunpack.c.h.b16 %v182
  %v879 = vunpack.c.l.b16 %v183
  %v880 = vunpack.c.h.b16 %v183
  %v881 = vunpack.c.l.b16 %v184
  %v882 = vunpack.c.h.b16 %v184
  %v883 = vunpack.c.l.b16 %v185
  %v884 = vunpack.c.h.b16 %v185
  %v885 = vunpack.c.l.b16 %v186
  %v886 = vunpack.c.h.b16 %v186
  %v887 = vunpack.c.l.b16 %v187
  %v888 = vunpack.c.h.b16 %v187
  %v889 = vunpack.c.l.b16 %v188
  %v890 = vunpack.c.h.b16 %v188
  %v891 = vunpack.c.l.b16 %v189
  %v892 = vunpack.c.h.b16 %v189
  %v893 = vunpack.c.l.b16 %v190
  %v894 = vunpack.c.h.b16 %v190
  %v895 = vunpack.c.l.b16 %v191
  %v896 = vunpack.c.h.b16 %v191
  %v897 = vunpack.c.l.b16 %v192
  %v898 = vunpack.c.h.b16 %v192
  %v899 = vunpack.c.l.b16 %v193
  %v900 = vunpack.c.h.b16 %v193
  %v901 = vunpack.c.l.b16 %v194
  %v902 = vunpack.c.h.b16 %v194
  %v903 = vunpack.c.l.b16 %v195
  %v904 = vunpack.c.h.b16 %v195
  %v905 = vunpack.c.l.b16 %v196
  %v906 = vunpack.c.h.b16 %v196
  %v907 = vunpack.c.l.b16 %v197
  %v908 = vunpack.c.h.b16 %v197
  %v909 = vunpack.c.l.b16 %v198
  %v910 = vunpack.c.h.b16 %v198
  %v911 = vunpack.c.l.b16 %v199
  %v912 = vunpack.c.h.b16 %v199
  %v913 = vunpack.c.l.b16 %v200
  %v914 = vunpack.c.h.b16 %v200
  %v915 = vunpack.c.l.b16 %v201
  %v916 = vunpack.c.h.b16 %v201
  %v917 = vunpack.c.l.b16 %v202
  %v918 = vunpack.c.h.b16 %v202
  %v919 = vunpack.c.l.b16 %v203
  %v920 = vunpack.c.h.b16 %v203
  %v921 = vunpack.c.l.b16 %v204
  %v922 = vunpack.c.h.b16 %v204
  %v923 = vunpack.c.l.b16 %v205
  %v924 = vunpack.c.h.b16 %v205
  %v925 = vunpack.c.l.b16 %v206
  %v926 = vunpack.c.h.b16 %v206
  %v927 = vunpack.c.l.b16 %v207
  %v928 = vunpack.c.h.b16 %v207
  %v929 = vunpack.c.l.b16 %v208
  %v930 = vunpack.c.h.b16 %v208
  %v931 = vunpack.c.l.b16 %v209
  %v932 = vunpack.c.h.b16 %v209
  %v933 = vunpack.c.l.b16 %v210
  %v934 = vunpack.c.h.b16 %v210
  %v935 = vunpack.c.l.b16 %v211
  %v936 = vunpack.c.h.b16 %v211
  %v937 = vunpack.c.l.b16 %v212
  %v938 = vunpack.c.h.b16 %v212
  %v939 = vunpack.c.l.b16 %v213
  %v940 = vunpack.c.h.b16 %v213
  %v941 = vunpack.c.l.b16 %v214
  %v942 = vunpack.c.h.b16 %v214
  %v943 = vunpack.c.l.b16 %v215
  %v944 = vunpack.c.h.b16 %v215
  %v945 = vunpack.c.l.b16 %v216
  %v946 = vunpack.c.h.b16 %v216
  %v947 = vunpack.c.l.b16 %v217
  %v948 = vunpack.c.h.b16 %v217
  %v949 = vunpack.c.l.b16 %v218
  %v950 = vunpack.c.h.b16 %v218
  %v951 = vunpack.c.l.b16 %v219
  %v952 = vunpack.c.h.b16 %v219
  %v953 = vunpack.c.l.b16 %v220
  %v954 = vunpack.c.h.b16 %v220
  %v955 = vunpack.c.l.b16 %v221
  %v956 = vunpack.c.h.b16 %v221
  %v957 = vunpack.c.l.b16 %v222
  %v958 = vunpack.c.h.b16 %v222
  %v959 = vunpack.c.l.b16 %v223
  %v960 = vunpack.c.h.b16 %v223
  %v961 = vunpack.c.l.b16 %v224
  %v962 = vunpack.c.h.b16 %v224
  %v963 = vunpack.c.l.b16 %v225
  %v964 = vunpack.c.h.b16 %v225
  %v965 = vunpack.c.l.b16 %v226
  %v966 = vunpack.c.h.b16 %v226
  %v967 = vunpack.c.l.b16 %v227
  %v968 = vunpack.c.h.b16 %v227
  %v969 = vunpack.c.l.b16 %v228
  %v970 = vunpack.c.h.b16 %v228
  %v971 = vunpack.c.l.b16 %v229
  %v972 = vunpack.c.h.b16 %v229
  %v973 = vunpack.c.l.b16 %v230
  %v974 = vunpack.c.h.b16 %v230
  %v975 = vunpack.c.l.b16 %v231
  %v976 = vunpack.c.h.b16 %v231
  %v977 = vunpack.c.l.b16 %v232
  %v978 = vunpack.c.h.b16 %v232
  %v979 = vunpack.c.l.b16 %v233
  %v980 = vunpack.c.h.b16 %v233
  %v981 = vunpack.c.l.b16 %v234
  %v982 = vunpack.c.h.b16 %v234
  %v983 = vunpack.c.l.b16 %v235
  %v984 = vunpack.c.h.b16 %v235
  %v985 = vunpack.c.l.b16 %v236
  %v986 = vunpack.c.h.b16 %v236
  %v987 = vunpack.c.l.b16 %v237
  %v988 = vunpack.c.h.b16 %v237
  %v989 = vunpack.c.l.b16 %v238
  %v990 = vunpack.c.h.b16 %v238
  %v991 = vunpack.c.l.b16 %v239
  %v992 = vunpack.c.h.b16 %v239
  %v993 = vunpack.c.l.b16 %v240
  %v994 = vunpack.c.h.b16 %v240
  %v995 = vunpack.c.l.b16 %v241
  %v996 = vunpack.c.h.b16 %v241
  %v997 = vunpack.c.l.b16 %v242
  %v998 = vunpack.c.h.b16 %v242
  %v999 = vunpack.c.l.b16 %v243
  %v1000 = vunpack.c.h.b16 %v243
  %v1001 = vunpack.c.l.b16 %v244
  %v1002 = vunpack.c.h.b16 %v244
  %v1003 = vunpack.c.l.b16 %v245
  %v1004 = vunpack.c.h.b16 %v245
  %v1005 = vunpack.c.l.b16 %v246
  %v1006 = vunpack.c.h.b16 %v246
  %v1007 = vunpack.c.l.b16 %v247
  %v1008 = vunpack.c.h.b16 %v247
  %v1009 = vunpack.c.l.b16 %v248
  %v1010 = vunpack.c.h.b16 %v248
  %v1011 = vunpack.c.l.b16 %v249
  %v1012 = vunpack.c.h.b16 %v249
  %v1013 = vunpack.c.l.b16 %v250
  %v1014 = vunpack.c.h.b16 %v250
  %v1015 = vunpack.c.l.b16 %v251
  %v1016 = vunpack.c.h.b16 %v251
  %v1017 = vunpack.c.l.b16 %v252
  %v1018 = vunpack.c.h.b16 %v252
  %v1019 = vunpack.c.l.b16 %v253
  %v1020 = vunpack.c.h.b16 %v253
  %v1021 = vunpack.c.l.b16 %v254
  %v1022 = vunpack.c.h.b16 %v254
  %v1023 = vunpack.c.l.b16 %v255
  %v1024 = vunpack.c.h.b16 %v255
  %v1025 = vunpack.c.l.b16 %v256
  %v1026 = vunpack.c.h.b16 %v256
  %v1027 = vunpack.c.l.b16 %v257
  %v1028 = vunpack.c.h.b16 %v257
  %v1029 = vunpack.c.l.b16 %v258
  %v1030 = vunpack.c.h.b16 %v258
  %v1031 = vunpack.c.l.b16 %v259
  %v1032 = vunpack.c.h.b16 %v259
  %v1033 = vunpack.c.l.b16 %v260
  %v1034 = vunpack.c.h.b16 %v260
  %v1035 = vunpack.c.l.b16 %v261
  %v1036 = vunpack.c.h.b16 %v261
  %v1037 = vunpack.c.l.b16 %v262
  %v1038 = vunpack.c.h.b16 %v262
  %v1039 = vunpack.c.l.b16 %v263
  %v1040 = vunpack.c.h.b16 %v263
  %v1041 = vunpack.c.l.b16 %v264
  %v1042 = vunpack.c.h.b16 %v264
  %v1043 = vunpack.c.l.b16 %v265
  %v1044 = vunpack.c.h.b16 %v265
  %v1045 = vunpack.c.l.b16 %v266
  %v1046 = vunpack.c.h.b16 %v266
  %v1047 = vunpack.c.l.b16 %v267
  %v1048 = vunpack.c.h.b16 %v267
  %v1049 = vunpack.c.l.b16 %v268
  %v1050 = vunpack.c.h.b16 %v268
  %v1051 = vunpack.c.l.b16 %v269
  %v1052 = vunpack.c.h.b16 %v269
  %v1053 = vunpack.c.l.b16 %v270
  %v1054 = vunpack.c.h.b16 %v270
  %v1055 = vunpack.c.l.b16 %v271
  %v1056 = vunpack.c.h.b16 %v271
  %v1057 = vunpack.c.l.b16 %v272
  %v1058 = vunpack.c.h.b16 %v272
  %v1059 = vunpack.c.l.b16 %v273
  %v1060 = vunpack.c.h.b16 %v273
  %v1061 = vunpack.c.l.b16 %v274
  %v1062 = vunpack.c.h.b16 %v274
  %v1063 = vunpack.c.l.b16 %v275
  %v1064 = vunpack.c.h.b16 %v275
  %v1065 = vunpack.c.l.b16 %v276
  %v1066 = vunpack.c.h.b16 %v276
  %v1067 = vunpack.c.l.b16 %v277
  %v1068 = vunpack.c.h.b16 %v277
  %v1069 = vunpack.c.l.b16 %v278
  %v1070 = vunpack.c.h.b16 %v278
  %v1071 = vunpack.c.l.b16 %v279
  %v1072 = vunpack.c.h.b16 %v279
  %v1073 = vunpack.c.l.b16 %v280
  %v1074 = vunpack.c.h.b16 %v280
  %v1075 = vunpack.c.l.b16 %v281
  %v1076 = vunpack.c.h.b16 %v281
  %v1077 = vunpack.c.l.b16 %v282
  %v1078 = vunpack.c.h.b16 %v282
  %v1079 = vunpack.c.l.b16 %v283
  %v1080 = vunpack.c.h.b16 %v283
  %v1081 = vunpack.c.l.b16 %v284
  %v1082 = vunpack.c.h.b16 %v284
  %v1083 = vpack.c.b16 %v575, %v571
  %v1084 = vpack.c.b16 %v576, %v572
  %v1085 = vpack.c.b16 %v577, %v573
  %v1086 = vpack.c.b16 %v578, %v574
  %v1087 = vpack.c.b16 %v583, %v579
  %v1088 = vpack.c.b16 %v584, %v580
  %v1089 = vpack.c.b16 %v585, %v581
  %v1090 = vpack.c.b16 %v586, %v582
  %v1091 = vpack.c.b16 %v591, %v587
  %v1092 = vpack.c.b16 %v592, %v588
  %v1093 = vpack.c.b16 %v593, %v589
  %v1094 = vpack.c.b16 %v594, %v590
  %v1095 = vpack.c.b16 %v599, %v595
  %v1096 = vpack.c.b16 %v600, %v596
  %v1097 = vpack.c.b16 %v601, %v597
  %v1098 = vpack.c.b16 %v602, %v598
  %v1099 = vpack.c.b16 %v607, %v603
  %v1100 = vpack.c.b16 %v608, %v604
  %v1101 = vpack.c.b16 %v609, %v605
  %v1102 = vpack.c.b16 %v610, %v606
  %v1103 = vpack.c.b16 %v615, %v611
  %v1104 = vpack.c.b16 %v616, %v612
  %v1105 = vpack.c.b16 %v617, %v613
  %v1106 = vpack.c.b16 %v618, %v614
  %v1107 = vpack.c.b16 %v623, %v619
  %v1108 = vpack.c.b16 %v624, %v620
  %v1109 = vpack.c.b16 %v625, %v621
  %v1110 = vpack.c.b16 %v626, %v622
  %v1111 = vpack.c.b16 %v631, %v627
  %v1112 = vpack.c.b16 %v632, %v628
  %v1113 = vpack.c.b16 %v633, %v629
  %v1114 = vpack.c.b16 %v634, %v630
  %v1115 = vpack.c.b16 %v639, %v635
  %v1116 = vpack.c.b16 %v640, %v636
  %v1117 = vpack.c.b16 %v641, %v637
  %v1118 = vpack.c.b16 %v642, %v638
  %v1119 = vpack.c.b16 %v647, %v643
  %v1120 = vpack.c.b16 %v648, %v644
  %v1121 = vpack.c.b16 %v649, %v645
  %v1122 = vpack.c.b16 %v650, %v646
  %v1123 = vpack.c.b16 %v655, %v651
  %v1124 = vpack.c.b16 %v656, %v652
  %v1125 = vpack.c.b16 %v657, %v653
  %v1126 = vpack.c.b16 %v658, %v654
  %v1127 = vpack.c.b16 %v663, %v659
  %v1128 = vpack.c.b16 %v664, %v660
  %v1129 = vpack.c.b16 %v665, %v661
  %v1130 = vpack.c.b16 %v666, %v662
  %v1131 = vpack.c.b16 %v671, %v667
  %v1132 = vpack.c.b16 %v672, %v668
  %v1133 = vpack.c.b16 %v673, %v669
  %v1134 = vpack.c.b16 %v674, %v670
  %v1135 = vpack.c.b16 %v679, %v675
  %v1136 = vpack.c.b16 %v680, %v676
  %v1137 = vpack.c.b16 %v681, %v677
  %v1138 = vpack.c.b16 %v682, %v678
  %v1139 = vpack.c.b16 %v687, %v683
  %v1140 = vpack.c.b16 %v688, %v684
  %v1141 = vpack.c.b16 %v689, %v685
  %v1142 = vpack.c.b16 %v690, %v686
  %v1143 = vpack.c.b16 %v695, %v691
  %v1144 = vpack.c.b16 %v696, %v692
  %v1145 = vpack.c.b16 %v697, %v693
  %v1146 = vpack.c.b16 %v698, %v694
  %v1147 = vpack.c.b16 %v703, %v699
  %v1148 = vpack.c.b16 %v704, %v700
  %v1149 = vpack.c.b16 %v705, %v701
  %v1150 = vpack.c.b16 %v706, %v702
  %v1151 = vpack.c.b16 %v711, %v707
  %v1152 = vpack.c.b16 %v712, %v708
  %v1153 = vpack.c.b16 %v713, %v709
  %v1154 = vpack.c.b16 %v714, %v710
  %v1155 = vpack.c.b16 %v719, %v715
  %v1156 = vpack.c.b16 %v720, %v716
  %v1157 = vpack.c.b16 %v721, %v717
  %v1158 = vpack.c.b16 %v722, %v718
  %v1159 = vpack.c.b16 %v727, %v723
  %v1160 = vpack.c.b16 %v728, %v724
  %v1161 = vpack.c.b16 %v729, %v725
  %v1162 = vpack.c.b16 %v730, %v726
  %v1163 = vpack.c.b16 %v735, %v731
  %v1164 = vpack.c.b16 %v736, %v732
  %v1165 = vpack.c.b16 %v737, %v733
  %v1166 = vpack.c.b16 %v738, %v734
  %v1167 = vpack.c.b16 %v743, %v739
  %v1168 = vpack.c.b16 %v744, %v740
  %v1169 = vpack.c.b16 %v745, %v741
  %v1170 = vpack.c.b16 %v746, %v742
  %v1171 = vpack.c.b16 %v751, %v747
  %v1172 = vpack.c.b16 %v752, %v748
  %v1173 = vpack.c.b16 %v753, %v749
  %v1174 = vpack.c.b16 %v754, %v750
  %v1175 = vpack.c.b16 %v759, %v755
  %v1176 = vpack.c.b16 %v760, %v756
  %v1177 = vpack.c.b16 %v761, %v757
  %v1178 = vpack.c.b16 %v762, %v758
  %v1179 = vpack.c.b16 %v767, %v763
  %v1180 = vpack.c.b16 %v768, %v764
  %v1181 = vpack.c.b16 %v769, %v765
  %v1182 = vpack.c.b16 %v770, %v766
  %v1183 = vpack.c.b16 %v775, %v771
  %v1184 = vpack.c.b16 %v776, %v772
  %v1185 = vpack.c.b16 %v777, %v773
  %v1186 = vpack.c.b16 %v778, %v774
  %v1187 = vpack.c.b16 %v783, %v779
  %v1188 = vpack.c.b16 %v784, %v780
  %v1189 = vpack.c.b16 %v785, %v781
  %v1190 = vpack.c.b16 %v786, %v782
  %v1191 = vpack.c.b16 %v791, %v787
  %v1192 = vpack.c.b16 %v792, %v788
  %v1193 = vpack.c.b16 %v793, %v789
  %v1194 = vpack.c.b16 %v794, %v790
  %v1195 = vpack.c.b16 %v799, %v795
  %v1196 = vpack.c.b16 %v800, %v796
  %v1197 = vpack.c.b16 %v801, %v797
  %v1198 = vpack.c.b16 %v802, %v798
  %v1199 = vpack.c.b16 %v807, %v803
  %v1200 = vpack.c.b16 %v808, %v804
  %v1201 = vpack.c.b16 %v809, %v805
  %v1202 = vpack.c.b16 %v810, %v806
  %v1203 = vpack.c.b16 %v815, %v811
  %v1204 = vpack.c.b16 %v816, %v812
  %v1205 = vpack.c.b16 %v817, %v813
  %v1206 = vpack.c.b16 %v818, %v814
  %v1207 = vpack.c.b16 %v823, %v819
  %v1208 = vpack.c.b16 %v824, %v820
  %v1209 = vpack.c.b16 %v825, %v821
  %v1210 = vpack.c.b16 %v826, %v822
  %v1211 = vpack.c.b16 %v831, %v827
  %v1212 = vpack.c.b16 %v832, %v828
  %v1213 = vpack.c.b16 %v833, %v829
  %v1214 = vpack.c.b16 %v834, %v830
  %v1215 = vpack.c.b16 %v839, %v835
  %v1216 = vpack.c.b16 %v840, %v836
  %v1217 = vpack.c.b16 %v841, %v837
  %v1218 = vpack.c.b16 %v842, %v838
  %v1219 = vpack.c.b16 %v847, %v843
  %v1220 = vpack.c.b16 %v848, %v844
  %v1221 = vpack.c.b16 %v849, %v845
  %v1222 = vpack.c.b16 %v850, %v846
  %v1223 = vpack.c.b16 %v855, %v851
  %v1224 = vpack.c.b16 %v856, %v852
  %v1225 = vpack.c.b16 %v857, %v853
  %v1226 = vpack.c.b16 %v858, %v854
  %v1227 = vpack.c.b16 %v863, %v859
  %v1228 = vpack.c.b16 %v864, %v860
  %v1229 = vpack.c.b16 %v865, %v861
  %v1230 = vpack.c.b16 %v866, %v862
  %v1231 = vpack.c.b16 %v871, %v867
  %v1232 = vpack.c.b16 %v872, %v868
  %v1233 = vpack.c.b16 %v873, %v869
  %v1234 = vpack.c.b16 %v874, %v870
  %v1235 = vpack.c.b16 %v879, %v875
  %v1236 = vpack.c.b16 %v880, %v876
  %v1237 = vpack.c.b16 %v881, %v877
  %v1238 = vpack.c.b16 %v882, %v878
  %v1239 = vpack.c.b16 %v887, %v883
  %v1240 = vpack.c.b16 %v888, %v884
  %v1241 = vpack.c.b16 %v889, %v885
  %v1242 = vpack.c.b16 %v890, %v886
  %v1243 = vpack.c.b16 %v895, %v891
  %v1244 = vpack.c.b16 %v896, %v892
  %v1245 = vpack.c.b16 %v897, %v893
  %v1246 = vpack.c.b16 %v898, %v894
  %v1247 = vpack.c.b16 %v903, %v899
  %v1248 = vpack.c.b16 %v904, %v900
  %v1249 = vpack.c.b16 %v905, %v901
  %v1250 = vpack.c.b16 %v906, %v902
  %v1251 = vpack.c.b16 %v911, %v907
  %v1252 = vpack.c.b16 %v912, %v908
  %v1253 = vpack.c.b16 %v913, %v909
  %v1254 = vpack.c.b16 %v914, %v910
  %v1255 = vpack.c.b16 %v919, %v915
  %v1256 = vpack.c.b16 %v920, %v916
  %v1257 = vpack.c.b16 %v921, %v917
  %v1258 = vpack.c.b16 %v922, %v918
  %v1259 = vpack.c.b16 %v927, %v923
  %v1260 = vpack.c.b16 %v928, %v924
  %v1261 = vpack.c.b16 %v929, %v925
  %v1262 = vpack.c.b16 %v930, %v926
  %v1263 = vpack.c.b16 %v935, %v931
  %v1264 = vpack.c.b16 %v936, %v932
  %v1265 = vpack.c.b16 %v937, %v933
  %v1266 = vpack.c.b16 %v938, %v934
  %v1267 = vpack.c.b16 %v943, %v939
  %v1268 = vpack.c.b16 %v944, %v940
  %v1269 = vpack.c.b16 %v945, %v941
  %v1270 = vpack.c.b16 %v946, %v942
  %v1271 = vpack.c.b16 %v951, %v947
  %v1272 = vpack.c.b16 %v952, %v948
  %v1273 = vpack.c.b16 %v953, %v949
  %v1274 = vpack.c.b16 %v954, %v950
  %v1275 = vpack.c.b16 %v959, %v955
  %v1276 = vpack.c.b16 %v960, %v956
  %v1277 = vpack.c.b16 %v961, %v957
  %v1278 = vpack.c.b16 %v962, %v958
  %v1279 = vpack.c.b16 %v967, %v963
  %v1280 = vpack.c.b16 %v968, %v964
  %v1281 = vpack.c.b16 %v969, %v965
  %v1282 = vpack.c.b16 %v970, %v966
  %v1283 = vpack.c.b16 %v975, %v971
  %v1284 = vpack.c.b16 %v976, %v972
  %v1285 = vpack.c.b16 %v977, %v973
  %v1286 = vpack.c.b16 %v978, %v974
  %v1287 = vpack.c.b16 %v983, %v979
  %v1288 = vpack.c.b16 %v984, %v980
  %v1289 = vpack.c.b16 %v985, %v981
  %v1290 = vpack.c.b16 %v986, %v982
  %v1291 = vpack.c.b16 %v991, %v987
  %v1292 = vpack.c.b16 %v992, %v988
  %v1293 = vpack.c.b16 %v993, %v989
  %v1294 = vpack.c.b16 %v994, %v990
  %v1295 = vpack.c.b16 %v999, %v995
  %v1296 = vpack.c.b16 %v1000, %v996
  %v1297 = vpack.c.b16 %v1001, %v997
  %v1298 = vpack.c.b16 %v1002, %v998
  %v1299 = vpack.c.b16 %v1007, %v1003
  %v1300 = vpack.c.b16 %v1008, %v1004
  %v1301 = vpack.c.b16 %v1009, %v1005
  %v1302 = vpack.c.b16 %v1010, %v1006
  %v1303 = vpack.c.b16 %v1015, %v1011
  %v1304 = vpack.c.b16 %v1016, %v1012
  %v1305 = vpack.c.b16 %v1017, %v1013
  %v1306 = vpack.c.b16 %v1018, %v1014
  %v1307 = vpack.c.b16 %v1023, %v1019
  %v1308 = vpack.c.b16 %v1024, %v1020
  %v1309 = vpack.c.b16 %v1025, %v1021
  %v1310 = vpack.c.b16 %v1026, %v1022
  %v1311 = vpack.c.b16 %v1031, %v1027
  %v1312 = vpack.c.b16 %v1032, %v1028
  %v1313 = vpack.c.b16 %v1033, %v1029
  %v1314 = vpack.c.b16 %v1034, %v1030
  %v1315 = vpack.c.b16 %v1039, %v1035
  %v1316 = vpack.c.b16 %v1040, %v1036
  %v1317 = vpack.c.b16 %v1041, %v1037
  %v1318 = vpack.c.b16 %v1042, %v1038
  %v1319 = vpack.c.b16 %v1047, %v1043
  %v1320 = vpack.c.b16 %v1048, %v1044
  %v1321 = vpack.c.b16 %v1049, %v1045
  %v1322 = vpack.c.b16 %v1050, %v1046
  %v1323 = vpack.c.b16 %v1055, %v1051
  %v1324 = vpack.c.b16 %v1056, %v1052
  %v1325 = vpack.c.b16 %v1057, %v1053
  %v1326 = vpack.c.b16 %v1058, %v1054
  %v1327 = vpack.c.b16 %v1063, %v1059
  %v1328 = vpack.c.b16 %v1064, %v1060
  %v1329 = vpack.c.b16 %v1065, %v1061
  %v1330 = vpack.c.b16 %v1066, %v1062
  %v1331 = vpack.c.b16 %v1071, %v1067
  %v1332 = vpack.c.b16 %v1072, %v1068
  %v1333 = vpack.c.b16 %v1073, %v1069
  %v1334 = vpack.c.b16 %v1074, %v1070
  %v1335 = vpack.c.b16 %v1079, %v1075
  %v1336 = vpack.c.b16 %v1080, %v1076
  %v1337 = vpack.c.b16 %v1081, %v1077
  %v1338 = vpack.c.b16 %v1082, %v1078
  %1595 = vmatprep.subr.bf16.mxu0 %v1084
  %1596 = vmatpush1.bf16.msra.mxu0 %v1083
  %1597 = vmatprep.subr.bf16.mxu0 %v1088
  %1598 = vmatpush1.bf16.msra.mxu0 %v1087
  %1599 = vmatprep.subr.bf16.mxu0 %v1092
  %1600 = vmatpush1.bf16.msra.mxu0 %v1091
  %1601 = vmatprep.subr.bf16.mxu0 %v1096
  %1602 = vmatpush1.bf16.msra.mxu0 %v1095
  %1603 = vmatprep.subr.bf16.mxu0 %v1100
  %1604 = vmatpush1.bf16.msra.mxu0 %v1099
  %1605 = vmatprep.subr.bf16.mxu0 %v1104
  %1606 = vmatpush1.bf16.msra.mxu0 %v1103
  %1607 = vmatprep.subr.bf16.mxu0 %v1108
  %1608 = vmatpush1.bf16.msra.mxu0 %v1107
  %1609 = vmatprep.subr.bf16.mxu0 %v1112
  %1610 = vmatpush1.bf16.msra.mxu0 %v1111
  %1611 = vmatprep.subr.bf16.mxu0 %v1116
  %1612 = vmatpush1.bf16.msra.mxu0 %v1115
  %1613 = vmatprep.subr.bf16.mxu0 %v1120
  %1614 = vmatpush1.bf16.msra.mxu0 %v1119
  %1615 = vmatprep.subr.bf16.mxu0 %v1124
  %1616 = vmatpush1.bf16.msra.mxu0 %v1123
  %1617 = vmatprep.subr.bf16.mxu0 %v1128
  %1618 = vmatpush1.bf16.msra.mxu0 %v1127
  %1619 = vmatprep.subr.bf16.mxu0 %v1132
  %1620 = vmatpush1.bf16.msra.mxu0 %v1131
  %1621 = vmatprep.subr.bf16.mxu0 %v1136
  %1622 = vmatpush1.bf16.msra.mxu0 %v1135
  %1623 = vmatprep.subr.bf16.mxu0 %v1140
  %1624 = vmatpush1.bf16.msra.mxu0 %v1139
  %1625 = vmatprep.subr.bf16.mxu0 %v1144
  %1626 = vmatpush1.bf16.msra.mxu0 %v1143
  %1627 = vmatprep.mubr.bf16.mxu0 %v287
  %1628 = vmatmul.mubr.bf16.gmra.mrb[0].mxu0 %v286
  %v1629 = vpop.f32.mrb[0].mxu0
  %v1630 = vadd.f32 %v298, %v1629
  %v1631 = vpop.f32.mrb[0].mxu0
  %v1632 = vadd.f32 %v302, %v1631
  %v1633 = vpop.f32.mrb[0].mxu0
  %v1634 = vpop.f32.mrb[0].mxu0
  %1635 = vdwg.mxu0
  %1636 = vmatprep.subr.bf16.mxu0 %v1148
  %1637 = vmatpush1.bf16.msra.mxu0 %v1147
  %1638 = vmatprep.subr.bf16.mxu0 %v1152
  %1639 = vmatpush1.bf16.msra.mxu0 %v1151
  %1640 = vmatprep.subr.bf16.mxu0 %v1156
  %1641 = vmatpush1.bf16.msra.mxu0 %v1155
  %1642 = vmatprep.subr.bf16.mxu0 %v1160
  %1643 = vmatpush1.bf16.msra.mxu0 %v1159
  %1644 = vmatprep.subr.bf16.mxu0 %v1164
  %1645 = vmatpush1.bf16.msra.mxu0 %v1163
  %1646 = vmatprep.subr.bf16.mxu0 %v1168
  %1647 = vmatpush1.bf16.msra.mxu0 %v1167
  %1648 = vmatprep.subr.bf16.mxu0 %v1172
  %1649 = vmatpush1.bf16.msra.mxu0 %v1171
  %1650 = vmatprep.subr.bf16.mxu0 %v1176
  %1651 = vmatpush1.bf16.msra.mxu0 %v1175
  %1652 = vmatprep.subr.bf16.mxu0 %v1180
  %1653 = vmatpush1.bf16.msra.mxu0 %v1179
  %1654 = vmatprep.subr.bf16.mxu0 %v1184
  %1655 = vmatpush1.bf16.msra.mxu0 %v1183
  %1656 = vmatprep.subr.bf16.mxu0 %v1188
  %1657 = vmatpush1.bf16.msra.mxu0 %v1187
  %1658 = vmatprep.subr.bf16.mxu0 %v1192
  %1659 = vmatpush1.bf16.msra.mxu0 %v1191
  %1660 = vmatprep.subr.bf16.mxu0 %v1196
  %1661 = vmatpush1.bf16.msra.mxu0 %v1195
  %1662 = vmatprep.subr.bf16.mxu0 %v1200
  %1663 = vmatpush1.bf16.msra.mxu0 %v1199
  %1664 = vmatprep.subr.bf16.mxu0 %v1204
  %1665 = vmatpush1.bf16.msra.mxu0 %v1203
  %1666 = vmatprep.subr.bf16.mxu0 %v1208
  %1667 = vmatpush1.bf16.msra.mxu0 %v1207
  %1668 = vmatprep.mubr.bf16.mxu0 %v289
  %1669 = vmatmul.mubr.bf16.gmra.mrb[0].mxu0 %v288
  %v1670 = vpop.f32.mrb[0].mxu0
  %v1671 = vadd.f32 %v1630, %v1670
  %v1672 = vpop.f32.mrb[0].mxu0
  %v1673 = vadd.f32 %v1632, %v1672
  %v1674 = vpop.f32.mrb[0].mxu0
  %v1675 = vpop.f32.mrb[0].mxu0
  %1676 = vdwg.mxu0
  %1677 = vmatprep.subr.bf16.mxu0 %v1212
  %1678 = vmatpush1.bf16.msra.mxu0 %v1211
  %1679 = vmatprep.subr.bf16.mxu0 %v1216
  %1680 = vmatpush1.bf16.msra.mxu0 %v1215
  %1681 = vmatprep.subr.bf16.mxu0 %v1220
  %1682 = vmatpush1.bf16.msra.mxu0 %v1219
  %1683 = vmatprep.subr.bf16.mxu0 %v1224
  %1684 = vmatpush1.bf16.msra.mxu0 %v1223
  %1685 = vmatprep.subr.bf16.mxu0 %v1228
  %1686 = vmatpush1.bf16.msra.mxu0 %v1227
  %1687 = vmatprep.subr.bf16.mxu0 %v1232
  %1688 = vmatpush1.bf16.msra.mxu0 %v1231
  %1689 = vmatprep.subr.bf16.mxu0 %v1236
  %1690 = vmatpush1.bf16.msra.mxu0 %v1235
  %1691 = vmatprep.subr.bf16.mxu0 %v1240
  %1692 = vmatpush1.bf16.msra.mxu0 %v1239
  %1693 = vmatprep.subr.bf16.mxu0 %v1244
  %1694 = vmatpush1.bf16.msra.mxu0 %v1243
  %1695 = vmatprep.subr.bf16.mxu0 %v1248
  %1696 = vmatpush1.bf16.msra.mxu0 %v1247
  %1697 = vmatprep.subr.bf16.mxu0 %v1252
  %1698 = vmatpush1.bf16.msra.mxu0 %v1251
  %1699 = vmatprep.subr.bf16.mxu0 %v1256
  %1700 = vmatpush1.bf16.msra.mxu0 %v1255
  %1701 = vmatprep.subr.bf16.mxu0 %v1260
  %1702 = vmatpush1.bf16.msra.mxu0 %v1259
  %1703 = vmatprep.subr.bf16.mxu0 %v1264
  %1704 = vmatpush1.bf16.msra.mxu0 %v1263
  %1705 = vmatprep.subr.bf16.mxu0 %v1268
  %1706 = vmatpush1.bf16.msra.mxu0 %v1267
  %1707 = vmatprep.subr.bf16.mxu0 %v1272
  %1708 = vmatpush1.bf16.msra.mxu0 %v1271
  %1709 = vmatprep.mubr.bf16.mxu0 %v291
  %1710 = vmatmul.mubr.bf16.gmra.mrb[0].mxu0 %v290
  %v1711 = vpop.f32.mrb[0].mxu0
  %v1712 = vadd.f32 %v1671, %v1711
  %v1713 = vpop.f32.mrb[0].mxu0
  %v1714 = vadd.f32 %v1673, %v1713
  %v1715 = vpop.f32.mrb[0].mxu0
  %v1716 = vpop.f32.mrb[0].mxu0
  %1717 = vdwg.mxu0
  %1718 = vmatprep.subr.bf16.mxu0 %v1276
  %1719 = vmatpush1.bf16.msra.mxu0 %v1275
  %1720 = vmatprep.subr.bf16.mxu0 %v1280
  %1721 = vmatpush1.bf16.msra.mxu0 %v1279
  %1722 = vmatprep.subr.bf16.mxu0 %v1284
  %1723 = vmatpush1.bf16.msra.mxu0 %v1283
  %1724 = vmatprep.subr.bf16.mxu0 %v1288
  %1725 = vmatpush1.bf16.msra.mxu0 %v1287
  %1726 = vmatprep.subr.bf16.mxu0 %v1292
  %1727 = vmatpush1.bf16.msra.mxu0 %v1291
  %1728 = vmatprep.subr.bf16.mxu0 %v1296
  %1729 = vmatpush1.bf16.msra.mxu0 %v1295
  %1730 = vmatprep.subr.bf16.mxu0 %v1300
  %1731 = vmatpush1.bf16.msra.mxu0 %v1299
  %1732 = vmatprep.subr.bf16.mxu0 %v1304
  %1733 = vmatpush1.bf16.msra.mxu0 %v1303
  %1734 = vmatprep.subr.bf16.mxu0 %v1308
  %1735 = vmatpush1.bf16.msra.mxu0 %v1307
  %1736 = vmatprep.subr.bf16.mxu0 %v1312
  %1737 = vmatpush1.bf16.msra.mxu0 %v1311
  %1738 = vmatprep.subr.bf16.mxu0 %v1316
  %1739 = vmatpush1.bf16.msra.mxu0 %v1315
  %1740 = vmatprep.subr.bf16.mxu0 %v1320
  %1741 = vmatpush1.bf16.msra.mxu0 %v1319
  %1742 = vmatprep.subr.bf16.mxu0 %v1324
  %1743 = vmatpush1.bf16.msra.mxu0 %v1323
  %1744 = vmatprep.subr.bf16.mxu0 %v1328
  %1745 = vmatpush1.bf16.msra.mxu0 %v1327
  %1746 = vmatprep.subr.bf16.mxu0 %v1332
  %1747 = vmatpush1.bf16.msra.mxu0 %v1331
  %1748 = vmatprep.subr.bf16.mxu0 %v1336
  %1749 = vmatpush1.bf16.msra.mxu0 %v1335
  %1750 = vmatprep.mubr.bf16.mxu0 %v293
  %1751 = vmatmul.mubr.bf16.gmra.mrb[0].mxu0 %v292
  %v1752 = vpop.f32.mrb[0].mxu0
  %v1753 = vadd.f32 %v1712, %v1752
  %v1754 = vpop.f32.mrb[0].mxu0
  %v1755 = vadd.f32 %v1714, %v1754
  %v1756 = vpop.f32.mrb[0].mxu0
  %v1757 = vpop.f32.mrb[0].mxu0
  %1758 = vdwg.mxu0
  %1759 = vmatprep.subr.bf16.mxu0 %v1086
  %1760 = vmatpush1.bf16.msra.mxu0 %v1085
  %1761 = vmatprep.subr.bf16.mxu0 %v1090
  %1762 = vmatpush1.bf16.msra.mxu0 %v1089
  %1763 = vmatprep.subr.bf16.mxu0 %v1094
  %1764 = vmatpush1.bf16.msra.mxu0 %v1093
  %1765 = vmatprep.subr.bf16.mxu0 %v1098
  %1766 = vmatpush1.bf16.msra.mxu0 %v1097
  %1767 = vmatprep.subr.bf16.mxu0 %v1102
  %1768 = vmatpush1.bf16.msra.mxu0 %v1101
  %1769 = vmatprep.subr.bf16.mxu0 %v1106
  %1770 = vmatpush1.bf16.msra.mxu0 %v1105
  %1771 = vmatprep.subr.bf16.mxu0 %v1110
  %1772 = vmatpush1.bf16.msra.mxu0 %v1109
  %1773 = vmatprep.subr.bf16.mxu0 %v1114
  %1774 = vmatpush1.bf16.msra.mxu0 %v1113
  %1775 = vmatprep.subr.bf16.mxu0 %v1118
  %1776 = vmatpush1.bf16.msra.mxu0 %v1117
  %1777 = vmatprep.subr.bf16.mxu0 %v1122
  %1778 = vmatpush1.bf16.msra.mxu0 %v1121
  %1779 = vmatprep.subr.bf16.mxu0 %v1126
  %1780 = vmatpush1.bf16.msra.mxu0 %v1125
  %1781 = vmatprep.subr.bf16.mxu0 %v1130
  %1782 = vmatpush1.bf16.msra.mxu0 %v1129
  %1783 = vmatprep.subr.bf16.mxu0 %v1134
  %1784 = vmatpush1.bf16.msra.mxu0 %v1133
  %1785 = vmatprep.subr.bf16.mxu0 %v1138
  %1786 = vmatpush1.bf16.msra.mxu0 %v1137
  %1787 = vmatprep.subr.bf16.mxu0 %v1142
  %1788 = vmatpush1.bf16.msra.mxu0 %v1141
  %1789 = vmatprep.subr.bf16.mxu0 %v1146
  %1790 = vmatpush1.bf16.msra.mxu0 %v1145
  %1791 = vmatprep.mubr.bf16.mxu0 %v287
  %1792 = vmatmul.mubr.bf16.gmra.mrb[0].mxu0 %v286
  %v1793 = vpop.f32.mrb[0].mxu0
  %v1794 = vadd.f32 %v306, %v1793
  %v1795 = vpop.f32.mrb[0].mxu0
  %v1796 = vadd.f32 %v310, %v1795
  %v1797 = vpop.f32.mrb[0].mxu0
  %v1798 = vpop.f32.mrb[0].mxu0
  %1799 = vdwg.mxu0
  %1800 = vmatprep.subr.bf16.mxu0 %v1150
  %1801 = vmatpush1.bf16.msra.mxu0 %v1149
  %1802 = vmatprep.subr.bf16.mxu0 %v1154
  %1803 = vmatpush1.bf16.msra.mxu0 %v1153
  %1804 = vmatprep.subr.bf16.mxu0 %v1158
  %1805 = vmatpush1.bf16.msra.mxu0 %v1157
  %1806 = vmatprep.subr.bf16.mxu0 %v1162
  %1807 = vmatpush1.bf16.msra.mxu0 %v1161
  %1808 = vmatprep.subr.bf16.mxu0 %v1166
  %1809 = vmatpush1.bf16.msra.mxu0 %v1165
  %1810 = vmatprep.subr.bf16.mxu0 %v1170
  %1811 = vmatpush1.bf16.msra.mxu0 %v1169
  %1812 = vmatprep.subr.bf16.mxu0 %v1174
  %1813 = vmatpush1.bf16.msra.mxu0 %v1173
  %1814 = vmatprep.subr.bf16.mxu0 %v1178
  %1815 = vmatpush1.bf16.msra.mxu0 %v1177
  %1816 = vmatprep.subr.bf16.mxu0 %v1182
  %1817 = vmatpush1.bf16.msra.mxu0 %v1181
  %1818 = vmatprep.subr.bf16.mxu0 %v1186
  %1819 = vmatpush1.bf16.msra.mxu0 %v1185
  %1820 = vmatprep.subr.bf16.mxu0 %v1190
  %1821 = vmatpush1.bf16.msra.mxu0 %v1189
  %1822 = vmatprep.subr.bf16.mxu0 %v1194
  %1823 = vmatpush1.bf16.msra.mxu0 %v1193
  %1824 = vmatprep.subr.bf16.mxu0 %v1198
  %1825 = vmatpush1.bf16.msra.mxu0 %v1197
  %1826 = vmatprep.subr.bf16.mxu0 %v1202
  %1827 = vmatpush1.bf16.msra.mxu0 %v1201
  %1828 = vmatprep.subr.bf16.mxu0 %v1206
  %1829 = vmatpush1.bf16.msra.mxu0 %v1205
  %1830 = vmatprep.subr.bf16.mxu0 %v1210
  %1831 = vmatpush1.bf16.msra.mxu0 %v1209
  %1832 = vmatprep.mubr.bf16.mxu0 %v289
  %1833 = vmatmul.mubr.bf16.gmra.mrb[0].mxu0 %v288
  %v1834 = vpop.f32.mrb[0].mxu0
  %v1835 = vadd.f32 %v1794, %v1834
  %v1836 = vpop.f32.mrb[0].mxu0
  %v1837 = vadd.f32 %v1796, %v1836
  %v1838 = vpop.f32.mrb[0].mxu0
  %v1839 = vpop.f32.mrb[0].mxu0
  %1840 = vdwg.mxu0
  %1841 = vmatprep.subr.bf16.mxu0 %v1214
  %1842 = vmatpush1.bf16.msra.mxu0 %v1213
  %1843 = vmatprep.subr.bf16.mxu0 %v1218
  %1844 = vmatpush1.bf16.msra.mxu0 %v1217
  %1845 = vmatprep.subr.bf16.mxu0 %v1222
  %1846 = vmatpush1.bf16.msra.mxu0 %v1221
  %1847 = vmatprep.subr.bf16.mxu0 %v1226
  %1848 = vmatpush1.bf16.msra.mxu0 %v1225
  %1849 = vmatprep.subr.bf16.mxu0 %v1230
  %1850 = vmatpush1.bf16.msra.mxu0 %v1229
  %1851 = vmatprep.subr.bf16.mxu0 %v1234
  %1852 = vmatpush1.bf16.msra.mxu0 %v1233
  %1853 = vmatprep.subr.bf16.mxu0 %v1238
  %1854 = vmatpush1.bf16.msra.mxu0 %v1237
  %1855 = vmatprep.subr.bf16.mxu0 %v1242
  %1856 = vmatpush1.bf16.msra.mxu0 %v1241
  %1857 = vmatprep.subr.bf16.mxu0 %v1246
  %1858 = vmatpush1.bf16.msra.mxu0 %v1245
  %1859 = vmatprep.subr.bf16.mxu0 %v1250
  %1860 = vmatpush1.bf16.msra.mxu0 %v1249
  %1861 = vmatprep.subr.bf16.mxu0 %v1254
  %1862 = vmatpush1.bf16.msra.mxu0 %v1253
  %1863 = vmatprep.subr.bf16.mxu0 %v1258
  %1864 = vmatpush1.bf16.msra.mxu0 %v1257
  %1865 = vmatprep.subr.bf16.mxu0 %v1262
  %1866 = vmatpush1.bf16.msra.mxu0 %v1261
  %1867 = vmatprep.subr.bf16.mxu0 %v1266
  %1868 = vmatpush1.bf16.msra.mxu0 %v1265
  %1869 = vmatprep.subr.bf16.mxu0 %v1270
  %1870 = vmatpush1.bf16.msra.mxu0 %v1269
  %1871 = vmatprep.subr.bf16.mxu0 %v1274
  %1872 = vmatpush1.bf16.msra.mxu0 %v1273
  %1873 = vmatprep.mubr.bf16.mxu0 %v291
  %1874 = vmatmul.mubr.bf16.gmra.mrb[0].mxu0 %v290
  %v1875 = vpop.f32.mrb[0].mxu0
  %v1876 = vadd.f32 %v1835, %v1875
  %v1877 = vpop.f32.mrb[0].mxu0
  %v1878 = vadd.f32 %v1837, %v1877
  %v1879 = vpop.f32.mrb[0].mxu0
  %v1880 = vpop.f32.mrb[0].mxu0
  %1881 = vdwg.mxu0
  %1882 = vmatprep.subr.bf16.mxu0 %v1278
  %1883 = vmatpush1.bf16.msra.mxu0 %v1277
  %1884 = vmatprep.subr.bf16.mxu0 %v1282
  %1885 = vmatpush1.bf16.msra.mxu0 %v1281
  %1886 = vmatprep.subr.bf16.mxu0 %v1286
  %1887 = vmatpush1.bf16.msra.mxu0 %v1285
  %1888 = vmatprep.subr.bf16.mxu0 %v1290
  %1889 = vmatpush1.bf16.msra.mxu0 %v1289
  %1890 = vmatprep.subr.bf16.mxu0 %v1294
  %1891 = vmatpush1.bf16.msra.mxu0 %v1293
  %1892 = vmatprep.subr.bf16.mxu0 %v1298
  %1893 = vmatpush1.bf16.msra.mxu0 %v1297
  %1894 = vmatprep.subr.bf16.mxu0 %v1302
  %1895 = vmatpush1.bf16.msra.mxu0 %v1301
  %1896 = vmatprep.subr.bf16.mxu0 %v1306
  %1897 = vmatpush1.bf16.msra.mxu0 %v1305
  %1898 = vmatprep.subr.bf16.mxu0 %v1310
  %1899 = vmatpush1.bf16.msra.mxu0 %v1309
  %1900 = vmatprep.subr.bf16.mxu0 %v1314
  %1901 = vmatpush1.bf16.msra.mxu0 %v1313
  %1902 = vmatprep.subr.bf16.mxu0 %v1318
  %1903 = vmatpush1.bf16.msra.mxu0 %v1317
  %1904 = vmatprep.subr.bf16.mxu0 %v1322
  %1905 = vmatpush1.bf16.msra.mxu0 %v1321
  %1906 = vmatprep.subr.bf16.mxu0 %v1326
  %1907 = vmatpush1.bf16.msra.mxu0 %v1325
  %1908 = vmatprep.subr.bf16.mxu0 %v1330
  %1909 = vmatpush1.bf16.msra.mxu0 %v1329
  %1910 = vmatprep.subr.bf16.mxu0 %v1334
  %1911 = vmatpush1.bf16.msra.mxu0 %v1333
  %1912 = vmatprep.subr.bf16.mxu0 %v1338
  %1913 = vmatpush1.bf16.msra.mxu0 %v1337
  %1914 = vmatprep.mubr.bf16.mxu0 %v293
  %1915 = vmatmul.mubr.bf16.gmra.mrb[0].mxu0 %v292
  %v1916 = vpop.f32.mrb[0].mxu0
  %v1917 = vadd.f32 %v1876, %v1916
  %v1918 = vpop.f32.mrb[0].mxu0
  %v1919 = vadd.f32 %v1878, %v1918
  %v1920 = vpop.f32.mrb[0].mxu0
  %v1921 = vpop.f32.mrb[0].mxu0
  %1922 = vdwg.mxu0
  %v1923 = vmax.f32 %v1753, 0.0
  %v1924 = vmax.f32 %v1755, 0.0
  %v1925 = vmax.f32 %v1917, 0.0
  %v1926 = vmax.f32 %v1919, 0.0
  %v1927 = vld [vmem:[%s3] sm:$0xf]
  %v1928 = vld [vmem:[%s3 + $0x4] sm:$0xf]
  %v1929 = vld [vmem:[%s3 + $0x8] sm:$0xf]
  %v1930 = vld [vmem:[%s3 + $0xc] sm:$0xf]
  %v1931 = vld [vmem:[%s3 + $0x10] sm:$0xf]
  %v1932 = vld [vmem:[%s3 + $0x14] sm:$0xf]
  %v1933 = vld [vmem:[%s3 + $0x18] sm:$0xf]
  %v1934 = vld [vmem:[%s3 + $0x1c] sm:$0xf]
  %v1935 = vld [vmem:[%s3 + $0x20] sm:$0xf]
  %v1936 = vld [vmem:[%s3 + $0x24] sm:$0xf]
  %v1937 = vld [vmem:[%s3 + $0x28] sm:$0xf]
  %v1938 = vld [vmem:[%s3 + $0x2c] sm:$0xf]
  %v1939 = vld [vmem:[%s3 + $0x30] sm:$0xf]
  %v1940 = vld [vmem:[%s3 + $0x34] sm:$0xf]
  %v1941 = vld [vmem:[%s3 + $0x38] sm:$0xf]
  %v1942 = vld [vmem:[%s3 + $0x3c] sm:$0xf]
  %v1943 = vld [vmem:[%s3 + $0x40] sm:$0xf]
  %v1944 = vld [vmem:[%s3 + $0x44] sm:$0xf]
  %v1945 = vld [vmem:[%s3 + $0x48] sm:$0xf]
  %v1946 = vld [vmem:[%s3 + $0x4c] sm:$0xf]
  %v1947 = vld [vmem:[%s3 + $0x50] sm:$0xf]
  %v1948 = vld [vmem:[%s3 + $0x54] sm:$0xf]
  %v1949 = vld [vmem:[%s3 + $0x58] sm:$0xf]
  %v1950 = vld [vmem:[%s3 + $0x5c] sm:$0xf]
  %v1951 = vld [vmem:[%s3 + $0x60] sm:$0xf]
  %v1952 = vld [vmem:[%s3 + $0x64] sm:$0xf]
  %v1953 = vld [vmem:[%s3 + $0x68] sm:$0xf]
  %v1954 = vld [vmem:[%s3 + $0x6c] sm:$0xf]
  %v1955 = vld [vmem:[%s3 + $0x70] sm:$0xf]
  %v1956 = vld [vmem:[%s3 + $0x74] sm:$0xf]
  %v1957 = vld [vmem:[%s3 + $0x78] sm:$0xf]
  %v1958 = vld [vmem:[%s3 + $0x7c] sm:$0xf]
  %v1959 = vld [vmem:[%s3 + $0x80] sm:$0xf]
  %v1960 = vld [vmem:[%s3 + $0x84] sm:$0xf]
  %v1961 = vld [vmem:[%s3 + $0x88] sm:$0xf]
  %v1962 = vld [vmem:[%s3 + $0x8c] sm:$0xf]
  %v1963 = vld [vmem:[%s3 + $0x90] sm:$0xf]
  %v1964 = vld [vmem:[%s3 + $0x94] sm:$0xf]
  %v1965 = vld [vmem:[%s3 + $0x98] sm:$0xf]
  %v1966 = vld [vmem:[%s3 + $0x9c] sm:$0xf]
  %v1967 = vld [vmem:[%s3 + $0xa0] sm:$0xf]
  %v1968 = vld [vmem:[%s3 + $0xa4] sm:$0xf]
  %v1969 = vld [vmem:[%s3 + $0xa8] sm:$0xf]
  %v1970 = vld [vmem:[%s3 + $0xac] sm:$0xf]
  %v1971 = vld [vmem:[%s3 + $0xb0] sm:$0xf]
  %v1972 = vld [vmem:[%s3 + $0xb4] sm:$0xf]
  %v1973 = vld [vmem:[%s3 + $0xb8] sm:$0xf]
  %v1974 = vld [vmem:[%s3 + $0xbc] sm:$0xf]
  %v1975 = vld [vmem:[%s3 + $0xc0] sm:$0xf]
  %v1976 = vld [vmem:[%s3 + $0xc4] sm:$0xf]
  %v1977 = vld [vmem:[%s3 + $0xc8] sm:$0xf]
  %v1978 = vld [vmem:[%s3 + $0xcc] sm:$0xf]
  %v1979 = vld [vmem:[%s3 + $0xd0] sm:$0xf]
  %v1980 = vld [vmem:[%s3 + $0xd4] sm:$0xf]
  %v1981 = vld [vmem:[%s3 + $0xd8] sm:$0xf]
  %v1982 = vld [vmem:[%s3 + $0xdc] sm:$0xf]
  %v1983 = vld [vmem:[%s3 + $0xe0] sm:$0xf]
  %v1984 = vld [vmem:[%s3 + $0xe4] sm:$0xf]
  %v1985 = vld [vmem:[%s3 + $0xe8] sm:$0xf]
  %v1986 = vld [vmem:[%s3 + $0xec] sm:$0xf]
  %v1987 = vld [vmem:[%s3 + $0xf0] sm:$0xf]
  %v1988 = vld [vmem:[%s3 + $0xf4] sm:$0xf]
  %v1989 = vld [vmem:[%s3 + $0xf8] sm:$0xf]
  %v1990 = vld [vmem:[%s3 + $0xfc] sm:$0xf]
  %v1991 = vld [vmem:[%s4] sm:$0x1]
  %v1992 = vpack.c.bf16 %v1923, %v1923
  %v1993 = vpack.c.bf16 %v1924, %v1924
  %v1994 = vpack.c.bf16 %v1925, %v1925
  %v1995 = vpack.c.bf16 %v1926, %v1926
  %v1997 = vlaneseq
  %v1998 = vshrl.u32 %v1997, 7
  %v1999 = vsub.s32 0, %v1998
  %v2000 = vrot.slane %v1991, %v1999
  %v2066 = vunpack.c.l.b16 %v1927
  %v2067 = vunpack.c.l.b16 %v1928
  %v2068 = vunpack.c.l.b16 %v1929
  %v2069 = vunpack.c.l.b16 %v1930
  %v2070 = vunpack.c.l.b16 %v1931
  %v2071 = vunpack.c.l.b16 %v1932
  %v2072 = vunpack.c.l.b16 %v1933
  %v2073 = vunpack.c.l.b16 %v1934
  %v2074 = vunpack.c.l.b16 %v1935
  %v2075 = vunpack.c.l.b16 %v1936
  %v2076 = vunpack.c.l.b16 %v1937
  %v2077 = vunpack.c.l.b16 %v1938
  %v2078 = vunpack.c.l.b16 %v1939
  %v2079 = vunpack.c.l.b16 %v1940
  %v2080 = vunpack.c.l.b16 %v1941
  %v2081 = vunpack.c.l.b16 %v1942
  %v2082 = vunpack.c.l.b16 %v1943
  %v2083 = vunpack.c.l.b16 %v1944
  %v2084 = vunpack.c.l.b16 %v1945
  %v2085 = vunpack.c.l.b16 %v1946
  %v2086 = vunpack.c.l.b16 %v1947
  %v2087 = vunpack.c.l.b16 %v1948
  %v2088 = vunpack.c.l.b16 %v1949
  %v2089 = vunpack.c.l.b16 %v1950
  %v2090 = vunpack.c.l.b16 %v1951
  %v2091 = vunpack.c.l.b16 %v1952
  %v2092 = vunpack.c.l.b16 %v1953
  %v2093 = vunpack.c.l.b16 %v1954
  %v2094 = vunpack.c.l.b16 %v1955
  %v2095 = vunpack.c.l.b16 %v1956
  %v2096 = vunpack.c.l.b16 %v1957
  %v2097 = vunpack.c.l.b16 %v1958
  %v2098 = vunpack.c.l.b16 %v1959
  %v2099 = vunpack.c.l.b16 %v1960
  %v2100 = vunpack.c.l.b16 %v1961
  %v2101 = vunpack.c.l.b16 %v1962
  %v2102 = vunpack.c.l.b16 %v1963
  %v2103 = vunpack.c.l.b16 %v1964
  %v2104 = vunpack.c.l.b16 %v1965
  %v2105 = vunpack.c.l.b16 %v1966
  %v2106 = vunpack.c.l.b16 %v1967
  %v2107 = vunpack.c.l.b16 %v1968
  %v2108 = vunpack.c.l.b16 %v1969
  %v2109 = vunpack.c.l.b16 %v1970
  %v2110 = vunpack.c.l.b16 %v1971
  %v2111 = vunpack.c.l.b16 %v1972
  %v2112 = vunpack.c.l.b16 %v1973
  %v2113 = vunpack.c.l.b16 %v1974
  %v2114 = vunpack.c.l.b16 %v1975
  %v2115 = vunpack.c.l.b16 %v1976
  %v2116 = vunpack.c.l.b16 %v1977
  %v2117 = vunpack.c.l.b16 %v1978
  %v2118 = vunpack.c.l.b16 %v1979
  %v2119 = vunpack.c.l.b16 %v1980
  %v2120 = vunpack.c.l.b16 %v1981
  %v2121 = vunpack.c.l.b16 %v1982
  %v2122 = vunpack.c.l.b16 %v1983
  %v2123 = vunpack.c.l.b16 %v1984
  %v2124 = vunpack.c.l.b16 %v1985
  %v2125 = vunpack.c.l.b16 %v1986
  %v2126 = vunpack.c.l.b16 %v1987
  %v2127 = vunpack.c.l.b16 %v1988
  %v2128 = vunpack.c.l.b16 %v1989
  %v2129 = vunpack.c.l.b16 %v1990
  %v2130 = vpack.c.b16 %v2067, %v2066
  %v2131 = vpack.c.b16 %v2069, %v2068
  %v2132 = vpack.c.b16 %v2071, %v2070
  %v2133 = vpack.c.b16 %v2073, %v2072
  %v2134 = vpack.c.b16 %v2075, %v2074
  %v2135 = vpack.c.b16 %v2077, %v2076
  %v2136 = vpack.c.b16 %v2079, %v2078
  %v2137 = vpack.c.b16 %v2081, %v2080
  %v2138 = vpack.c.b16 %v2083, %v2082
  %v2139 = vpack.c.b16 %v2085, %v2084
  %v2140 = vpack.c.b16 %v2087, %v2086
  %v2141 = vpack.c.b16 %v2089, %v2088
  %v2142 = vpack.c.b16 %v2091, %v2090
  %v2143 = vpack.c.b16 %v2093, %v2092
  %v2144 = vpack.c.b16 %v2095, %v2094
  %v2145 = vpack.c.b16 %v2097, %v2096
  %v2146 = vpack.c.b16 %v2099, %v2098
  %v2147 = vpack.c.b16 %v2101, %v2100
  %v2148 = vpack.c.b16 %v2103, %v2102
  %v2149 = vpack.c.b16 %v2105, %v2104
  %v2150 = vpack.c.b16 %v2107, %v2106
  %v2151 = vpack.c.b16 %v2109, %v2108
  %v2152 = vpack.c.b16 %v2111, %v2110
  %v2153 = vpack.c.b16 %v2113, %v2112
  %v2154 = vpack.c.b16 %v2115, %v2114
  %v2155 = vpack.c.b16 %v2117, %v2116
  %v2156 = vpack.c.b16 %v2119, %v2118
  %v2157 = vpack.c.b16 %v2121, %v2120
  %v2158 = vpack.c.b16 %v2123, %v2122
  %v2159 = vpack.c.b16 %v2125, %v2124
  %v2160 = vpack.c.b16 %v2127, %v2126
  %v2161 = vpack.c.b16 %v2129, %v2128
  %2194 = vmatprep.subr.bf16.mxu0 0
  %2195 = vmatpush1.bf16.msra.mxu0 %v2130
  %2196 = vmatprep.subr.bf16.mxu0 0
  %2197 = vmatpush1.bf16.msra.mxu0 %v2131
  %2198 = vmatprep.subr.bf16.mxu0 0
  %2199 = vmatpush1.bf16.msra.mxu0 %v2132
  %2200 = vmatprep.subr.bf16.mxu0 0
  %2201 = vmatpush1.bf16.msra.mxu0 %v2133
  %2202 = vmatprep.subr.bf16.mxu0 0
  %2203 = vmatpush1.bf16.msra.mxu0 %v2134
  %2204 = vmatprep.subr.bf16.mxu0 0
  %2205 = vmatpush1.bf16.msra.mxu0 %v2135
  %2206 = vmatprep.subr.bf16.mxu0 0
  %2207 = vmatpush1.bf16.msra.mxu0 %v2136
  %2208 = vmatprep.subr.bf16.mxu0 0
  %2209 = vmatpush1.bf16.msra.mxu0 %v2137
  %2210 = vmatprep.subr.bf16.mxu0 0
  %2211 = vmatpush1.bf16.msra.mxu0 %v2138
  %2212 = vmatprep.subr.bf16.mxu0 0
  %2213 = vmatpush1.bf16.msra.mxu0 %v2139
  %2214 = vmatprep.subr.bf16.mxu0 0
  %2215 = vmatpush1.bf16.msra.mxu0 %v2140
  %2216 = vmatprep.subr.bf16.mxu0 0
  %2217 = vmatpush1.bf16.msra.mxu0 %v2141
  %2218 = vmatprep.subr.bf16.mxu0 0
  %2219 = vmatpush1.bf16.msra.mxu0 %v2142
  %2220 = vmatprep.subr.bf16.mxu0 0
  %2221 = vmatpush1.bf16.msra.mxu0 %v2143
  %2222 = vmatprep.subr.bf16.mxu0 0
  %2223 = vmatpush1.bf16.msra.mxu0 %v2144
  %2224 = vmatprep.subr.bf16.mxu0 0
  %2225 = vmatpush1.bf16.msra.mxu0 %v2145
  %2226 = vmatprep.mubr.bf16.mxu0 %v1993
  %2227 = vmatmul.mubr.bf16.gmra.mrb[0].mxu0 %v1992
  %v2228 = vpop.f32.mrb[0].mxu0
  %v2229 = vadd.f32 %v2000, %v2228
  %v2230 = vpop.f32.mrb[0].mxu0
  %v2231 = vpop.f32.mrb[0].mxu0
  %v2232 = vpop.f32.mrb[0].mxu0
  %2233 = vdwg.mxu0
  %2234 = vmatprep.subr.bf16.mxu0 0
  %2235 = vmatpush1.bf16.msra.mxu0 %v2146
  %2236 = vmatprep.subr.bf16.mxu0 0
  %2237 = vmatpush1.bf16.msra.mxu0 %v2147
  %2238 = vmatprep.subr.bf16.mxu0 0
  %2239 = vmatpush1.bf16.msra.mxu0 %v2148
  %2240 = vmatprep.subr.bf16.mxu0 0
  %2241 = vmatpush1.bf16.msra.mxu0 %v2149
  %2242 = vmatprep.subr.bf16.mxu0 0
  %2243 = vmatpush1.bf16.msra.mxu0 %v2150
  %2244 = vmatprep.subr.bf16.mxu0 0
  %2245 = vmatpush1.bf16.msra.mxu0 %v2151
  %2246 = vmatprep.subr.bf16.mxu0 0
  %2247 = vmatpush1.bf16.msra.mxu0 %v2152
  %2248 = vmatprep.subr.bf16.mxu0 0
  %2249 = vmatpush1.bf16.msra.mxu0 %v2153
  %2250 = vmatprep.subr.bf16.mxu0 0
  %2251 = vmatpush1.bf16.msra.mxu0 %v2154
  %2252 = vmatprep.subr.bf16.mxu0 0
  %2253 = vmatpush1.bf16.msra.mxu0 %v2155
  %2254 = vmatprep.subr.bf16.mxu0 0
  %2255 = vmatpush1.bf16.msra.mxu0 %v2156
  %2256 = vmatprep.subr.bf16.mxu0 0
  %2257 = vmatpush1.bf16.msra.mxu0 %v2157
  %2258 = vmatprep.subr.bf16.mxu0 0
  %2259 = vmatpush1.bf16.msra.mxu0 %v2158
  %2260 = vmatprep.subr.bf16.mxu0 0
  %2261 = vmatpush1.bf16.msra.mxu0 %v2159
  %2262 = vmatprep.subr.bf16.mxu0 0
  %2263 = vmatpush1.bf16.msra.mxu0 %v2160
  %2264 = vmatprep.subr.bf16.mxu0 0
  %2265 = vmatpush1.bf16.msra.mxu0 %v2161
  %2266 = vmatprep.mubr.bf16.mxu0 %v1995
  %2267 = vmatmul.mubr.bf16.gmra.mrb[0].mxu0 %v1994
  %v2268 = vpop.f32.mrb[0].mxu0
  %v2269 = vadd.f32 %v2229, %v2268
  %v2270 = vpop.f32.mrb[0].mxu0
  %v2271 = vpop.f32.mrb[0].mxu0
  %v2272 = vpop.f32.mrb[0].mxu0
  %2273 = vdwg.mxu0
  %vm2274 = vcmask 261120
  %2275 = vst.msk [vmem:[%s5] sm:$0xff] %vm2274, %v2269
  // Predicated region
  $region22: #{foldnet_encoder_forward.9} parent=0 // pred_check
    _
  $region23: #{foldnet_encoder_forward.9} parent=0 // pred_check_branch
    %2277 = sbr.rel (0) target = $region25
  $region24: #{foldnet_encoder_forward.9} parent=0 // pred_region
    _
  $region25: #{foldnet_encoder_forward.9} parent=0 // pred_fallthru
    _
  // Predicated region
  $region26: #{foldnet_encoder_forward.9} parent=0 // pred_check
    _
  $region27: #{foldnet_encoder_forward.9} parent=0 // pred_check_branch
    %2279 = sbr.rel (0) target = $region29
  $region28: #{foldnet_encoder_forward.9} parent=0 // pred_region
    _
  $region29: #{foldnet_encoder_forward.9} parent=0 // pred_fallthru
    _

</llo_original>
